<compile_context>
chip_gen: v6e
topology: v6e:2x2x1
jax: 0.10.0
libtpu: 0.0.40
codegen_flags: <defaults>
</compile_context>

<pallas_src>
import functools

import jax
import jax.numpy as jnp
from jax import lax
from jax.experimental import pallas as pl
from jax.experimental.pallas import tpu as pltpu

_VMEM_LIMIT = 32 * 1024 * 1024  # conservative: fits v7x's 64 MiB and v5e/v6e's 128 MiB


def _token_tile(n):
    """Largest token tile <= 512 that divides n and is a multiple of 8 (for pipelining)."""
    if n <= 512:
        return n
    for t in (512, 384, 256, 128, 64, 32, 16, 8):
        if n % t == 0:
            return t
    return n


def _erf(z):
    # Abramowitz & Stegun 7.1.26 rational approximation (|err| <= 1.5e-7, f32-level),
    # built only from ops with guaranteed Mosaic lowerings (exp runs on the EUP slot).
    # TODO(synk): replace with lax.erf if/when a Mosaic lowering is guaranteed.
    p = 0.3275911
    a1, a2, a3, a4, a5 = (0.254829592, -0.284496736, 1.421413741,
                          -1.453152027, 1.061405429)
    s = jnp.where(z >= 0.0, 1.0, -1.0)
    x = jnp.abs(z)
    t = 1.0 / (1.0 + p * x)
    poly = ((((a5 * t + a4) * t + a3) * t + a2) * t + a1) * t
    return s * (1.0 - poly * jnp.exp(-x * x))


# --------------------------------------------------------------------------
# Fused token-mixer branch (one grid step per batch):
#   out = x + ls1 * proj( Cluster( GroupNorm1(x) ) )
# --------------------------------------------------------------------------
def _mixer_kernel(x_ref, p_ref, gw_ref, gb_ref, wf_ref, bf_ref, wv_ref, bv_ref,
                  wp_ref, bp_ref, ls_ref, ab_ref, o_ref, *, heads, hd, eps):
    x = x_ref[0]                                     # [N, C] tokens (residual input)
    N, C = x.shape
    Hd = heads * hd

    # ---- GroupNorm(1 group) stats + apply (single pass, x is fully resident) ----
    inv_n = 1.0 / (N * C)
    mean = jnp.sum(x) * inv_n
    var = jnp.sum(x * x) * inv_n - mean * mean
    rstd = lax.rsqrt(var + eps)
    xn = (x - mean) * rstd * gw_ref[...] + gb_ref[...]

    # ---- f / v projections (1x1 conv == matmul over channels) ----
    f = jnp.dot(xn, wf_ref[...], preferred_element_type=jnp.float32) + bf_ref[...]
    v = jnp.dot(xn, wv_ref[...], preferred_element_type=jnp.float32) + bv_ref[...]

    # ---- cluster centers for all heads at once (pooling matmul, lane-dense) ----
    P = p_ref[...]                                   # [M, N] AdaptiveAvgPool3d matrix
    M = P.shape[0]
    cen = jnp.dot(P, f, preferred_element_type=jnp.float32)    # [M, Hd]
    vcen = jnp.dot(P, v, preferred_element_type=jnp.float32)   # [M, Hd]

    alpha = ab_ref[0]                                # sim_alpha (SMEM scalar)
    beta = ab_ref[1]                                 # sim_beta
    eps2 = 1e-24                                     # (F.normalize eps=1e-12)**2

    ch = lax.broadcasted_iota(jnp.int32, (1, Hd), 1)            # channel index (lane axis)
    rows = lax.broadcasted_iota(jnp.int32, (M, N), 0)

    mix = jnp.zeros((N, Hd), jnp.float32)
    for h in range(heads):
        # per-head channel mask on the lane axis (no unaligned lane slicing)
        msk = ((ch >= h * hd) & (ch < (h + 1) * hd)).astype(jnp.float32)   # [1, Hd]
        f_h = f * msk
        v_h = v * msk
        cen_h = cen * msk
        vcen_h = vcen * msk

        # pairwise cosine similarity over head-h channels (rsqrt -> EUP slot)
        cn = cen_h * lax.rsqrt(jnp.maximum(
            jnp.sum(cen_h * cen_h, axis=-1, keepdims=True), eps2))
        fn = f_h * lax.rsqrt(jnp.maximum(
            jnp.sum(f_h * f_h, axis=-1, keepdims=True), eps2))
        cos = lax.dot_general(cn, fn, (((1,), (1,)), ((), ())),
                              preferred_element_type=jnp.float32)           # [M, N]
        sim = jax.nn.sigmoid(beta + alpha * cos)

        # hard assignment: keep, per point, only its (first) max-similarity center
        # (matches torch.max + scatter_ one-hot mask; tie-break = lowest index)
        smax = jnp.max(sim, axis=0, keepdims=True)                          # [1, N]
        first = jnp.min(jnp.where(sim >= smax, rows, M), axis=0, keepdims=True)
        sim = jnp.where(rows == first, sim, 0.0)

        # aggregate values into centers, then dispatch back to every point
        agg = (jnp.dot(sim, v_h, preferred_element_type=jnp.float32) + vcen_h) * \
            pl.reciprocal(jnp.sum(sim, axis=-1, keepdims=True) + 1.0, approx=True)
        # agg is zero outside head-h channels, so accumulating builds the
        # head-concatenated, lane-dense [N, heads*hd] result directly.
        mix = mix + lax.dot_general(sim, agg, (((0,), (0,)), ((), ())),
                                    preferred_element_type=jnp.float32)     # [N, Hd]

    # ---- proj 1x1-conv + layer-scale-1 + residual (single lane-dense store) ----
    y = jnp.dot(mix, wp_ref[...], preferred_element_type=jnp.float32) + bp_ref[...]
    o_ref[0] = x + ls_ref[...] * y


def token_mixer_branch(x, P, gn_w, gn_b, wf, bf, wv, bv, wp, bp, ls, ab,
                       *, heads, hd, eps):
    # TODO(synk): for very large N (thousands of tokens per region) the token axis
    # should additionally be tiled with an inner reduction loop to bound VMEM.
    B, N, C = x.shape
    Hd = heads * hd
    M = P.shape[0]
    const = lambda b: (0, 0)
    return pl.pallas_call(
        functools.partial(_mixer_kernel, heads=heads, hd=hd, eps=eps),
        out_shape=jax.ShapeDtypeStruct((B, N, C), jnp.float32),
        grid=(B,),
        in_specs=[
            pl.BlockSpec((1, N, C), lambda b: (b, 0, 0)),
            pl.BlockSpec((M, N), const),
            pl.BlockSpec((1, C), const),
            pl.BlockSpec((1, C), const),
            pl.BlockSpec((C, Hd), const),
            pl.BlockSpec((1, Hd), const),
            pl.BlockSpec((C, Hd), const),
            pl.BlockSpec((1, Hd), const),
            pl.BlockSpec((Hd, C), const),
            pl.BlockSpec((1, C), const),
            pl.BlockSpec((1, C), const),
            pl.BlockSpec(memory_space=pltpu.MemorySpace.SMEM),     # sim_alpha, sim_beta
        ],
        out_specs=pl.BlockSpec((1, N, C), lambda b: (b, 0, 0)),
        compiler_params=pltpu.CompilerParams(
            dimension_semantics=("parallel",), vmem_limit_bytes=_VMEM_LIMIT),
    )(x, P, gn_w.reshape(1, C), gn_b.reshape(1, C),
      wf, bf.reshape(1, Hd), wv, bv.reshape(1, Hd),
      wp, bp.reshape(1, C), ls.reshape(1, C), ab)


# --------------------------------------------------------------------------
# GroupNorm(num_groups=1) statistics (one pass: sum and sum-of-squares)
# --------------------------------------------------------------------------
def _gn_stats_kernel(x_ref, m_ref, r_ref, *, eps):
    x = x_ref[0]                                     # [N, C]
    inv_n = 1.0 / (x.shape[0] * x.shape[1])
    mean = jnp.sum(x) * inv_n
    var = jnp.sum(x * x) * inv_n - mean * mean
    rstd = lax.rsqrt(var + eps)
    m_ref[...] = jnp.full((1, 1, 1), mean, dtype=jnp.float32)
    r_ref[...] = jnp.full((1, 1, 1), rstd, dtype=jnp.float32)


def gn_stats(x, eps=1e-5):
    B, N, C = x.shape
    return pl.pallas_call(
        functools.partial(_gn_stats_kernel, eps=eps),
        out_shape=(jax.ShapeDtypeStruct((B, 1, 1), jnp.float32),
                   jax.ShapeDtypeStruct((B, 1, 1), jnp.float32)),
        grid=(B,),
        in_specs=[pl.BlockSpec((1, N, C), lambda b: (b, 0, 0))],
        out_specs=(pl.BlockSpec((1, 1, 1), lambda b: (b, 0, 0)),
                   pl.BlockSpec((1, 1, 1), lambda b: (b, 0, 0))),
        compiler_params=pltpu.CompilerParams(
            dimension_semantics=("parallel",), vmem_limit_bytes=_VMEM_LIMIT),
    )(x)


# --------------------------------------------------------------------------
# Fused MLP branch (token-tiled, pipelined):
#   out = x + ls2 * fc2( GELU( fc1( GroupNorm2(x) ) ) )
# --------------------------------------------------------------------------
def _mlp_kernel(x_ref, m_ref, r_ref, gw_ref, gb_ref,
                w1_ref, b1_ref, w2_ref, b2_ref, ls_ref, o_ref):
    x = x_ref[0]                                     # [tn, C] (also the residual)
    xn = (x - m_ref[0]) * r_ref[0]                   # GroupNorm normalize
    xn = xn * gw_ref[...] + gb_ref[...]              # GroupNorm affine
    h = jnp.dot(xn, w1_ref[...], preferred_element_type=jnp.float32) + b1_ref[...]
    h = 0.5 * h * (1.0 + _erf(h * 0.7071067811865476))          # exact-erf GELU
    y = jnp.dot(h, w2_ref[...], preferred_element_type=jnp.float32) + b2_ref[...]
    o_ref[0] = x + ls_ref[...] * y


def mlp_branch(x, mean, rstd, gn_w, gn_b, w1, b1, w2, b2, ls):
    B, N, C = x.shape
    Ch = w1.shape[1]
    tn = _token_tile(N)
    const = lambda b, t: (0, 0)
    return pl.pallas_call(
        _mlp_kernel,
        out_shape=jax.ShapeDtypeStruct((B, N, C), jnp.float32),
        grid=(B, N // tn),
        in_specs=[
            pl.BlockSpec((1, tn, C), lambda b, t: (b, t, 0)),
            pl.BlockSpec((1, 1, 1), lambda b, t: (b, 0, 0)),
            pl.BlockSpec((1, 1, 1), lambda b, t: (b, 0, 0)),
            pl.BlockSpec((1, C), const),
            pl.BlockSpec((1, C), const),
            pl.BlockSpec((C, Ch), const),
            pl.BlockSpec((1, Ch), const),
            pl.BlockSpec((Ch, C), const),
            pl.BlockSpec((1, C), const),
            pl.BlockSpec((1, C), const),
        ],
        out_specs=pl.BlockSpec((1, tn, C), lambda b, t: (b, t, 0)),
        compiler_params=pltpu.CompilerParams(
            dimension_semantics=("parallel", "parallel"),
            vmem_limit_bytes=_VMEM_LIMIT),
    )(x, mean, rstd, gn_w.reshape(1, C), gn_b.reshape(1, C),
      w1, b1.reshape(1, Ch), w2, b2.reshape(1, C), ls.reshape(1, C))


# --------------------------------------------------------------------------
# JAX glue (constant pooling matrix, parameter plumbing)
# --------------------------------------------------------------------------
def pool_matrix(spatial, proposal):
    """[M, N] matrix s.t. P @ tokens == AdaptiveAvgPool3d(proposal) (divisible case)."""
    W, H, D = spatial
    pw, ph, pd = proposal
    assert W % pw == 0 and H % ph == 0 and D % pd == 0
    bw, bh, bd = W // pw, H // ph, D // pd
    wi, hi, di = jnp.meshgrid(jnp.arange(W), jnp.arange(H), jnp.arange(D), indexing="ij")
    region = ((wi // bw) * (ph * pd) + (hi // bh) * pd + (di // bd)).reshape(-1)  # [N]
    M = pw * ph * pd
    P = (jnp.arange(M)[:, None] == region[None, :]).astype(jnp.float32)
    return P / float(bw * bh * bd)


def cluster_block_forward(x, p, *, heads, head_dim, proposal, eps=1e-5):
    B, C, W, H, D = x.shape
    N = W * H * D
    xt = x.reshape(B, C, N).transpose(0, 2, 1)          # [B, N, C] tokens

    # TODO(synk): fold_w/fold_h/fold_d > 1 region folding and return_center=True are not
    # implemented -- this corresponds to fold_w=fold_h=fold_d=1, return_center=False
    # (the reference einops pattern for value with fold>1 drops f3 and is itself invalid).
    P = pool_matrix((W, H, D), proposal)
    ab = jnp.stack([p["sim_alpha"], p["sim_beta"]]).astype(jnp.float32)   # (2,) scalars

    # --- token mixer branch: x + ls1 * proj(Cluster(GroupNorm(x))) --- (1 fused kernel)
    xt = token_mixer_branch(xt, P, p["norm1_w"], p["norm1_b"],
                            p["f_w"], p["f_b"], p["v_w"], p["v_b"],
                            p["proj_w"], p["proj_b"], p["ls1"], ab,
                            heads=heads, hd=head_dim, eps=eps)

    # --- MLP branch: x + ls2 * fc2(GELU(fc1(GroupNorm(x)))) --- (stats + 1 fused kernel)
    m2, r2 = gn_stats(xt, eps)
    xt = mlp_branch(xt, m2, r2, p["norm2_w"], p["norm2_b"],
                    p["fc1_w"], p["fc1_b"], p["fc2_w"], p["fc2_b"], p["ls2"])

    return xt.transpose(0, 2, 1).reshape(B, C, W, H, D)


def init_params(key, dim, heads, head_dim, mlp_hidden, layer_scale_init=1e-5):
    ks = jax.random.split(key, 5)
    hd_tot = heads * head_dim

    def w(k, shape, std=0.02):
        return std * jax.random.normal(k, shape, dtype=jnp.float32)

    return dict(
        norm1_w=jnp.ones((dim,), jnp.float32),
        norm1_b=jnp.zeros((dim,), jnp.float32),
        norm2_w=jnp.ones((dim,), jnp.float32),
        norm2_b=jnp.zeros((dim,), jnp.float32),
        f_w=w(ks[0], (dim, hd_tot)), f_b=jnp.zeros((hd_tot,), jnp.float32),
        v_w=w(ks[1], (dim, hd_tot)), v_b=jnp.zeros((hd_tot,), jnp.float32),
        proj_w=w(ks[2], (hd_tot, dim)), proj_b=jnp.zeros((dim,), jnp.float32),
        sim_alpha=jnp.array(1.0, jnp.float32),
        sim_beta=jnp.array(0.0, jnp.float32),
        fc1_w=w(ks[3], (dim, mlp_hidden)), fc1_b=jnp.zeros((mlp_hidden,), jnp.float32),
        fc2_w=w(ks[4], (mlp_hidden, dim)), fc2_b=jnp.zeros((dim,), jnp.float32),
        ls1=jnp.full((dim,), layer_scale_init, jnp.float32),
        ls2=jnp.full((dim,), layer_scale_init, jnp.float32),
    )


if __name__ == "__main__":
    key = jax.random.PRNGKey(0)
    B, dim, W, H, D = 2, 16, 4, 4, 4
    heads, head_dim = 2, 8
    mlp_hidden = int(dim * 4.0)
    proposal = (2, 2, 2)

    k_x, k_p = jax.random.split(key)
    params = init_params(k_p, dim, heads, head_dim, mlp_hidden)
    x = jax.random.normal(k_x, (B, dim, W, H, D), dtype=jnp.float32)

    fwd = jax.jit(functools.partial(
        cluster_block_forward, heads=heads, head_dim=head_dim, proposal=proposal))
    out = fwd(x, params)
    jax.block_until_ready(out)

    assert out.shape == (B, dim, W, H, D) and out.dtype == jnp.float32
    assert bool(jnp.all(jnp.isfinite(out)))
    print("KERNEL_OK")
</pallas_src>

<mosaic_0001>
module attributes {stable_mosaic.version = 11 : i64} {
  func.func @_gn_stats_kernel(%arg0: i32, %arg1: memref<1x64x16xf32, #tpu.memory_space<vmem>>, %arg2: memref<1x1x1xf32, #tpu.memory_space<vmem>>, %arg3: memref<1x1x1xf32, #tpu.memory_space<vmem>>) attributes {dimension_semantics = [#tpu.dimension_semantics<parallel>], iteration_bounds = array<i64: 2>, scalar_prefetch = 0 : i64, scratch_operands = 0 : i64, tpu.core_type = #tpu.core_type<tc>, window_params = [{transform_indices = @transform_0, window_bounds = array<i64: 1, 64, 16>}, {transform_indices = @transform_1, window_bounds = array<i64: 1, 1, 1>}, {transform_indices = @transform_2, window_bounds = array<i64: 1, 1, 1>}]} {
    %c0 = arith.constant 0 : index
    %c0_0 = arith.constant 0 : index
    %c0_1 = arith.constant 0 : index
    %0 = vector.load %arg1[%c0, %c0_0, %c0_1] : memref<1x64x16xf32, #tpu.memory_space<vmem>>, vector<1x64x16xf32>
    %1 = vector.shape_cast %0 : vector<1x64x16xf32> to vector<64x16xf32>
    %2 = vector.shape_cast %1 : vector<64x16xf32> to vector<1x64x16xf32>
    %cst = arith.constant dense<0.000000e+00> : vector<1xf32>
    %3 = vector.multi_reduction <add>, %2, %cst [1, 2] : vector<1x64x16xf32> to vector<1xf32>
    %4 = vector.shape_cast %3 : vector<1xf32> to vector<1x1x1xf32>
    %5 = vector.extract %4[0, 0, 0] : f32 from vector<1x1x1xf32>
    %cst_2 = arith.constant 9.765625E-4 : f32
    %6 = arith.mulf %5, %cst_2 : f32
    %7 = arith.mulf %1, %1 : vector<64x16xf32>
    %8 = vector.shape_cast %7 : vector<64x16xf32> to vector<1x64x16xf32>
    %cst_3 = arith.constant dense<0.000000e+00> : vector<1xf32>
    %9 = vector.multi_reduction <add>, %8, %cst_3 [1, 2] : vector<1x64x16xf32> to vector<1xf32>
    %10 = vector.shape_cast %9 : vector<1xf32> to vector<1x1x1xf32>
    %11 = vector.extract %10[0, 0, 0] : f32 from vector<1x1x1xf32>
    %cst_4 = arith.constant 9.765625E-4 : f32
    %12 = arith.mulf %11, %cst_4 : f32
    %13 = arith.mulf %6, %6 : f32
    %14 = arith.subf %12, %13 : f32
    %cst_5 = arith.constant 9.99999974E-6 : f32
    %15 = arith.addf %14, %cst_5 : f32
    %16 = math.rsqrt %15 : f32
    %17 = vector.broadcast %6 : f32 to vector<1x1x1xf32>
    %c0_6 = arith.constant 0 : index
    %c0_7 = arith.constant 0 : index
    %c0_8 = arith.constant 0 : index
    %18 = vector.load %arg2[%c0_6, %c0_7, %c0_8] : memref<1x1x1xf32, #tpu.memory_space<vmem>>, vector<1x1x1xf32>
    tpu.vector_store %arg2[%c0_6, %c0_7, %c0_8], %17 {strides = array<i32>} : memref<1x1x1xf32, #tpu.memory_space<vmem>>, vector<1x1x1xf32>,
    %19 = vector.broadcast %16 : f32 to vector<1x1x1xf32>
    %c0_9 = arith.constant 0 : index
    %c0_10 = arith.constant 0 : index
    %c0_11 = arith.constant 0 : index
    %20 = vector.load %arg3[%c0_9, %c0_10, %c0_11] : memref<1x1x1xf32, #tpu.memory_space<vmem>>, vector<1x1x1xf32>
    tpu.vector_store %arg3[%c0_9, %c0_10, %c0_11], %19 {strides = array<i32>} : memref<1x1x1xf32, #tpu.memory_space<vmem>>, vector<1x1x1xf32>,
    return
  }
  func.func @transform_0(%arg0: i32) -> (i32, i32, i32) {
    %c0_i32 = arith.constant 0 : i32
    %c0_i32_0 = arith.constant 0 : i32
    %c0_i32_1 = arith.constant 0 : i32
    return %arg0, %c0_i32, %c0_i32_0 : i32, i32, i32
  }
  func.func @transform_1(%arg0: i32) -> (i32, i32, i32) {
    %c0_i32 = arith.constant 0 : i32
    %c0_i32_0 = arith.constant 0 : i32
    %c0_i32_1 = arith.constant 0 : i32
    return %arg0, %c0_i32, %c0_i32_0 : i32, i32, i32
  }
  func.func @transform_2(%arg0: i32) -> (i32, i32, i32) {
    %c0_i32 = arith.constant 0 : i32
    %c0_i32_0 = arith.constant 0 : i32
    %c0_i32_1 = arith.constant 0 : i32
    return %arg0, %c0_i32, %c0_i32_0 : i32, i32, i32
  }
}

module attributes {stable_mosaic.version = 11 : i64} {
  func.func @_mixer_kernel(%arg0: i32, %arg1: memref<1x64x16xf32, #tpu.memory_space<vmem>>, %arg2: memref<8x64xf32, #tpu.memory_space<vmem>>, %arg3: memref<1x16xf32, #tpu.memory_space<vmem>>, %arg4: memref<1x16xf32, #tpu.memory_space<vmem>>, %arg5: memref<16x16xf32, #tpu.memory_space<vmem>>, %arg6: memref<1x16xf32, #tpu.memory_space<vmem>>, %arg7: memref<16x16xf32, #tpu.memory_space<vmem>>, %arg8: memref<1x16xf32, #tpu.memory_space<vmem>>, %arg9: memref<16x16xf32, #tpu.memory_space<vmem>>, %arg10: memref<1x16xf32, #tpu.memory_space<vmem>>, %arg11: memref<1x16xf32, #tpu.memory_space<vmem>>, %arg12: memref<2xf32, #tpu.memory_space<smem>>, %arg13: memref<1x64x16xf32, #tpu.memory_space<vmem>>) attributes {dimension_semantics = [#tpu.dimension_semantics<parallel>], iteration_bounds = array<i64: 2>, scalar_prefetch = 0 : i64, scratch_operands = 0 : i64, tpu.core_type = #tpu.core_type<tc>, window_params = [{transform_indices = @transform_0, window_bounds = array<i64: 1, 64, 16>}, {pipeline_mode = #tpu.pipeline_mode<synchronous>, transform_indices = @transform_1, window_bounds = array<i64: 8, 64>}, {pipeline_mode = #tpu.pipeline_mode<synchronous>, transform_indices = @transform_2, window_bounds = array<i64: 1, 16>}, {pipeline_mode = #tpu.pipeline_mode<synchronous>, transform_indices = @transform_3, window_bounds = array<i64: 1, 16>}, {pipeline_mode = #tpu.pipeline_mode<synchronous>, transform_indices = @transform_4, window_bounds = array<i64: 16, 16>}, {pipeline_mode = #tpu.pipeline_mode<synchronous>, transform_indices = @transform_5, window_bounds = array<i64: 1, 16>}, {pipeline_mode = #tpu.pipeline_mode<synchronous>, transform_indices = @transform_6, window_bounds = array<i64: 16, 16>}, {pipeline_mode = #tpu.pipeline_mode<synchronous>, transform_indices = @transform_7, window_bounds = array<i64: 1, 16>}, {pipeline_mode = #tpu.pipeline_mode<synchronous>, transform_indices = @transform_8, window_bounds = array<i64: 16, 16>}, {pipeline_mode = #tpu.pipeline_mode<synchronous>, transform_indices = @transform_9, window_bounds = array<i64: 1, 16>}, {pipeline_mode = #tpu.pipeline_mode<synchronous>, transform_indices = @transform_10, window_bounds = array<i64: 1, 16>}, {transform_indices = @transform_11, window_bounds = array<i64: 2>}, {transform_indices = @transform_12, window_bounds = array<i64: 1, 64, 16>}]} {
    %c0 = arith.constant 0 : index
    %c0_0 = arith.constant 0 : index
    %c0_1 = arith.constant 0 : index
    %0 = vector.load %arg1[%c0, %c0_0, %c0_1] : memref<1x64x16xf32, #tpu.memory_space<vmem>>, vector<1x64x16xf32>
    %1 = vector.shape_cast %0 : vector<1x64x16xf32> to vector<64x16xf32>
    %2 = vector.shape_cast %1 : vector<64x16xf32> to vector<1x64x16xf32>
    %cst = arith.constant dense<0.000000e+00> : vector<1xf32>
    %3 = vector.multi_reduction <add>, %2, %cst [1, 2] : vector<1x64x16xf32> to vector<1xf32>
    %4 = vector.shape_cast %3 : vector<1xf32> to vector<1x1x1xf32>
    %5 = vector.extract %4[0, 0, 0] : f32 from vector<1x1x1xf32>
    %cst_2 = arith.constant 9.765625E-4 : f32
    %6 = arith.mulf %5, %cst_2 : f32
    %7 = arith.mulf %1, %1 : vector<64x16xf32>
    %8 = vector.shape_cast %7 : vector<64x16xf32> to vector<1x64x16xf32>
    %cst_3 = arith.constant dense<0.000000e+00> : vector<1xf32>
    %9 = vector.multi_reduction <add>, %8, %cst_3 [1, 2] : vector<1x64x16xf32> to vector<1xf32>
    %10 = vector.shape_cast %9 : vector<1xf32> to vector<1x1x1xf32>
    %11 = vector.extract %10[0, 0, 0] : f32 from vector<1x1x1xf32>
    %cst_4 = arith.constant 9.765625E-4 : f32
    %12 = arith.mulf %11, %cst_4 : f32
    %13 = arith.mulf %6, %6 : f32
    %14 = arith.subf %12, %13 : f32
    %cst_5 = arith.constant 9.99999974E-6 : f32
    %15 = arith.addf %14, %cst_5 : f32
    %16 = math.rsqrt %15 : f32
    %17 = vector.broadcast %6 : f32 to vector<64x16xf32>
    %18 = arith.subf %1, %17 : vector<64x16xf32>
    %19 = vector.broadcast %16 : f32 to vector<64x16xf32>
    %20 = arith.mulf %18, %19 : vector<64x16xf32>
    %c0_6 = arith.constant 0 : index
    %c0_7 = arith.constant 0 : index
    %21 = vector.load %arg3[%c0_6, %c0_7] : memref<1x16xf32, #tpu.memory_space<vmem>>, vector<1x16xf32>
    %22 = vector.broadcast %21 : vector<1x16xf32> to vector<64x16xf32>
    %23 = arith.mulf %20, %22 : vector<64x16xf32>
    %c0_8 = arith.constant 0 : index
    %c0_9 = arith.constant 0 : index
    %24 = vector.load %arg4[%c0_8, %c0_9] : memref<1x16xf32, #tpu.memory_space<vmem>>, vector<1x16xf32>
    %25 = vector.broadcast %24 : vector<1x16xf32> to vector<64x16xf32>
    %26 = arith.addf %23, %25 : vector<64x16xf32>
    %c0_10 = arith.constant 0 : index
    %c0_11 = arith.constant 0 : index
    %27 = vector.load %arg5[%c0_10, %c0_11] : memref<16x16xf32, #tpu.memory_space<vmem>>, vector<16x16xf32>
    %cst_12 = arith.constant dense<0.000000e+00> : vector<64x16xf32>
    %28 = tpu.matmul %26, %27, %cst_12 {dimension_numbers = #tpu.dot_dimension_numbers<[1], [0], [0], [1], [0, 0, 1, 1], [], []>} : vector<64x16xf32>, vector<16x16xf32>, vector<64x16xf32> -> vector<64x16xf32>
    %c0_13 = arith.constant 0 : index
    %c0_14 = arith.constant 0 : index
    %29 = vector.load %arg6[%c0_13, %c0_14] : memref<1x16xf32, #tpu.memory_space<vmem>>, vector<1x16xf32>
    %30 = vector.broadcast %29 : vector<1x16xf32> to vector<64x16xf32>
    %31 = arith.addf %28, %30 : vector<64x16xf32>
    %c0_15 = arith.constant 0 : index
    %c0_16 = arith.constant 0 : index
    %32 = vector.load %arg7[%c0_15, %c0_16] : memref<16x16xf32, #tpu.memory_space<vmem>>, vector<16x16xf32>
    %cst_17 = arith.constant dense<0.000000e+00> : vector<64x16xf32>
    %33 = tpu.matmul %26, %32, %cst_17 {dimension_numbers = #tpu.dot_dimension_numbers<[1], [0], [0], [1], [0, 0, 1, 1], [], []>} : vector<64x16xf32>, vector<16x16xf32>, vector<64x16xf32> -> vector<64x16xf32>
    %c0_18 = arith.constant 0 : index
    %c0_19 = arith.constant 0 : index
    %34 = vector.load %arg8[%c0_18, %c0_19] : memref<1x16xf32, #tpu.memory_space<vmem>>, vector<1x16xf32>
    %35 = vector.broadcast %34 : vector<1x16xf32> to vector<64x16xf32>
    %36 = arith.addf %33, %35 : vector<64x16xf32>
    %c0_20 = arith.constant 0 : index
    %c0_21 = arith.constant 0 : index
    %37 = vector.load %arg2[%c0_20, %c0_21] : memref<8x64xf32, #tpu.memory_space<vmem>>, vector<8x64xf32>
    %cst_22 = arith.constant dense<0.000000e+00> : vector<8x16xf32>
    %38 = tpu.matmul %37, %31, %cst_22 {dimension_numbers = #tpu.dot_dimension_numbers<[1], [0], [0], [1], [0, 0, 1, 1], [], []>} : vector<8x64xf32>, vector<64x16xf32>, vector<8x16xf32> -> vector<8x16xf32>
    %cst_23 = arith.constant dense<0.000000e+00> : vector<8x16xf32>
    %39 = tpu.matmul %37, %36, %cst_23 {dimension_numbers = #tpu.dot_dimension_numbers<[1], [0], [0], [1], [0, 0, 1, 1], [], []>} : vector<8x64xf32>, vector<64x16xf32>, vector<8x16xf32> -> vector<8x16xf32>
    %c0_24 = arith.constant 0 : index
    %40 = memref.load %arg12[%c0_24] : memref<2xf32, #tpu.memory_space<smem>>
    %c1 = arith.constant 1 : index
    %41 = memref.load %arg12[%c1] : memref<2xf32, #tpu.memory_space<smem>>
    %42 = tpu.iota {dimensions = array<i32: 1>} : vector<1x16xi32>
    %43 = tpu.iota {dimensions = array<i32: 0>} : vector<8x64xi32>
    %cst_25 = arith.constant 0.000000e+00 : f32
    %44 = vector.broadcast %cst_25 : f32 to vector<64x16xf32>
    %c0_i32 = arith.constant 0 : i32
    %45 = vector.broadcast %c0_i32 : i32 to vector<1x16xi32>
    %46 = arith.cmpi sge, %42, %45 : vector<1x16xi32>
    %c8_i32 = arith.constant 8 : i32
    %47 = vector.broadcast %c8_i32 : i32 to vector<1x16xi32>
    %48 = arith.cmpi slt, %42, %47 : vector<1x16xi32>
    %49 = arith.andi %46, %48 : vector<1x16xi1>
    %50 = arith.extui %49 : vector<1x16xi1> to vector<1x16xi32>
    %51 = arith.sitofp %50 : vector<1x16xi32> to vector<1x16xf32>
    %52 = vector.broadcast %51 : vector<1x16xf32> to vector<64x16xf32>
    %53 = arith.mulf %31, %52 : vector<64x16xf32>
    %54 = vector.broadcast %51 : vector<1x16xf32> to vector<64x16xf32>
    %55 = arith.mulf %36, %54 : vector<64x16xf32>
    %56 = vector.broadcast %51 : vector<1x16xf32> to vector<8x16xf32>
    %57 = arith.mulf %38, %56 : vector<8x16xf32>
    %58 = vector.broadcast %51 : vector<1x16xf32> to vector<8x16xf32>
    %59 = arith.mulf %39, %58 : vector<8x16xf32>
    %60 = arith.mulf %57, %57 : vector<8x16xf32>
    %cst_26 = arith.constant dense<0.000000e+00> : vector<8xf32>
    %61 = vector.multi_reduction <add>, %60, %cst_26 [1] : vector<8x16xf32> to vector<8xf32>
    %62 = vector.shape_cast %61 : vector<8xf32> to vector<8x1xf32>
    %cst_27 = arith.constant 1.000000e-24 : f32
    %63 = vector.broadcast %cst_27 : f32 to vector<8x1xf32>
    %64 = arith.maximumf %62, %63 : vector<8x1xf32>
    %65 = math.rsqrt %64 : vector<8x1xf32>
    %66 = vector.broadcast %65 : vector<8x1xf32> to vector<8x16xf32>
    %67 = arith.mulf %57, %66 : vector<8x16xf32>
    %68 = arith.mulf %53, %53 : vector<64x16xf32>
    %cst_28 = arith.constant dense<0.000000e+00> : vector<64xf32>
    %69 = vector.multi_reduction <add>, %68, %cst_28 [1] : vector<64x16xf32> to vector<64xf32>
    %70 = vector.shape_cast %69 : vector<64xf32> to vector<64x1xf32>
    %cst_29 = arith.constant 1.000000e-24 : f32
    %71 = vector.broadcast %cst_29 : f32 to vector<64x1xf32>
    %72 = arith.maximumf %70, %71 : vector<64x1xf32>
    %73 = math.rsqrt %72 : vector<64x1xf32>
    %74 = vector.broadcast %73 : vector<64x1xf32> to vector<64x16xf32>
    %75 = arith.mulf %53, %74 : vector<64x16xf32>
    %cst_30 = arith.constant dense<0.000000e+00> : vector<8x64xf32>
    %76 = tpu.matmul %67, %75, %cst_30 {dimension_numbers = #tpu.dot_dimension_numbers<[1], [1], [0], [0], [0, 0, 1, 0], [], []>} : vector<8x16xf32>, vector<64x16xf32>, vector<8x64xf32> -> vector<8x64xf32>
    %77 = vector.broadcast %40 : f32 to vector<8x64xf32>
    %78 = arith.mulf %77, %76 : vector<8x64xf32>
    %79 = vector.broadcast %41 : f32 to vector<8x64xf32>
    %80 = arith.addf %79, %78 : vector<8x64xf32>
    %81 = arith.negf %80 : vector<8x64xf32>
    %82 = math.exp %81 : vector<8x64xf32>
    %cst_31 = arith.constant 1.000000e+00 : f32
    %83 = vector.broadcast %cst_31 : f32 to vector<8x64xf32>
    %84 = arith.addf %83, %82 : vector<8x64xf32>
    %85 = arith.divf %83, %84 : vector<8x64xf32>
    %cst_32 = arith.constant dense<0xFF800000> : vector<64xf32>
    %86 = vector.multi_reduction <maximumf>, %85, %cst_32 [0] : vector<8x64xf32> to vector<64xf32>
    %87 = vector.shape_cast %86 : vector<64xf32> to vector<1x64xf32>
    %88 = vector.broadcast %87 : vector<1x64xf32> to vector<8x64xf32>
    %89 = arith.cmpf oge, %85, %88 : vector<8x64xf32>
    %c8_i32_33 = arith.constant 8 : i32
    %90 = vector.broadcast %c8_i32_33 : i32 to vector<8x64xi32>
    %91 = arith.select %89, %43, %90 : vector<8x64xi1>, vector<8x64xi32>
    %cst_34 = arith.constant dense<2147483647> : vector<64xi32>
    %92 = vector.multi_reduction <minsi>, %91, %cst_34 [0] : vector<8x64xi32> to vector<64xi32>
    %93 = vector.shape_cast %92 : vector<64xi32> to vector<1x64xi32>
    %94 = vector.broadcast %93 : vector<1x64xi32> to vector<8x64xi32>
    %95 = arith.cmpi eq, %43, %94 : vector<8x64xi32>
    %cst_35 = arith.constant 0.000000e+00 : f32
    %96 = vector.broadcast %cst_35 : f32 to vector<8x64xf32>
    %97 = arith.select %95, %85, %96 : vector<8x64xi1>, vector<8x64xf32>
    %cst_36 = arith.constant dense<0.000000e+00> : vector<8x16xf32>
    %98 = tpu.matmul %97, %55, %cst_36 {dimension_numbers = #tpu.dot_dimension_numbers<[1], [0], [0], [1], [0, 0, 1, 1], [], []>} : vector<8x64xf32>, vector<64x16xf32>, vector<8x16xf32> -> vector<8x16xf32>
    %99 = arith.addf %98, %59 : vector<8x16xf32>
    %cst_37 = arith.constant dense<0.000000e+00> : vector<8xf32>
    %100 = vector.multi_reduction <add>, %97, %cst_37 [1] : vector<8x64xf32> to vector<8xf32>
    %101 = vector.shape_cast %100 : vector<8xf32> to vector<8x1xf32>
    %cst_38 = arith.constant 1.000000e+00 : f32
    %102 = vector.broadcast %cst_38 : f32 to vector<8x1xf32>
    %103 = arith.addf %101, %102 : vector<8x1xf32>
    %104 = tpu.reciprocal %103 {approx = true} : vector<8x1xf32> -> vector<8x1xf32>
    %105 = vector.broadcast %104 : vector<8x1xf32> to vector<8x16xf32>
    %106 = arith.mulf %99, %105 : vector<8x16xf32>
    %cst_39 = arith.constant dense<0.000000e+00> : vector<64x16xf32>
    %107 = tpu.matmul %97, %106, %cst_39 {dimension_numbers = #tpu.dot_dimension_numbers<[0], [0], [1], [1], [0, 1, 1, 1], [], []>} : vector<8x64xf32>, vector<8x16xf32>, vector<64x16xf32> -> vector<64x16xf32>
    %108 = arith.addf %44, %107 : vector<64x16xf32>
    %c8_i32_40 = arith.constant 8 : i32
    %109 = vector.broadcast %c8_i32_40 : i32 to vector<1x16xi32>
    %110 = arith.cmpi sge, %42, %109 : vector<1x16xi32>
    %c16_i32 = arith.constant 16 : i32
    %111 = vector.broadcast %c16_i32 : i32 to vector<1x16xi32>
    %112 = arith.cmpi slt, %42, %111 : vector<1x16xi32>
    %113 = arith.andi %110, %112 : vector<1x16xi1>
    %114 = arith.extui %113 : vector<1x16xi1> to vector<1x16xi32>
    %115 = arith.sitofp %114 : vector<1x16xi32> to vector<1x16xf32>
    %116 = vector.broadcast %115 : vector<1x16xf32> to vector<64x16xf32>
    %117 = arith.mulf %31, %116 : vector<64x16xf32>
    %118 = vector.broadcast %115 : vector<1x16xf32> to vector<64x16xf32>
    %119 = arith.mulf %36, %118 : vector<64x16xf32>
    %120 = vector.broadcast %115 : vector<1x16xf32> to vector<8x16xf32>
    %121 = arith.mulf %38, %120 : vector<8x16xf32>
    %122 = vector.broadcast %115 : vector<1x16xf32> to vector<8x16xf32>
    %123 = arith.mulf %39, %122 : vector<8x16xf32>
    %124 = arith.mulf %121, %121 : vector<8x16xf32>
    %cst_41 = arith.constant dense<0.000000e+00> : vector<8xf32>
    %125 = vector.multi_reduction <add>, %124, %cst_41 [1] : vector<8x16xf32> to vector<8xf32>
    %126 = vector.shape_cast %125 : vector<8xf32> to vector<8x1xf32>
    %cst_42 = arith.constant 1.000000e-24 : f32
    %127 = vector.broadcast %cst_42 : f32 to vector<8x1xf32>
    %128 = arith.maximumf %126, %127 : vector<8x1xf32>
    %129 = math.rsqrt %128 : vector<8x1xf32>
    %130 = vector.broadcast %129 : vector<8x1xf32> to vector<8x16xf32>
    %131 = arith.mulf %121, %130 : vector<8x16xf32>
    %132 = arith.mulf %117, %117 : vector<64x16xf32>
    %cst_43 = arith.constant dense<0.000000e+00> : vector<64xf32>
    %133 = vector.multi_reduction <add>, %132, %cst_43 [1] : vector<64x16xf32> to vector<64xf32>
    %134 = vector.shape_cast %133 : vector<64xf32> to vector<64x1xf32>
    %cst_44 = arith.constant 1.000000e-24 : f32
    %135 = vector.broadcast %cst_44 : f32 to vector<64x1xf32>
    %136 = arith.maximumf %134, %135 : vector<64x1xf32>
    %137 = math.rsqrt %136 : vector<64x1xf32>
    %138 = vector.broadcast %137 : vector<64x1xf32> to vector<64x16xf32>
    %139 = arith.mulf %117, %138 : vector<64x16xf32>
    %cst_45 = arith.constant dense<0.000000e+00> : vector<8x64xf32>
    %140 = tpu.matmul %131, %139, %cst_45 {dimension_numbers = #tpu.dot_dimension_numbers<[1], [1], [0], [0], [0, 0, 1, 0], [], []>} : vector<8x16xf32>, vector<64x16xf32>, vector<8x64xf32> -> vector<8x64xf32>
    %141 = vector.broadcast %40 : f32 to vector<8x64xf32>
    %142 = arith.mulf %141, %140 : vector<8x64xf32>
    %143 = vector.broadcast %41 : f32 to vector<8x64xf32>
    %144 = arith.addf %143, %142 : vector<8x64xf32>
    %145 = arith.negf %144 : vector<8x64xf32>
    %146 = math.exp %145 : vector<8x64xf32>
    %cst_46 = arith.constant 1.000000e+00 : f32
    %147 = vector.broadcast %cst_46 : f32 to vector<8x64xf32>
    %148 = arith.addf %147, %146 : vector<8x64xf32>
    %149 = arith.divf %147, %148 : vector<8x64xf32>
    %cst_47 = arith.constant dense<0xFF800000> : vector<64xf32>
    %150 = vector.multi_reduction <maximumf>, %149, %cst_47 [0] : vector<8x64xf32> to vector<64xf32>
    %151 = vector.shape_cast %150 : vector<64xf32> to vector<1x64xf32>
    %152 = vector.broadcast %151 : vector<1x64xf32> to vector<8x64xf32>
    %153 = arith.cmpf oge, %149, %152 : vector<8x64xf32>
    %c8_i32_48 = arith.constant 8 : i32
    %154 = vector.broadcast %c8_i32_48 : i32 to vector<8x64xi32>
    %155 = arith.select %153, %43, %154 : vector<8x64xi1>, vector<8x64xi32>
    %cst_49 = arith.constant dense<2147483647> : vector<64xi32>
    %156 = vector.multi_reduction <minsi>, %155, %cst_49 [0] : vector<8x64xi32> to vector<64xi32>
    %157 = vector.shape_cast %156 : vector<64xi32> to vector<1x64xi32>
    %158 = vector.broadcast %157 : vector<1x64xi32> to vector<8x64xi32>
    %159 = arith.cmpi eq, %43, %158 : vector<8x64xi32>
    %cst_50 = arith.constant 0.000000e+00 : f32
    %160 = vector.broadcast %cst_50 : f32 to vector<8x64xf32>
    %161 = arith.select %159, %149, %160 : vector<8x64xi1>, vector<8x64xf32>
    %cst_51 = arith.constant dense<0.000000e+00> : vector<8x16xf32>
    %162 = tpu.matmul %161, %119, %cst_51 {dimension_numbers = #tpu.dot_dimension_numbers<[1], [0], [0], [1], [0, 0, 1, 1], [], []>} : vector<8x64xf32>, vector<64x16xf32>, vector<8x16xf32> -> vector<8x16xf32>
    %163 = arith.addf %162, %123 : vector<8x16xf32>
    %cst_52 = arith.constant dense<0.000000e+00> : vector<8xf32>
    %164 = vector.multi_reduction <add>, %161, %cst_52 [1] : vector<8x64xf32> to vector<8xf32>
    %165 = vector.shape_cast %164 : vector<8xf32> to vector<8x1xf32>
    %cst_53 = arith.constant 1.000000e+00 : f32
    %166 = vector.broadcast %cst_53 : f32 to vector<8x1xf32>
    %167 = arith.addf %165, %166 : vector<8x1xf32>
    %168 = tpu.reciprocal %167 {approx = true} : vector<8x1xf32> -> vector<8x1xf32>
    %169 = vector.broadcast %168 : vector<8x1xf32> to vector<8x16xf32>
    %170 = arith.mulf %163, %169 : vector<8x16xf32>
    %cst_54 = arith.constant dense<0.000000e+00> : vector<64x16xf32>
    %171 = tpu.matmul %161, %170, %cst_54 {dimension_numbers = #tpu.dot_dimension_numbers<[0], [0], [1], [1], [0, 1, 1, 1], [], []>} : vector<8x64xf32>, vector<8x16xf32>, vector<64x16xf32> -> vector<64x16xf32>
    %172 = arith.addf %108, %171 : vector<64x16xf32>
    %c0_55 = arith.constant 0 : index
    %c0_56 = arith.constant 0 : index
    %173 = vector.load %arg9[%c0_55, %c0_56] : memref<16x16xf32, #tpu.memory_space<vmem>>, vector<16x16xf32>
    %cst_57 = arith.constant dense<0.000000e+00> : vector<64x16xf32>
    %174 = tpu.matmul %172, %173, %cst_57 {dimension_numbers = #tpu.dot_dimension_numbers<[1], [0], [0], [1], [0, 0, 1, 1], [], []>} : vector<64x16xf32>, vector<16x16xf32>, vector<64x16xf32> -> vector<64x16xf32>
    %c0_58 = arith.constant 0 : index
    %c0_59 = arith.constant 0 : index
    %175 = vector.load %arg10[%c0_58, %c0_59] : memref<1x16xf32, #tpu.memory_space<vmem>>, vector<1x16xf32>
    %176 = vector.broadcast %175 : vector<1x16xf32> to vector<64x16xf32>
    %177 = arith.addf %174, %176 : vector<64x16xf32>
    %c0_60 = arith.constant 0 : index
    %c0_61 = arith.constant 0 : index
    %178 = vector.load %arg11[%c0_60, %c0_61] : memref<1x16xf32, #tpu.memory_space<vmem>>, vector<1x16xf32>
    %179 = vector.broadcast %178 : vector<1x16xf32> to vector<64x16xf32>
    %180 = arith.mulf %179, %177 : vector<64x16xf32>
    %181 = arith.addf %1, %180 : vector<64x16xf32>
    %c0_62 = arith.constant 0 : index
    %c0_63 = arith.constant 0 : index
    %c0_64 = arith.constant 0 : index
    %182 = vector.load %arg13[%c0_62, %c0_63, %c0_64] : memref<1x64x16xf32, #tpu.memory_space<vmem>>, vector<1x64x16xf32>
    %183 = vector.shape_cast %182 : vector<1x64x16xf32> to vector<64x16xf32>
    %184 = vector.shape_cast %181 : vector<64x16xf32> to vector<1x64x16xf32>
    tpu.vector_store %arg13[%c0_62, %c0_63, %c0_64], %184 {strides = array<i32>} : memref<1x64x16xf32, #tpu.memory_space<vmem>>, vector<1x64x16xf32>,
    return
  }
  func.func @transform_0(%arg0: i32) -> (i32, i32, i32) {
    %c0_i32 = arith.constant 0 : i32
    %c0_i32_0 = arith.constant 0 : i32
    %c0_i32_1 = arith.constant 0 : i32
    return %arg0, %c0_i32, %c0_i32_0 : i32, i32, i32
  }
  func.func @transform_1(%arg0: i32) -> (i32, i32) {
    %c0_i32 = arith.constant 0 : i32
    %c0_i32_0 = arith.constant 0 : i32
    %c0_i32_1 = arith.constant 0 : i32
    return %c0_i32, %c0_i32_0 : i32, i32
  }
  func.func @transform_2(%arg0: i32) -> (i32, i32) {
    %c0_i32 = arith.constant 0 : i32
    %c0_i32_0 = arith.constant 0 : i32
    %c0_i32_1 = arith.constant 0 : i32
    return %c0_i32, %c0_i32_0 : i32, i32
  }
  func.func @transform_3(%arg0: i32) -> (i32, i32) {
    %c0_i32 = arith.constant 0 : i32
    %c0_i32_0 = arith.constant 0 : i32
    %c0_i32_1 = arith.constant 0 : i32
    return %c0_i32, %c0_i32_0 : i32, i32
  }
  func.func @transform_4(%arg0: i32) -> (i32, i32) {
    %c0_i32 = arith.constant 0 : i32
    %c0_i32_0 = arith.constant 0 : i32
    %c0_i32_1 = arith.constant 0 : i32
    return %c0_i32, %c0_i32_0 : i32, i32
  }
  func.func @transform_5(%arg0: i32) -> (i32, i32) {
    %c0_i32 = arith.constant 0 : i32
    %c0_i32_0 = arith.constant 0 : i32
    %c0_i32_1 = arith.constant 0 : i32
    return %c0_i32, %c0_i32_0 : i32, i32
  }
  func.func @transform_6(%arg0: i32) -> (i32, i32) {
    %c0_i32 = arith.constant 0 : i32
    %c0_i32_0 = arith.constant 0 : i32
    %c0_i32_1 = arith.constant 0 : i32
    return %c0_i32, %c0_i32_0 : i32, i32
  }
  func.func @transform_7(%arg0: i32) -> (i32, i32) {
    %c0_i32 = arith.constant 0 : i32
    %c0_i32_0 = arith.constant 0 : i32
    %c0_i32_1 = arith.constant 0 : i32
    return %c0_i32, %c0_i32_0 : i32, i32
  }
  func.func @transform_8(%arg0: i32) -> (i32, i32) {
    %c0_i32 = arith.constant 0 : i32
    %c0_i32_0 = arith.constant 0 : i32
    %c0_i32_1 = arith.constant 0 : i32
    return %c0_i32, %c0_i32_0 : i32, i32
  }
  func.func @transform_9(%arg0: i32) -> (i32, i32) {
    %c0_i32 = arith.constant 0 : i32
    %c0_i32_0 = arith.constant 0 : i32
    %c0_i32_1 = arith.constant 0 : i32
    return %c0_i32, %c0_i32_0 : i32, i32
  }
  func.func @transform_10(%arg0: i32) -> (i32, i32) {
    %c0_i32 = arith.constant 0 : i32
    %c0_i32_0 = arith.constant 0 : i32
    %c0_i32_1 = arith.constant 0 : i32
    return %c0_i32, %c0_i32_0 : i32, i32
  }
  func.func @transform_11(%arg0: i32) -> i32 {
    %c0_i32 = arith.constant 0 : i32
    %c0_i32_0 = arith.constant 0 : i32
    return %c0_i32 : i32
  }
  func.func @transform_12(%arg0: i32) -> (i32, i32, i32) {
    %c0_i32 = arith.constant 0 : i32
    %c0_i32_0 = arith.constant 0 : i32
    %c0_i32_1 = arith.constant 0 : i32
    return %arg0, %c0_i32, %c0_i32_0 : i32, i32, i32
  }
}

module attributes {stable_mosaic.version = 11 : i64} {
  func.func @_mlp_kernel(%arg0: i32, %arg1: i32, %arg2: memref<1x64x16xf32, #tpu.memory_space<vmem>>, %arg3: memref<1x1x1xf32, #tpu.memory_space<vmem>>, %arg4: memref<1x1x1xf32, #tpu.memory_space<vmem>>, %arg5: memref<1x16xf32, #tpu.memory_space<vmem>>, %arg6: memref<1x16xf32, #tpu.memory_space<vmem>>, %arg7: memref<16x64xf32, #tpu.memory_space<vmem>>, %arg8: memref<1x64xf32, #tpu.memory_space<vmem>>, %arg9: memref<64x16xf32, #tpu.memory_space<vmem>>, %arg10: memref<1x16xf32, #tpu.memory_space<vmem>>, %arg11: memref<1x16xf32, #tpu.memory_space<vmem>>, %arg12: memref<1x64x16xf32, #tpu.memory_space<vmem>>) attributes {dimension_semantics = [#tpu.dimension_semantics<parallel>, #tpu.dimension_semantics<parallel>], iteration_bounds = array<i64: 2, 1>, scalar_prefetch = 0 : i64, scratch_operands = 0 : i64, tpu.core_type = #tpu.core_type<tc>, window_params = [{transform_indices = @transform_0, window_bounds = array<i64: 1, 64, 16>}, {transform_indices = @transform_1, window_bounds = array<i64: 1, 1, 1>}, {transform_indices = @transform_2, window_bounds = array<i64: 1, 1, 1>}, {pipeline_mode = #tpu.pipeline_mode<synchronous>, transform_indices = @transform_3, window_bounds = array<i64: 1, 16>}, {pipeline_mode = #tpu.pipeline_mode<synchronous>, transform_indices = @transform_4, window_bounds = array<i64: 1, 16>}, {pipeline_mode = #tpu.pipeline_mode<synchronous>, transform_indices = @transform_5, window_bounds = array<i64: 16, 64>}, {pipeline_mode = #tpu.pipeline_mode<synchronous>, transform_indices = @transform_6, window_bounds = array<i64: 1, 64>}, {pipeline_mode = #tpu.pipeline_mode<synchronous>, transform_indices = @transform_7, window_bounds = array<i64: 64, 16>}, {pipeline_mode = #tpu.pipeline_mode<synchronous>, transform_indices = @transform_8, window_bounds = array<i64: 1, 16>}, {pipeline_mode = #tpu.pipeline_mode<synchronous>, transform_indices = @transform_9, window_bounds = array<i64: 1, 16>}, {transform_indices = @transform_10, window_bounds = array<i64: 1, 64, 16>}]} {
    %c0 = arith.constant 0 : index
    %c0_0 = arith.constant 0 : index
    %c0_1 = arith.constant 0 : index
    %0 = vector.load %arg2[%c0, %c0_0, %c0_1] : memref<1x64x16xf32, #tpu.memory_space<vmem>>, vector<1x64x16xf32>
    %1 = vector.shape_cast %0 : vector<1x64x16xf32> to vector<64x16xf32>
    %c0_2 = arith.constant 0 : index
    %c0_3 = arith.constant 0 : index
    %c0_4 = arith.constant 0 : index
    %2 = vector.load %arg3[%c0_2, %c0_3, %c0_4] : memref<1x1x1xf32, #tpu.memory_space<vmem>>, vector<1x1x1xf32>
    %3 = vector.shape_cast %2 : vector<1x1x1xf32> to vector<1x1xf32>
    %4 = vector.broadcast %3 : vector<1x1xf32> to vector<64x16xf32>
    %5 = arith.subf %1, %4 : vector<64x16xf32>
    %c0_5 = arith.constant 0 : index
    %c0_6 = arith.constant 0 : index
    %c0_7 = arith.constant 0 : index
    %6 = vector.load %arg4[%c0_5, %c0_6, %c0_7] : memref<1x1x1xf32, #tpu.memory_space<vmem>>, vector<1x1x1xf32>
    %7 = vector.shape_cast %6 : vector<1x1x1xf32> to vector<1x1xf32>
    %8 = vector.broadcast %7 : vector<1x1xf32> to vector<64x16xf32>
    %9 = arith.mulf %5, %8 : vector<64x16xf32>
    %c0_8 = arith.constant 0 : index
    %c0_9 = arith.constant 0 : index
    %10 = vector.load %arg5[%c0_8, %c0_9] : memref<1x16xf32, #tpu.memory_space<vmem>>, vector<1x16xf32>
    %11 = vector.broadcast %10 : vector<1x16xf32> to vector<64x16xf32>
    %12 = arith.mulf %9, %11 : vector<64x16xf32>
    %c0_10 = arith.constant 0 : index
    %c0_11 = arith.constant 0 : index
    %13 = vector.load %arg6[%c0_10, %c0_11] : memref<1x16xf32, #tpu.memory_space<vmem>>, vector<1x16xf32>
    %14 = vector.broadcast %13 : vector<1x16xf32> to vector<64x16xf32>
    %15 = arith.addf %12, %14 : vector<64x16xf32>
    %c0_12 = arith.constant 0 : index
    %c0_13 = arith.constant 0 : index
    %16 = vector.load %arg7[%c0_12, %c0_13] : memref<16x64xf32, #tpu.memory_space<vmem>>, vector<16x64xf32>
    %cst = arith.constant dense<0.000000e+00> : vector<64x64xf32>
    %17 = tpu.matmul %15, %16, %cst {dimension_numbers = #tpu.dot_dimension_numbers<[1], [0], [0], [1], [0, 0, 1, 1], [], []>} : vector<64x16xf32>, vector<16x64xf32>, vector<64x64xf32> -> vector<64x64xf32>
    %c0_14 = arith.constant 0 : index
    %c0_15 = arith.constant 0 : index
    %18 = vector.load %arg8[%c0_14, %c0_15] : memref<1x64xf32, #tpu.memory_space<vmem>>, vector<1x64xf32>
    %19 = vector.broadcast %18 : vector<1x64xf32> to vector<64x64xf32>
    %20 = arith.addf %17, %19 : vector<64x64xf32>
    %cst_16 = arith.constant 5.000000e-01 : f32
    %21 = vector.broadcast %cst_16 : f32 to vector<64x64xf32>
    %22 = arith.mulf %21, %20 : vector<64x64xf32>
    %cst_17 = arith.constant 0.707106769 : f32
    %23 = vector.broadcast %cst_17 : f32 to vector<64x64xf32>
    %24 = arith.mulf %20, %23 : vector<64x64xf32>
    %cst_18 = arith.constant 0.000000e+00 : f32
    %25 = vector.broadcast %cst_18 : f32 to vector<64x64xf32>
    %26 = arith.cmpf oge, %24, %25 : vector<64x64xf32>
    %cst_19 = arith.constant 1.000000e+00 : f32
    %cst_20 = arith.constant -1.000000e+00 : f32
    %27 = vector.broadcast %cst_19 : f32 to vector<64x64xf32>
    %28 = vector.broadcast %cst_20 : f32 to vector<64x64xf32>
    %29 = arith.select %26, %27, %28 : vector<64x64xi1>, vector<64x64xf32>
    %30 = math.absf %24 : vector<64x64xf32>
    %cst_21 = arith.constant 0.327591091 : f32
    %31 = vector.broadcast %cst_21 : f32 to vector<64x64xf32>
    %32 = arith.mulf %31, %30 : vector<64x64xf32>
    %cst_22 = arith.constant 1.000000e+00 : f32
    %33 = vector.broadcast %cst_22 : f32 to vector<64x64xf32>
    %34 = arith.addf %33, %32 : vector<64x64xf32>
    %cst_23 = arith.constant 1.000000e+00 : f32
    %35 = vector.broadcast %cst_23 : f32 to vector<64x64xf32>
    %36 = arith.divf %35, %34 : vector<64x64xf32>
    %cst_24 = arith.constant 1.06140542 : f32
    %37 = vector.broadcast %cst_24 : f32 to vector<64x64xf32>
    %38 = arith.mulf %37, %36 : vector<64x64xf32>
    %cst_25 = arith.constant -1.45315206 : f32
    %39 = vector.broadcast %cst_25 : f32 to vector<64x64xf32>
    %40 = arith.addf %38, %39 : vector<64x64xf32>
    %41 = arith.mulf %40, %36 : vector<64x64xf32>
    %cst_26 = arith.constant 1.42141378 : f32
    %42 = vector.broadcast %cst_26 : f32 to vector<64x64xf32>
    %43 = arith.addf %41, %42 : vector<64x64xf32>
    %44 = arith.mulf %43, %36 : vector<64x64xf32>
    %cst_27 = arith.constant -0.284496725 : f32
    %45 = vector.broadcast %cst_27 : f32 to vector<64x64xf32>
    %46 = arith.addf %44, %45 : vector<64x64xf32>
    %47 = arith.mulf %46, %36 : vector<64x64xf32>
    %cst_28 = arith.constant 0.254829586 : f32
    %48 = vector.broadcast %cst_28 : f32 to vector<64x64xf32>
    %49 = arith.addf %47, %48 : vector<64x64xf32>
    %50 = arith.mulf %49, %36 : vector<64x64xf32>
    %cst_29 = arith.constant 0.000000e+00 : f32
    %51 = vector.broadcast %cst_29 : f32 to vector<64x64xf32>
    %52 = arith.subf %51, %30 : vector<64x64xf32>
    %53 = arith.mulf %52, %30 : vector<64x64xf32>
    %54 = math.exp %53 : vector<64x64xf32>
    %55 = arith.mulf %50, %54 : vector<64x64xf32>
    %cst_30 = arith.constant 1.000000e+00 : f32
    %56 = vector.broadcast %cst_30 : f32 to vector<64x64xf32>
    %57 = arith.subf %56, %55 : vector<64x64xf32>
    %58 = arith.mulf %29, %57 : vector<64x64xf32>
    %cst_31 = arith.constant 1.000000e+00 : f32
    %59 = vector.broadcast %cst_31 : f32 to vector<64x64xf32>
    %60 = arith.addf %59, %58 : vector<64x64xf32>
    %61 = arith.mulf %22, %60 : vector<64x64xf32>
    %c0_32 = arith.constant 0 : index
    %c0_33 = arith.constant 0 : index
    %62 = vector.load %arg9[%c0_32, %c0_33] : memref<64x16xf32, #tpu.memory_space<vmem>>, vector<64x16xf32>
    %cst_34 = arith.constant dense<0.000000e+00> : vector<64x16xf32>
    %63 = tpu.matmul %61, %62, %cst_34 {dimension_numbers = #tpu.dot_dimension_numbers<[1], [0], [0], [1], [0, 0, 1, 1], [], []>} : vector<64x64xf32>, vector<64x16xf32>, vector<64x16xf32> -> vector<64x16xf32>
    %c0_35 = arith.constant 0 : index
    %c0_36 = arith.constant 0 : index
    %64 = vector.load %arg10[%c0_35, %c0_36] : memref<1x16xf32, #tpu.memory_space<vmem>>, vector<1x16xf32>
    %65 = vector.broadcast %64 : vector<1x16xf32> to vector<64x16xf32>
    %66 = arith.addf %63, %65 : vector<64x16xf32>
    %c0_37 = arith.constant 0 : index
    %c0_38 = arith.constant 0 : index
    %67 = vector.load %arg11[%c0_37, %c0_38] : memref<1x16xf32, #tpu.memory_space<vmem>>, vector<1x16xf32>
    %68 = vector.broadcast %67 : vector<1x16xf32> to vector<64x16xf32>
    %69 = arith.mulf %68, %66 : vector<64x16xf32>
    %70 = arith.addf %1, %69 : vector<64x16xf32>
    %c0_39 = arith.constant 0 : index
    %c0_40 = arith.constant 0 : index
    %c0_41 = arith.constant 0 : index
    %71 = vector.load %arg12[%c0_39, %c0_40, %c0_41] : memref<1x64x16xf32, #tpu.memory_space<vmem>>, vector<1x64x16xf32>
    %72 = vector.shape_cast %71 : vector<1x64x16xf32> to vector<64x16xf32>
    %73 = vector.shape_cast %70 : vector<64x16xf32> to vector<1x64x16xf32>
    tpu.vector_store %arg12[%c0_39, %c0_40, %c0_41], %73 {strides = array<i32>} : memref<1x64x16xf32, #tpu.memory_space<vmem>>, vector<1x64x16xf32>,
    return
  }
  func.func @transform_0(%arg0: i32, %arg1: i32) -> (i32, i32, i32) {
    %c0_i32 = arith.constant 0 : i32
    %c0_i32_0 = arith.constant 0 : i32
    return %arg0, %arg1, %c0_i32 : i32, i32, i32
  }
  func.func @transform_1(%arg0: i32, %arg1: i32) -> (i32, i32, i32) {
    %c0_i32 = arith.constant 0 : i32
    %c0_i32_0 = arith.constant 0 : i32
    %c0_i32_1 = arith.constant 0 : i32
    return %arg0, %c0_i32, %c0_i32_0 : i32, i32, i32
  }
  func.func @transform_2(%arg0: i32, %arg1: i32) -> (i32, i32, i32) {
    %c0_i32 = arith.constant 0 : i32
    %c0_i32_0 = arith.constant 0 : i32
    %c0_i32_1 = arith.constant 0 : i32
    return %arg0, %c0_i32, %c0_i32_0 : i32, i32, i32
  }
  func.func @transform_3(%arg0: i32, %arg1: i32) -> (i32, i32) {
    %c0_i32 = arith.constant 0 : i32
    %c0_i32_0 = arith.constant 0 : i32
    %c0_i32_1 = arith.constant 0 : i32
    return %c0_i32, %c0_i32_0 : i32, i32
  }
  func.func @transform_4(%arg0: i32, %arg1: i32) -> (i32, i32) {
    %c0_i32 = arith.constant 0 : i32
    %c0_i32_0 = arith.constant 0 : i32
    %c0_i32_1 = arith.constant 0 : i32
    return %c0_i32, %c0_i32_0 : i32, i32
  }
  func.func @transform_5(%arg0: i32, %arg1: i32) -> (i32, i32) {
    %c0_i32 = arith.constant 0 : i32
    %c0_i32_0 = arith.constant 0 : i32
    %c0_i32_1 = arith.constant 0 : i32
    return %c0_i32, %c0_i32_0 : i32, i32
  }
  func.func @transform_6(%arg0: i32, %arg1: i32) -> (i32, i32) {
    %c0_i32 = arith.constant 0 : i32
    %c0_i32_0 = arith.constant 0 : i32
    %c0_i32_1 = arith.constant 0 : i32
    return %c0_i32, %c0_i32_0 : i32, i32
  }
  func.func @transform_7(%arg0: i32, %arg1: i32) -> (i32, i32) {
    %c0_i32 = arith.constant 0 : i32
    %c0_i32_0 = arith.constant 0 : i32
    %c0_i32_1 = arith.constant 0 : i32
    return %c0_i32, %c0_i32_0 : i32, i32
  }
  func.func @transform_8(%arg0: i32, %arg1: i32) -> (i32, i32) {
    %c0_i32 = arith.constant 0 : i32
    %c0_i32_0 = arith.constant 0 : i32
    %c0_i32_1 = arith.constant 0 : i32
    return %c0_i32, %c0_i32_0 : i32, i32
  }
  func.func @transform_9(%arg0: i32, %arg1: i32) -> (i32, i32) {
    %c0_i32 = arith.constant 0 : i32
    %c0_i32_0 = arith.constant 0 : i32
    %c0_i32_1 = arith.constant 0 : i32
    return %c0_i32, %c0_i32_0 : i32, i32
  }
  func.func @transform_10(%arg0: i32, %arg1: i32) -> (i32, i32, i32) {
    %c0_i32 = arith.constant 0 : i32
    %c0_i32_0 = arith.constant 0 : i32
    return %arg0, %arg1, %c0_i32 : i32, i32, i32
  }
}

</mosaic_0001>

<llo_original>
// kernel: cluster_block_forward.4
$region0: #{cluster_block_forward.4}
  #allocation0 [shape = 'u32[]', space=smem, size = 0x4, offset = 0x4, fixed_abs, tag = 'smem constant byte address 0x4 - core index']
  #allocation1 [shape = 'u32[144,128]{1,0:T(1,128)}', space=vmem, size = 0x12000, scoped, tag = 'internal scratch']
  %s0 = inlined_call_operand.vmem [shape: f32[2,64,16], index: 0, kind: input, shape index: {}]
  %s1 = inlined_call_operand.vmem [shape: f32[2,1,1], index: 1, kind: output, shape index: {0}]
  %s2 = inlined_call_operand.vmem [shape: f32[2,1,1], index: 2, kind: output, shape index: {1}]
  %3 = xla_tuple %s1, %s2
  %s4 = sld [smem:[#allocation0]]
  $region45: #{cluster_block_forward.4} parent=0
    _
  %s6 = ssub.s32 1, %s4
  %s7 = scalar_select 0, %s6, %s4
  loop: start=0, step=1, limit=4
  $region2: #{cluster_block_forward.4} parent=0 // loop_pre_header
    _
  $region3: #{cluster_block_forward.4} parent=0 // loop_header
    %s9 = sphi 0, %s13
    %p10 = scmp.ge.s32.totalorder %s9, 4
    %s19 = sphi 0, %s21
    %s22 = sphi 0, %s19
    %s23 = sphi 0, %s22
    %s39 = sphi 0, %s23
    %s45 = sphi 0, %s47
    %s48 = sphi 0, %s45
    %s49 = sphi 0, %s48
    %s65 = sphi 0, %s49
    %s71 = sphi 0, %s73
    %s74 = sphi 0, %s71
    %s75 = sphi 0, %s74
    %s91 = sphi 0, %s75
  $region4: #{cluster_block_forward.4} parent=0 // loop_header_branch
    %12 = sbr.rel (%p10) target = $region8
  $region5: #{cluster_block_forward.4} parent=0 // loop_body
    %s14 = ssub.s32 %s9, 1
    %s15 = ssub.s32 %s9, 2
    %s16 = sadd.s32 %s9, 1
    %s17 = ssub.s32 %s9, %s16
    %p18 = scmp.eq.s32.totalorder %s17, 0
    %s20 = sadd.s32 %s19, 1
    %s21 = scalar_select %p18, %s19, %s20
    %p24 = pneg %p18
    %p25 = scmp.eq.s32.totalorder %s9, 1
    %p26 = por %p24, %p25
    %p27 = scmp.ne.s32.totalorder %s19, %s22
    %p28 = scmp.eq.s32.totalorder %s9, 0
    %p29 = por %p27, %p28
    %p30 = scmp.ne.s32.totalorder %s19, %s22
    %p31 = scmp.eq.s32.totalorder %s14, 1
    %p32 = por %p30, %p31
    %p33 = scmp.ne.s32.totalorder %s22, %s23
    %p34 = scmp.eq.s32.totalorder %s14, 0
    %p35 = por %p33, %p34
    %p36 = scmp.ne.s32.totalorder %s22, %s23
    %p37 = scmp.eq.s32.totalorder %s15, 1
    %p38 = por %p36, %p37
    %p40 = scmp.ne.s32.totalorder %s23, %s39
    %p41 = scmp.eq.s32.totalorder %s15, 0
    %p42 = por %p40, %p41
    %s43 = ssub.s32 %s9, %s16
    %p44 = scmp.eq.s32.totalorder %s43, 0
    %s46 = sadd.s32 %s45, 1
    %s47 = scalar_select %p44, %s45, %s46
    %p50 = pneg %p44
    %p51 = scmp.eq.s32.totalorder %s9, 1
    %p52 = por %p50, %p51
    %p53 = scmp.ne.s32.totalorder %s45, %s48
    %p54 = scmp.eq.s32.totalorder %s9, 0
    %p55 = por %p53, %p54
    %p56 = scmp.ne.s32.totalorder %s45, %s48
    %p57 = scmp.eq.s32.totalorder %s14, 1
    %p58 = por %p56, %p57
    %p59 = scmp.ne.s32.totalorder %s48, %s49
    %p60 = scmp.eq.s32.totalorder %s14, 0
    %p61 = por %p59, %p60
    %p62 = scmp.ne.s32.totalorder %s48, %s49
    %p63 = scmp.eq.s32.totalorder %s15, 1
    %p64 = por %p62, %p63
    %p66 = scmp.ne.s32.totalorder %s49, %s65
    %p67 = scmp.eq.s32.totalorder %s15, 0
    %p68 = por %p66, %p67
    %s69 = ssub.s32 %s9, %s16
    %p70 = scmp.eq.s32.totalorder %s69, 0
    %s72 = sadd.s32 %s71, 1
    %s73 = scalar_select %p70, %s71, %s72
    %p76 = pneg %p70
    %p77 = scmp.eq.s32.totalorder %s9, 1
    %p78 = por %p76, %p77
    %p79 = scmp.ne.s32.totalorder %s71, %s74
    %p80 = scmp.eq.s32.totalorder %s9, 0
    %p81 = por %p79, %p80
    %p82 = scmp.ne.s32.totalorder %s71, %s74
    %p83 = scmp.eq.s32.totalorder %s14, 1
    %p84 = por %p82, %p83
    %p85 = scmp.ne.s32.totalorder %s74, %s75
    %p86 = scmp.eq.s32.totalorder %s14, 0
    %p87 = por %p85, %p86
    %p88 = scmp.ne.s32.totalorder %s74, %s75
    %p89 = scmp.eq.s32.totalorder %s15, 1
    %p90 = por %p88, %p89
    %p92 = scmp.ne.s32.totalorder %s75, %s91
    %p93 = scmp.eq.s32.totalorder %s15, 0
    %p94 = por %p92, %p93
    %p95 = scmp.le.s32.totalorder 1, %s9
    %p96 = scmp.lt.s32.totalorder %s9, 3
    %p97 = pnand %p95, %p96
    %p98 = pneg %p97
    // Predicated region
    $region9: #{cluster_block_forward.4} parent=5 // pred_check
      _
    $region10: #{cluster_block_forward.4} parent=5 // pred_check_branch
      %100 = sbr.rel (%p97) target = $region12
    $region11: #{cluster_block_forward.4} parent=5 // pred_region
      %s101 = ssub.s32 %s9, 1
    $region12: #{cluster_block_forward.4} parent=5 // pred_fallthru
      _
    %p102 = scmp.lt.s32.totalorder %s9, 2
    // Predicated region
    $region13: #{cluster_block_forward.4} parent=5 // pred_check
      %p103 = pneg %p102
    $region14: #{cluster_block_forward.4} parent=5 // pred_check_branch
      %105 = sbr.rel (%p103) target = $region16
    $region15: #{cluster_block_forward.4} parent=5 // pred_region
      // Predicated region
      $region17: #{cluster_block_forward.4} parent=15 // pred_check
        %p106 = pneg %p29
      $region18: #{cluster_block_forward.4} parent=15 // pred_check_branch
        %108 = sbr.rel (%p106) target = $region20
      $region19: #{cluster_block_forward.4} parent=15 // pred_region
        %p109 = scmp.lt.s32.totalorder %s9, 1
        %s110 = scalar_select %p109, %s9, 1
        %s111 = smul.addr %s110, 8
        %s112 = smul.addr %s111, 8
        %s113 = scalar_lea.vmem %s0, %s112
      $region20: #{cluster_block_forward.4} parent=15 // pred_fallthru
        _
    $region16: #{cluster_block_forward.4} parent=5 // pred_fallthru
      _
    %p114 = scmp.le.s32.totalorder 1, %s9
    %p115 = scmp.lt.s32.totalorder %s9, 3
    %p116 = pnand %p114, %p115
    %p117 = pneg %p116
    // Predicated region
    $region21: #{cluster_block_forward.4} parent=5 // pred_check
      _
    $region22: #{cluster_block_forward.4} parent=5 // pred_check_branch
      %119 = sbr.rel (%p116) target = $region24
    $region23: #{cluster_block_forward.4} parent=5 // pred_region
      %s120 = ssub.s32 %s9, 1
      %p121 = scmp.lt.s32.totalorder %s14, 1
      %s122 = scalar_select %p121, %s14, 1
      %s123 = smul.addr %s122, 8
      %s124 = smul.addr %s123, 8
      %s125 = scalar_lea.vmem %s0, %s124
      %p126 = pneg %p35
      %p127 = pneg %p32
      %p128 = pneg %p61
      %p129 = pneg %p58
      %p130 = scmp.lt.s32.totalorder %s14, 1
      %s131 = scalar_select %p130, %s14, 1
      %s132 = scalar_lea.vmem %s1, %s131
      %p133 = pneg %p87
      %p134 = pneg %p84
      %p135 = scmp.lt.s32.totalorder %s14, 1
      %s136 = scalar_select %p135, %s14, 1
      %s137 = scalar_lea.vmem %s2, %s136
      %p138 = scmp.lt.s32.totalorder %s14, 1
      %s139 = scalar_select %p138, %s14, 1
      %s140 = smul.addr %s139, 8
      %s141 = smul.addr %s140, 8
      %s142 = scalar_lea.vmem %s0, %s141
      %p143 = scmp.lt.s32.totalorder %s14, 1
      %s144 = scalar_select %p143, %s14, 1
      %s145 = scalar_lea.vmem %s1, %s144
      %p146 = scmp.lt.s32.totalorder %s14, 1
      %s147 = scalar_select %p146, %s14, 1
      %s148 = scalar_lea.vmem %s2, %s147
      %v149 = vld [vmem:[%s142] sm:$0xff]
      %v150 = vld [vmem:[%s142 + $0x8] sm:$0xff]
      %v151 = vld [vmem:[%s142 + $0x10] sm:$0xff]
      %v152 = vld [vmem:[%s142 + $0x18] sm:$0xff]
      %v153 = vld [vmem:[%s142 + $0x20] sm:$0xff]
      %v154 = vld [vmem:[%s142 + $0x28] sm:$0xff]
      %v155 = vld [vmem:[%s142 + $0x30] sm:$0xff]
      %v156 = vld [vmem:[%s142 + $0x38] sm:$0xff]
      %vm157 = vcmask 130048
      %v158 = vsel %vm157, %v149, 0.0
      %v159 = vsel %vm157, %v150, 0.0
      %v160 = vadd.f32 %v158, %v159
      %v161 = vsel %vm157, %v151, 0.0
      %v162 = vadd.f32 %v160, %v161
      %v163 = vsel %vm157, %v152, 0.0
      %v164 = vadd.f32 %v162, %v163
      %v165 = vsel %vm157, %v153, 0.0
      %v166 = vadd.f32 %v164, %v165
      %v167 = vsel %vm157, %v154, 0.0
      %v168 = vadd.f32 %v166, %v167
      %v169 = vsel %vm157, %v155, 0.0
      %v170 = vadd.f32 %v168, %v169
      %v171 = vsel %vm157, %v156, 0.0
      %v172 = vadd.f32 %v170, %v171
      %173 = vadd.xlane.f32.xlu0 %v172
      %v174 = vpop.xlane.xlu0 %173
      %v175 = vrot.slane %v174, 4
      %v176 = vadd.f32 %v174, %v175
      %v177 = vrot.slane %v176, 2
      %v178 = vadd.f32 %v176, %v177
      %v179 = vrot.slane %v178, 1
      %v180 = vadd.f32 %v178, %v179
      %s181 = vtos %v180
      %s182 = smul.f32 %s181, 0.0009765625
      %v183 = vmul.f32 %v149, %v149
      %v184 = vmul.f32 %v150, %v150
      %v185 = vmul.f32 %v151, %v151
      %v186 = vmul.f32 %v152, %v152
      %v187 = vmul.f32 %v153, %v153
      %v188 = vmul.f32 %v154, %v154
      %v189 = vmul.f32 %v155, %v155
      %v190 = vmul.f32 %v156, %v156
      %v191 = vsel %vm157, %v183, 0.0
      %v192 = vsel %vm157, %v184, 0.0
      %v193 = vadd.f32 %v191, %v192
      %v194 = vsel %vm157, %v185, 0.0
      %v195 = vadd.f32 %v193, %v194
      %v196 = vsel %vm157, %v186, 0.0
      %v197 = vadd.f32 %v195, %v196
      %v198 = vsel %vm157, %v187, 0.0
      %v199 = vadd.f32 %v197, %v198
      %v200 = vsel %vm157, %v188, 0.0
      %v201 = vadd.f32 %v199, %v200
      %v202 = vsel %vm157, %v189, 0.0
      %v203 = vadd.f32 %v201, %v202
      %v204 = vsel %vm157, %v190, 0.0
      %v205 = vadd.f32 %v203, %v204
      %206 = vadd.xlane.f32.xlu0 %v205
      %v207 = vpop.xlane.xlu0 %206
      %v208 = vrot.slane %v207, 4
      %v209 = vadd.f32 %v207, %v208
      %v210 = vrot.slane %v209, 2
      %v211 = vadd.f32 %v209, %v210
      %v212 = vrot.slane %v211, 1
      %v213 = vadd.f32 %v211, %v212
      %s214 = vtos %v213
      %s215 = smul.f32 %s214, 0.0009765625
      %s216 = smul.f32 %s182, %s182
      %s217 = ssub.f32 %s215, %s216
      %s218 = sadd.f32 %s217, 1e-05
      %v219 = vstv %s218
      %v220 = vrsqrt.pop %v219
      %s221 = vtos %v220
      %v222 = vstv %s182
      %vm223 = vcmask 0
      %224 = vst.msk [vmem:[%s145] sm:$0x1] %vm223, %v222
      %v225 = vstv %s221
      %226 = vst.msk [vmem:[%s148] sm:$0x1] %vm223, %v225
      %p227 = scmp.lt.s32.totalorder %s14, 1
      %s228 = scalar_select %p227, %s14, 1
      %s229 = scalar_lea.vmem %s1, %s228
      %p230 = scmp.lt.s32.totalorder %s14, 1
      %s231 = scalar_select %p230, %s14, 1
      %s232 = scalar_lea.vmem %s2, %s231
      // Predicated region
      $region25: #{cluster_block_forward.4} parent=23 // pred_check
        %p233 = pneg %p58
      $region26: #{cluster_block_forward.4} parent=23 // pred_check_branch
        %235 = sbr.rel (%p233) target = $region28
      $region27: #{cluster_block_forward.4} parent=23 // pred_region
        _
      $region28: #{cluster_block_forward.4} parent=23 // pred_fallthru
        _
      // Predicated region
      $region29: #{cluster_block_forward.4} parent=23 // pred_check
        %p236 = pneg %p84
      $region30: #{cluster_block_forward.4} parent=23 // pred_check_branch
        %238 = sbr.rel (%p236) target = $region32
      $region31: #{cluster_block_forward.4} parent=23 // pred_region
        _
      $region32: #{cluster_block_forward.4} parent=23 // pred_fallthru
        _
    $region24: #{cluster_block_forward.4} parent=5 // pred_fallthru
      _
    %p239 = scmp.le.s32.totalorder 2, %s9
    // Predicated region
    $region33: #{cluster_block_forward.4} parent=5 // pred_check
      %p240 = pneg %p239
    $region34: #{cluster_block_forward.4} parent=5 // pred_check_branch
      %242 = sbr.rel (%p240) target = $region36
    $region35: #{cluster_block_forward.4} parent=5 // pred_region
      %s243 = ssub.s32 %s9, 2
      // Predicated region
      $region37: #{cluster_block_forward.4} parent=35 // pred_check
        %p244 = pneg %p64
      $region38: #{cluster_block_forward.4} parent=35 // pred_check_branch
        %246 = sbr.rel (%p244) target = $region40
      $region39: #{cluster_block_forward.4} parent=35 // pred_region
        %p247 = scmp.lt.s32.totalorder %s15, 1
        %s248 = scalar_select %p247, %s15, 1
        %s249 = scalar_lea.vmem %s1, %s248
      $region40: #{cluster_block_forward.4} parent=35 // pred_fallthru
        _
      // Predicated region
      $region41: #{cluster_block_forward.4} parent=35 // pred_check
        %p250 = pneg %p90
      $region42: #{cluster_block_forward.4} parent=35 // pred_check_branch
        %252 = sbr.rel (%p250) target = $region44
      $region43: #{cluster_block_forward.4} parent=35 // pred_region
        %p253 = scmp.lt.s32.totalorder %s15, 1
        %s254 = scalar_select %p253, %s15, 1
        %s255 = scalar_lea.vmem %s2, %s254
      $region44: #{cluster_block_forward.4} parent=35 // pred_fallthru
        _
    $region36: #{cluster_block_forward.4} parent=5 // pred_fallthru
      _
  $region6: #{cluster_block_forward.4} parent=0 // loop_footer
    %s13 = sadd.s32 1, %s9
  $region7: #{cluster_block_forward.4} parent=0 // loop_footer_branch
    %8 = sbr.rel target = $region3
  $region8: #{cluster_block_forward.4} parent=0 // loop_exit
    _

// kernel: cluster_block_forward.5
$region0: #{cluster_block_forward.5}
  #allocation0 [shape = 'u32[]', space=smem, size = 0x4, offset = 0x4, fixed_abs, tag = 'smem constant byte address 0x4 - core index']
  #allocation1 [shape = 'u32[144,128]{1,0:T(1,128)}', space=vmem, size = 0x12000, scoped, tag = 'internal scratch']
  %s0 = inlined_call_operand.vmem [shape: f32[2,64,16], index: 0, kind: input, shape index: {}]
  %s1 = inlined_call_operand.vmem [shape: f32[2,1,1], index: 1, kind: input, shape index: {}]
  %s2 = inlined_call_operand.vmem [shape: f32[2,1,1], index: 2, kind: input, shape index: {}]
  %s3 = inlined_call_operand.vmem [shape: f32[1,16], index: 3, kind: input, shape index: {}]
  %s4 = inlined_call_operand.vmem [shape: f32[1,16], index: 4, kind: input, shape index: {}]
  %s5 = inlined_call_operand.vmem [shape: f32[16,64], index: 5, kind: input, shape index: {}]
  %s6 = inlined_call_operand.vmem [shape: f32[1,64], index: 6, kind: input, shape index: {}]
  %s7 = inlined_call_operand.vmem [shape: f32[64,16], index: 7, kind: input, shape index: {}]
  %s8 = inlined_call_operand.vmem [shape: f32[1,16], index: 8, kind: input, shape index: {}]
  %s9 = inlined_call_operand.vmem [shape: f32[1,16], index: 9, kind: input, shape index: {}]
  %s10 = inlined_call_operand.hbm [shape: f32[2,64,16], index: 10, kind: output, shape index: {}]
  %s11 = sld [smem:[#allocation0]]
  $region73: #{cluster_block_forward.5} parent=0
    _
  %s13 = ssub.s32 1, %s11
  %s14 = scalar_select 0, %s13, %s11
  $region1: #{cluster_block_forward.5} parent=0
    #allocation2 [shape = 'u8[65536]{0}', space=vmem, size = 0x10000, scoped, tag = 'output window, operand 0']
    #allocation3 [shape = 's32[2]{0}', space=sflag, size = 0x8, scoped, tag = 'scoped memory for cluster_block_forward.5']
    %15 = vsyncpa [#allocation3], 0
    %s16 = scalar_lea.sflag [#allocation3], 1
    %17 = vsyncpa %s16, 0
    loop: start=0, step=1, limit=4
    $region2: #{cluster_block_forward.5} parent=1 // loop_pre_header
      _
    $region3: #{cluster_block_forward.5} parent=1 // loop_header
      %s19 = sphi 0, %s23
      %p20 = scmp.ge.s32.totalorder %s19, 4
      %s26 = sphi 0, %s38
      %s27 = sphi 0, %s34
      %s28 = sphi 0, %s26
      %s29 = sphi 0, %s27
      %s30 = sphi 0, %s28
      %s31 = sphi 0, %s29
      %s43 = sphi 0, %s45
      %s46 = sphi 0, %s43
      %s47 = sphi 0, %s46
      %s63 = sphi 0, %s47
      %s69 = sphi 0, %s71
      %s72 = sphi 0, %s69
      %s73 = sphi 0, %s72
      %s89 = sphi 0, %s73
      %s95 = sphi 0, %s97
      %s98 = sphi 0, %s95
      %s99 = sphi 0, %s98
      %s115 = sphi 0, %s99
      %s119 = sphi 0, %s119
      %s121 = sphi 0, %s119
      %s122 = sphi 0, %s121
      %s136 = sphi 0, %s122
      %s140 = sphi 0, %s140
      %s142 = sphi 0, %s140
      %s143 = sphi 0, %s142
      %s157 = sphi 0, %s143
      %s161 = sphi 0, %s161
      %s163 = sphi 0, %s161
      %s164 = sphi 0, %s163
      %s178 = sphi 0, %s164
      %s182 = sphi 0, %s182
      %s184 = sphi 0, %s182
      %s185 = sphi 0, %s184
      %s199 = sphi 0, %s185
      %s203 = sphi 0, %s203
      %s205 = sphi 0, %s203
      %s206 = sphi 0, %s205
      %s220 = sphi 0, %s206
      %s224 = sphi 0, %s224
      %s226 = sphi 0, %s224
      %s227 = sphi 0, %s226
      %s241 = sphi 0, %s227
      %s245 = sphi 0, %s245
      %s247 = sphi 0, %s245
      %s248 = sphi 0, %s247
      %s262 = sphi 0, %s248
      %s270 = sphi 0, %s272
      %s273 = sphi 0, %s270
      %s274 = sphi 0, %s273
      %s290 = sphi 0, %s274
    $region4: #{cluster_block_forward.5} parent=1 // loop_header_branch
      %22 = sbr.rel (%p20) target = $region8
    $region5: #{cluster_block_forward.5} parent=1 // loop_body
      %s24 = ssub.s32 %s19, 1
      %s25 = ssub.s32 %s19, 2
      %s32 = sadd.s32 1, %s27
      %p33 = scmp.ge.s32.totalorder %s32, 1
      %s34 = scalar_select %p33, 0, %s32
      %s35 = sadd.s32 1, %s26
      %s36 = scalar_select %p33, %s35, %s26
      %p37 = scmp.ge.s32.totalorder %s36, 2
      %s38 = scalar_select %p37, 0, %s36
      %s39 = ssub.s32 %s26, %s38
      %s40 = ssub.s32 %s27, %s34
      %s41 = sor.u32 %s39, %s40
      %p42 = scmp.eq.s32.totalorder %s41, 0
      %s44 = sadd.s32 %s43, 1
      %s45 = scalar_select %p42, %s43, %s44
      %p48 = pneg %p42
      %p49 = scmp.eq.s32.totalorder %s19, 1
      %p50 = por %p48, %p49
      %p51 = scmp.ne.s32.totalorder %s43, %s46
      %p52 = scmp.eq.s32.totalorder %s19, 0
      %p53 = por %p51, %p52
      %p54 = scmp.ne.s32.totalorder %s43, %s46
      %p55 = scmp.eq.s32.totalorder %s24, 1
      %p56 = por %p54, %p55
      %p57 = scmp.ne.s32.totalorder %s46, %s47
      %p58 = scmp.eq.s32.totalorder %s24, 0
      %p59 = por %p57, %p58
      %p60 = scmp.ne.s32.totalorder %s46, %s47
      %p61 = scmp.eq.s32.totalorder %s25, 1
      %p62 = por %p60, %p61
      %p64 = scmp.ne.s32.totalorder %s47, %s63
      %p65 = scmp.eq.s32.totalorder %s25, 0
      %p66 = por %p64, %p65
      %s67 = ssub.s32 %s26, %s38
      %p68 = scmp.eq.s32.totalorder %s67, 0
      %s70 = sadd.s32 %s69, 1
      %s71 = scalar_select %p68, %s69, %s70
      %p74 = pneg %p68
      %p75 = scmp.eq.s32.totalorder %s19, 1
      %p76 = por %p74, %p75
      %p77 = scmp.ne.s32.totalorder %s69, %s72
      %p78 = scmp.eq.s32.totalorder %s19, 0
      %p79 = por %p77, %p78
      %p80 = scmp.ne.s32.totalorder %s69, %s72
      %p81 = scmp.eq.s32.totalorder %s24, 1
      %p82 = por %p80, %p81
      %p83 = scmp.ne.s32.totalorder %s72, %s73
      %p84 = scmp.eq.s32.totalorder %s24, 0
      %p85 = por %p83, %p84
      %p86 = scmp.ne.s32.totalorder %s72, %s73
      %p87 = scmp.eq.s32.totalorder %s25, 1
      %p88 = por %p86, %p87
      %p90 = scmp.ne.s32.totalorder %s73, %s89
      %p91 = scmp.eq.s32.totalorder %s25, 0
      %p92 = por %p90, %p91
      %s93 = ssub.s32 %s26, %s38
      %p94 = scmp.eq.s32.totalorder %s93, 0
      %s96 = sadd.s32 %s95, 1
      %s97 = scalar_select %p94, %s95, %s96
      %p100 = pneg %p94
      %p101 = scmp.eq.s32.totalorder %s19, 1
      %p102 = por %p100, %p101
      %p103 = scmp.ne.s32.totalorder %s95, %s98
      %p104 = scmp.eq.s32.totalorder %s19, 0
      %p105 = por %p103, %p104
      %p106 = scmp.ne.s32.totalorder %s95, %s98
      %p107 = scmp.eq.s32.totalorder %s24, 1
      %p108 = por %p106, %p107
      %p109 = scmp.ne.s32.totalorder %s98, %s99
      %p110 = scmp.eq.s32.totalorder %s24, 0
      %p111 = por %p109, %p110
      %p112 = scmp.ne.s32.totalorder %s98, %s99
      %p113 = scmp.eq.s32.totalorder %s25, 1
      %p114 = por %p112, %p113
      %p116 = scmp.ne.s32.totalorder %s99, %s115
      %p117 = scmp.eq.s32.totalorder %s25, 0
      %p118 = por %p116, %p117
      %s120 = sadd.s32 %s119, 1
      %p123 = scmp.eq.s32.totalorder %s19, 1
      %p124 = scmp.ne.s32.totalorder %s119, %s121
      %p125 = scmp.eq.s32.totalorder %s19, 0
      %p126 = por %p124, %p125
      %p127 = scmp.ne.s32.totalorder %s119, %s121
      %p128 = scmp.eq.s32.totalorder %s24, 1
      %p129 = por %p127, %p128
      %p130 = scmp.ne.s32.totalorder %s121, %s122
      %p131 = scmp.eq.s32.totalorder %s24, 0
      %p132 = por %p130, %p131
      %p133 = scmp.ne.s32.totalorder %s121, %s122
      %p134 = scmp.eq.s32.totalorder %s25, 1
      %p135 = por %p133, %p134
      %p137 = scmp.ne.s32.totalorder %s122, %s136
      %p138 = scmp.eq.s32.totalorder %s25, 0
      %p139 = por %p137, %p138
      %s141 = sadd.s32 %s140, 1
      %p144 = scmp.eq.s32.totalorder %s19, 1
      %p145 = scmp.ne.s32.totalorder %s140, %s142
      %p146 = scmp.eq.s32.totalorder %s19, 0
      %p147 = por %p145, %p146
      %p148 = scmp.ne.s32.totalorder %s140, %s142
      %p149 = scmp.eq.s32.totalorder %s24, 1
      %p150 = por %p148, %p149
      %p151 = scmp.ne.s32.totalorder %s142, %s143
      %p152 = scmp.eq.s32.totalorder %s24, 0
      %p153 = por %p151, %p152
      %p154 = scmp.ne.s32.totalorder %s142, %s143
      %p155 = scmp.eq.s32.totalorder %s25, 1
      %p156 = por %p154, %p155
      %p158 = scmp.ne.s32.totalorder %s143, %s157
      %p159 = scmp.eq.s32.totalorder %s25, 0
      %p160 = por %p158, %p159
      %s162 = sadd.s32 %s161, 1
      %p165 = scmp.eq.s32.totalorder %s19, 1
      %p166 = scmp.ne.s32.totalorder %s161, %s163
      %p167 = scmp.eq.s32.totalorder %s19, 0
      %p168 = por %p166, %p167
      %p169 = scmp.ne.s32.totalorder %s161, %s163
      %p170 = scmp.eq.s32.totalorder %s24, 1
      %p171 = por %p169, %p170
      %p172 = scmp.ne.s32.totalorder %s163, %s164
      %p173 = scmp.eq.s32.totalorder %s24, 0
      %p174 = por %p172, %p173
      %p175 = scmp.ne.s32.totalorder %s163, %s164
      %p176 = scmp.eq.s32.totalorder %s25, 1
      %p177 = por %p175, %p176
      %p179 = scmp.ne.s32.totalorder %s164, %s178
      %p180 = scmp.eq.s32.totalorder %s25, 0
      %p181 = por %p179, %p180
      %s183 = sadd.s32 %s182, 1
      %p186 = scmp.eq.s32.totalorder %s19, 1
      %p187 = scmp.ne.s32.totalorder %s182, %s184
      %p188 = scmp.eq.s32.totalorder %s19, 0
      %p189 = por %p187, %p188
      %p190 = scmp.ne.s32.totalorder %s182, %s184
      %p191 = scmp.eq.s32.totalorder %s24, 1
      %p192 = por %p190, %p191
      %p193 = scmp.ne.s32.totalorder %s184, %s185
      %p194 = scmp.eq.s32.totalorder %s24, 0
      %p195 = por %p193, %p194
      %p196 = scmp.ne.s32.totalorder %s184, %s185
      %p197 = scmp.eq.s32.totalorder %s25, 1
      %p198 = por %p196, %p197
      %p200 = scmp.ne.s32.totalorder %s185, %s199
      %p201 = scmp.eq.s32.totalorder %s25, 0
      %p202 = por %p200, %p201
      %s204 = sadd.s32 %s203, 1
      %p207 = scmp.eq.s32.totalorder %s19, 1
      %p208 = scmp.ne.s32.totalorder %s203, %s205
      %p209 = scmp.eq.s32.totalorder %s19, 0
      %p210 = por %p208, %p209
      %p211 = scmp.ne.s32.totalorder %s203, %s205
      %p212 = scmp.eq.s32.totalorder %s24, 1
      %p213 = por %p211, %p212
      %p214 = scmp.ne.s32.totalorder %s205, %s206
      %p215 = scmp.eq.s32.totalorder %s24, 0
      %p216 = por %p214, %p215
      %p217 = scmp.ne.s32.totalorder %s205, %s206
      %p218 = scmp.eq.s32.totalorder %s25, 1
      %p219 = por %p217, %p218
      %p221 = scmp.ne.s32.totalorder %s206, %s220
      %p222 = scmp.eq.s32.totalorder %s25, 0
      %p223 = por %p221, %p222
      %s225 = sadd.s32 %s224, 1
      %p228 = scmp.eq.s32.totalorder %s19, 1
      %p229 = scmp.ne.s32.totalorder %s224, %s226
      %p230 = scmp.eq.s32.totalorder %s19, 0
      %p231 = por %p229, %p230
      %p232 = scmp.ne.s32.totalorder %s224, %s226
      %p233 = scmp.eq.s32.totalorder %s24, 1
      %p234 = por %p232, %p233
      %p235 = scmp.ne.s32.totalorder %s226, %s227
      %p236 = scmp.eq.s32.totalorder %s24, 0
      %p237 = por %p235, %p236
      %p238 = scmp.ne.s32.totalorder %s226, %s227
      %p239 = scmp.eq.s32.totalorder %s25, 1
      %p240 = por %p238, %p239
      %p242 = scmp.ne.s32.totalorder %s227, %s241
      %p243 = scmp.eq.s32.totalorder %s25, 0
      %p244 = por %p242, %p243
      %s246 = sadd.s32 %s245, 1
      %p249 = scmp.eq.s32.totalorder %s19, 1
      %p250 = scmp.ne.s32.totalorder %s245, %s247
      %p251 = scmp.eq.s32.totalorder %s19, 0
      %p252 = por %p250, %p251
      %p253 = scmp.ne.s32.totalorder %s245, %s247
      %p254 = scmp.eq.s32.totalorder %s24, 1
      %p255 = por %p253, %p254
      %p256 = scmp.ne.s32.totalorder %s247, %s248
      %p257 = scmp.eq.s32.totalorder %s24, 0
      %p258 = por %p256, %p257
      %p259 = scmp.ne.s32.totalorder %s247, %s248
      %p260 = scmp.eq.s32.totalorder %s25, 1
      %p261 = por %p259, %p260
      %p263 = scmp.ne.s32.totalorder %s248, %s262
      %p264 = scmp.eq.s32.totalorder %s25, 0
      %p265 = por %p263, %p264
      %s266 = ssub.s32 %s26, %s38
      %s267 = ssub.s32 %s27, %s34
      %s268 = sor.u32 %s266, %s267
      %p269 = scmp.eq.s32.totalorder %s268, 0
      %s271 = sadd.s32 %s270, 1
      %s272 = scalar_select %p269, %s270, %s271
      %p275 = pneg %p269
      %p276 = scmp.eq.s32.totalorder %s19, 1
      %p277 = por %p275, %p276
      %p278 = scmp.ne.s32.totalorder %s270, %s273
      %p279 = scmp.eq.s32.totalorder %s19, 0
      %p280 = por %p278, %p279
      %p281 = scmp.ne.s32.totalorder %s270, %s273
      %p282 = scmp.eq.s32.totalorder %s24, 1
      %p283 = por %p281, %p282
      %p284 = scmp.ne.s32.totalorder %s273, %s274
      %p285 = scmp.eq.s32.totalorder %s24, 0
      %p286 = por %p284, %p285
      %p287 = scmp.ne.s32.totalorder %s273, %s274
      %p288 = scmp.eq.s32.totalorder %s25, 1
      %p289 = por %p287, %p288
      %p291 = scmp.ne.s32.totalorder %s274, %s290
      %p292 = scmp.eq.s32.totalorder %s25, 0
      %p293 = por %p291, %p292
      %p294 = scmp.le.s32.totalorder 1, %s19
      %p295 = scmp.lt.s32.totalorder %s19, 3
      %p296 = pnand %p294, %p295
      %p297 = pneg %p296
      // Predicated region
      $region9: #{cluster_block_forward.5} parent=5 // pred_check
        _
      $region10: #{cluster_block_forward.5} parent=5 // pred_check_branch
        %299 = sbr.rel (%p296) target = $region12
      $region11: #{cluster_block_forward.5} parent=5 // pred_region
        %s300 = ssub.s32 %s19, 1
        // Predicated region
        $region13: #{cluster_block_forward.5} parent=11 // pred_check
          %p301 = pneg %p132
        $region14: #{cluster_block_forward.5} parent=11 // pred_check_branch
          %303 = sbr.rel (%p301) target = $region16
        $region15: #{cluster_block_forward.5} parent=11 // pred_region
          _
        $region16: #{cluster_block_forward.5} parent=11 // pred_fallthru
          _
        // Predicated region
        $region17: #{cluster_block_forward.5} parent=11 // pred_check
          %p304 = pneg %p153
        $region18: #{cluster_block_forward.5} parent=11 // pred_check_branch
          %306 = sbr.rel (%p304) target = $region20
        $region19: #{cluster_block_forward.5} parent=11 // pred_region
          _
        $region20: #{cluster_block_forward.5} parent=11 // pred_fallthru
          _
        // Predicated region
        $region21: #{cluster_block_forward.5} parent=11 // pred_check
          %p307 = pneg %p174
        $region22: #{cluster_block_forward.5} parent=11 // pred_check_branch
          %309 = sbr.rel (%p307) target = $region24
        $region23: #{cluster_block_forward.5} parent=11 // pred_region
          _
        $region24: #{cluster_block_forward.5} parent=11 // pred_fallthru
          _
        // Predicated region
        $region25: #{cluster_block_forward.5} parent=11 // pred_check
          %p310 = pneg %p195
        $region26: #{cluster_block_forward.5} parent=11 // pred_check_branch
          %312 = sbr.rel (%p310) target = $region28
        $region27: #{cluster_block_forward.5} parent=11 // pred_region
          _
        $region28: #{cluster_block_forward.5} parent=11 // pred_fallthru
          _
        // Predicated region
        $region29: #{cluster_block_forward.5} parent=11 // pred_check
          %p313 = pneg %p216
        $region30: #{cluster_block_forward.5} parent=11 // pred_check_branch
          %315 = sbr.rel (%p313) target = $region32
        $region31: #{cluster_block_forward.5} parent=11 // pred_region
          _
        $region32: #{cluster_block_forward.5} parent=11 // pred_fallthru
          _
        // Predicated region
        $region33: #{cluster_block_forward.5} parent=11 // pred_check
          %p316 = pneg %p237
        $region34: #{cluster_block_forward.5} parent=11 // pred_check_branch
          %318 = sbr.rel (%p316) target = $region36
        $region35: #{cluster_block_forward.5} parent=11 // pred_region
          _
        $region36: #{cluster_block_forward.5} parent=11 // pred_fallthru
          _
        // Predicated region
        $region37: #{cluster_block_forward.5} parent=11 // pred_check
          %p319 = pneg %p258
        $region38: #{cluster_block_forward.5} parent=11 // pred_check_branch
          %321 = sbr.rel (%p319) target = $region40
        $region39: #{cluster_block_forward.5} parent=11 // pred_region
          _
        $region40: #{cluster_block_forward.5} parent=11 // pred_fallthru
          _
      $region12: #{cluster_block_forward.5} parent=5 // pred_fallthru
        _
      %p322 = scmp.lt.s32.totalorder %s19, 2
      // Predicated region
      $region41: #{cluster_block_forward.5} parent=5 // pred_check
        %p323 = pneg %p322
      $region42: #{cluster_block_forward.5} parent=5 // pred_check_branch
        %325 = sbr.rel (%p323) target = $region44
      $region43: #{cluster_block_forward.5} parent=5 // pred_region
        // Predicated region
        $region45: #{cluster_block_forward.5} parent=43 // pred_check
          %p326 = pneg %p53
        $region46: #{cluster_block_forward.5} parent=43 // pred_check_branch
          %328 = sbr.rel (%p326) target = $region48
        $region47: #{cluster_block_forward.5} parent=43 // pred_region
          %s329 = smul.u32 8, %s27
          %p330 = scmp.lt.s32.totalorder %s26, 1
          %s331 = scalar_select %p330, %s26, 1
          %p332 = scmp.lt.s32.totalorder %s329, 7
          %s333 = scalar_select %p332, %s329, 7
          %s334 = smul.addr %s331, 8
          %s335 = sadd.s32 %s333, %s334
          %s336 = smul.addr %s335, 8
          %s337 = scalar_lea.vmem %s0, %s336
          %s338 = smul.u32 8, %s27
        $region48: #{cluster_block_forward.5} parent=43 // pred_fallthru
          _
        // Predicated region
        $region49: #{cluster_block_forward.5} parent=43 // pred_check
          %p339 = pneg %p79
        $region50: #{cluster_block_forward.5} parent=43 // pred_check_branch
          %341 = sbr.rel (%p339) target = $region52
        $region51: #{cluster_block_forward.5} parent=43 // pred_region
          %p342 = scmp.lt.s32.totalorder %s26, 1
          %s343 = scalar_select %p342, %s26, 1
          %s344 = scalar_lea.vmem %s1, %s343
        $region52: #{cluster_block_forward.5} parent=43 // pred_fallthru
          _
        // Predicated region
        $region53: #{cluster_block_forward.5} parent=43 // pred_check
          %p345 = pneg %p105
        $region54: #{cluster_block_forward.5} parent=43 // pred_check_branch
          %347 = sbr.rel (%p345) target = $region56
        $region55: #{cluster_block_forward.5} parent=43 // pred_region
          %p348 = scmp.lt.s32.totalorder %s26, 1
          %s349 = scalar_select %p348, %s26, 1
          %s350 = scalar_lea.vmem %s2, %s349
        $region56: #{cluster_block_forward.5} parent=43 // pred_fallthru
          _
      $region44: #{cluster_block_forward.5} parent=5 // pred_fallthru
        _
      %p351 = scmp.le.s32.totalorder 1, %s19
      %p352 = scmp.lt.s32.totalorder %s19, 3
      %p353 = pnand %p351, %p352
      %p354 = pneg %p353
      // Predicated region
      $region57: #{cluster_block_forward.5} parent=5 // pred_check
        _
      $region58: #{cluster_block_forward.5} parent=5 // pred_check_branch
        %356 = sbr.rel (%p353) target = $region60
      $region59: #{cluster_block_forward.5} parent=5 // pred_region
        %s357 = ssub.s32 %s19, 1
        %s358 = smul.u32 8, %s29
        %p359 = scmp.lt.s32.totalorder %s28, 1
        %s360 = scalar_select %p359, %s28, 1
        %p361 = scmp.lt.s32.totalorder %s358, 7
        %s362 = scalar_select %p361, %s358, 7
        %s363 = smul.addr %s360, 8
        %s364 = sadd.s32 %s362, %s363
        %s365 = smul.addr %s364, 8
        %s366 = scalar_lea.vmem %s0, %s365
        %p367 = pneg %p59
        %p368 = pneg %p56
        %p369 = scmp.lt.s32.totalorder %s28, 1
        %s370 = scalar_select %p369, %s28, 1
        %s371 = scalar_lea.vmem %s1, %s370
        %p372 = pneg %p85
        %p373 = pneg %p82
        %p374 = scmp.lt.s32.totalorder %s28, 1
        %s375 = scalar_select %p374, %s28, 1
        %s376 = scalar_lea.vmem %s2, %s375
        %p377 = pneg %p111
        %p378 = pneg %p108
        %p379 = pneg %p132
        %p380 = pneg %p129
        %p381 = pneg %p153
        %p382 = pneg %p150
        %p383 = pneg %p174
        %p384 = pneg %p171
        %p385 = pneg %p195
        %p386 = pneg %p192
        %p387 = pneg %p216
        %p388 = pneg %p213
        %p389 = pneg %p237
        %p390 = pneg %p234
        %p391 = pneg %p258
        %p392 = pneg %p255
        %p393 = pneg %p286
        %p394 = pneg %p283
        %s395 = sand.u32 %s273, 1
        %s396 = scalar_lea.sflag [#allocation3], %s395
        %s397 = sand.u32 %s273, 1
        %s398 = smul.addr %s397, 64
        %s399 = scalar_lea.vmem [#allocation2], %s398
        %s400 = smul.u32 8, %s29
        %p401 = scmp.lt.s32.totalorder %s28, 1
        %s402 = scalar_select %p401, %s28, 1
        %p403 = scmp.lt.s32.totalorder %s400, 7
        %s404 = scalar_select %p403, %s400, 7
        %s405 = smul.addr %s402, 8
        %s406 = sadd.s32 %s404, %s405
        %s407 = smul.addr %s406, 8
        %s408 = scalar_lea.vmem %s0, %s407
        %s409 = smul.u32 8, %s29
        %p410 = scmp.lt.s32.totalorder %s28, 1
        %s411 = scalar_select %p410, %s28, 1
        %s412 = scalar_lea.vmem %s1, %s411
        %p413 = scmp.lt.s32.totalorder %s28, 1
        %s414 = scalar_select %p413, %s28, 1
        %s415 = scalar_lea.vmem %s2, %s414
        %s416 = smul.u32 8, %s29
        %v417 = vld [vmem:[%s408] sm:$0xff]
        %v418 = vld [vmem:[%s408 + $0x8] sm:$0xff]
        %v419 = vld [vmem:[%s408 + $0x10] sm:$0xff]
        %v420 = vld [vmem:[%s408 + $0x18] sm:$0xff]
        %v421 = vld [vmem:[%s408 + $0x20] sm:$0xff]
        %v422 = vld [vmem:[%s408 + $0x28] sm:$0xff]
        %v423 = vld [vmem:[%s408 + $0x30] sm:$0xff]
        %v424 = vld [vmem:[%s408 + $0x38] sm:$0xff]
        %v425 = vld [vmem:[%s412] sm:$0x1]
        %v427 = vlaneseq
        %v428 = vshrl.u32 %v427, 7
        %v429 = vsub.s32 0, %v428
        %v430 = vrot.slane %v425, %v429
        %431 = vset.pattern.permute.xlu0 0
        %432 = vperm.xlu0 %431, %v430
        %v433 = vpop.permute.xlu0 %432
        %v435 = vsub.f32 %v417, %v433
        %v436 = vsub.f32 %v418, %v433
        %v437 = vsub.f32 %v419, %v433
        %v438 = vsub.f32 %v420, %v433
        %v439 = vsub.f32 %v421, %v433
        %v440 = vsub.f32 %v422, %v433
        %v441 = vsub.f32 %v423, %v433
        %v442 = vsub.f32 %v424, %v433
        %v443 = vld [vmem:[%s415] sm:$0x1]
        %v445 = vlaneseq
        %v446 = vshrl.u32 %v445, 7
        %v447 = vsub.s32 0, %v446
        %v448 = vrot.slane %v443, %v447
        %449 = vset.pattern.permute.xlu0 0
        %450 = vperm.xlu0 %449, %v448
        %v451 = vpop.permute.xlu0 %450
        %v453 = vmul.f32 %v435, %v451
        %v454 = vmul.f32 %v436, %v451
        %v455 = vmul.f32 %v437, %v451
        %v456 = vmul.f32 %v438, %v451
        %v457 = vmul.f32 %v439, %v451
        %v458 = vmul.f32 %v440, %v451
        %v459 = vmul.f32 %v441, %v451
        %v460 = vmul.f32 %v442, %v451
        %v461 = vld [vmem:[%s3] sm:$0x1]
        %v463 = vlaneseq
        %v464 = vshrl.u32 %v463, 7
        %v465 = vsub.s32 0, %v464
        %v466 = vrot.slane %v461, %v465
        %v468 = vmul.f32 %v453, %v466
        %v469 = vmul.f32 %v454, %v466
        %v470 = vmul.f32 %v455, %v466
        %v471 = vmul.f32 %v456, %v466
        %v472 = vmul.f32 %v457, %v466
        %v473 = vmul.f32 %v458, %v466
        %v474 = vmul.f32 %v459, %v466
        %v475 = vmul.f32 %v460, %v466
        %v476 = vld [vmem:[%s4] sm:$0x1]
        %v478 = vlaneseq
        %v479 = vshrl.u32 %v478, 7
        %v480 = vsub.s32 0, %v479
        %v481 = vrot.slane %v476, %v480
        %v483 = vadd.f32 %v468, %v481
        %v484 = vadd.f32 %v469, %v481
        %v485 = vadd.f32 %v470, %v481
        %v486 = vadd.f32 %v471, %v481
        %v487 = vadd.f32 %v472, %v481
        %v488 = vadd.f32 %v473, %v481
        %v489 = vadd.f32 %v474, %v481
        %v490 = vadd.f32 %v475, %v481
        %v491 = vld [vmem:[%s5] sm:$0xff]
        %v492 = vld [vmem:[%s5 + $0x8] sm:$0xff]
        %v493 = vld [vmem:[%s6] sm:$0x1]
        %v495 = vlaneseq
        %v496 = vshrl.u32 %v495, 7
        %v497 = vsub.s32 0, %v496
        %v498 = vrot.slane %v493, %v497
        %vm500 = vcmask 130048
        %v502 = vsel %vm500, %v483, 0
        %v505 = vsel %vm500, %v484, 0
        %v508 = vsel %vm500, %v485, 0
        %v511 = vsel %vm500, %v486, 0
        %v514 = vsel %vm500, %v487, 0
        %v517 = vsel %vm500, %v488, 0
        %v520 = vsel %vm500, %v489, 0
        %v523 = vsel %vm500, %v490, 0
        %525 = vmatprep.subr.mxu0 0.0
        %526 = vmatpush1.msra.mxu0 0.0
        %527 = vmatprep.subr.mxu0 0.0
        %528 = vmatpush1.msra.mxu0 0.0
        %529 = vmatprep.subr.mxu0 0.0
        %530 = vmatpush1.msra.mxu0 0.0
        %531 = vmatprep.subr.mxu0 0.0
        %532 = vmatpush1.msra.mxu0 0.0
        %533 = vmatprep.subr.mxu0 0.0
        %534 = vmatpush1.msra.mxu0 0.0
        %535 = vmatprep.subr.mxu0 0.0
        %536 = vmatpush1.msra.mxu0 0.0
        %537 = vmatprep.subr.mxu0 0.0
        %538 = vmatpush1.msra.mxu0 0.0
        %539 = vmatprep.subr.mxu0 0.0
        %540 = vmatpush1.msra.mxu0 0.0
        %541 = vmatprep.subr.mxu0 0.0
        %542 = vmatpush1.msra.mxu0 0.0
        %543 = vmatprep.subr.mxu0 0.0
        %544 = vmatpush1.msra.mxu0 0.0
        %545 = vmatprep.subr.mxu0 0.0
        %546 = vmatpush1.msra.mxu0 0.0
        %547 = vmatprep.subr.mxu0 0.0
        %548 = vmatpush1.msra.mxu0 0.0
        %549 = vmatprep.subr.mxu0 0.0
        %550 = vmatpush1.msra.mxu0 0.0
        %551 = vmatprep.subr.mxu0 0.0
        %552 = vmatpush1.msra.mxu0 0.0
        %553 = vmatprep.subr.mxu0 0.0
        %554 = vmatpush1.msra.mxu0 %v492
        %555 = vmatprep.subr.mxu0 0.0
        %556 = vmatpush1.msra.mxu0 %v491
        %557 = vmatprep.subr.mxu0 0.0
        %558 = vmatpush2.msra.mxu0 0.0
        %559 = vmatprep.subr.mxu0 0.0
        %560 = vmatpush2.msra.mxu0 0.0
        %561 = vmatprep.subr.mxu0 0.0
        %562 = vmatpush2.msra.mxu0 0.0
        %563 = vmatprep.subr.mxu0 0.0
        %564 = vmatpush2.msra.mxu0 0.0
        %565 = vmatprep.subr.mxu0 0.0
        %566 = vmatpush2.msra.mxu0 0.0
        %567 = vmatprep.subr.mxu0 0.0
        %568 = vmatpush2.msra.mxu0 0.0
        %569 = vmatprep.subr.mxu0 0.0
        %570 = vmatpush2.msra.mxu0 0.0
        %571 = vmatprep.subr.mxu0 0.0
        %572 = vmatpush2.msra.mxu0 0.0
        %573 = vmatprep.subr.mxu0 0.0
        %574 = vmatpush2.msra.mxu0 0.0
        %575 = vmatprep.subr.mxu0 0.0
        %576 = vmatpush2.msra.mxu0 0.0
        %577 = vmatprep.subr.mxu0 0.0
        %578 = vmatpush2.msra.mxu0 0.0
        %579 = vmatprep.subr.mxu0 0.0
        %580 = vmatpush2.msra.mxu0 0.0
        %581 = vmatprep.subr.mxu0 0.0
        %582 = vmatpush2.msra.mxu0 0.0
        %583 = vmatprep.subr.mxu0 0.0
        %584 = vmatpush2.msra.mxu0 0.0
        %585 = vmatprep.subr.mxu0 0.0
        %586 = vmatpush2.msra.mxu0 0.0
        %587 = vmatprep.subr.mxu0 0.0
        %588 = vmatpush2.msra.mxu0 0.0
        %589 = vmatprep.mubr.f32.mxu0 0.0
        %590 = vmatmul.mubr.f32.gmra.mxu0 %v502
        %v591 = vpop.f32.mrf.mxu0
        %v592 = vadd.f32 %v498, %v591
        %v593 = vpop.f32.mrf.mxu0
        %594 = vmatprep.mubr.f32.mxu0 0.0
        %595 = vmatmul.mubr.f32.gmra.mxu0 %v505
        %v596 = vpop.f32.mrf.mxu0
        %v597 = vadd.f32 %v498, %v596
        %v598 = vpop.f32.mrf.mxu0
        %599 = vmatprep.mubr.f32.mxu0 0.0
        %600 = vmatmul.mubr.f32.gmra.mxu0 %v508
        %v601 = vpop.f32.mrf.mxu0
        %v602 = vadd.f32 %v498, %v601
        %v603 = vpop.f32.mrf.mxu0
        %604 = vmatprep.mubr.f32.mxu0 0.0
        %605 = vmatmul.mubr.f32.gmra.mxu0 %v511
        %v606 = vpop.f32.mrf.mxu0
        %v607 = vadd.f32 %v498, %v606
        %v608 = vpop.f32.mrf.mxu0
        %609 = vmatprep.mubr.f32.mxu0 0.0
        %610 = vmatmul.mubr.f32.gmra.mxu0 %v514
        %v611 = vpop.f32.mrf.mxu0
        %v612 = vadd.f32 %v498, %v611
        %v613 = vpop.f32.mrf.mxu0
        %614 = vmatprep.mubr.f32.mxu0 0.0
        %615 = vmatmul.mubr.f32.gmra.mxu0 %v517
        %v616 = vpop.f32.mrf.mxu0
        %v617 = vadd.f32 %v498, %v616
        %v618 = vpop.f32.mrf.mxu0
        %619 = vmatprep.mubr.f32.mxu0 0.0
        %620 = vmatmul.mubr.f32.gmra.mxu0 %v520
        %v621 = vpop.f32.mrf.mxu0
        %v622 = vadd.f32 %v498, %v621
        %v623 = vpop.f32.mrf.mxu0
        %624 = vmatprep.mubr.f32.mxu0 0.0
        %625 = vmatmul.mubr.f32.gmra.mxu0 %v523
        %v626 = vpop.f32.mrf.mxu0
        %v627 = vadd.f32 %v498, %v626
        %v628 = vpop.f32.mrf.mxu0
        %629 = vdwg.mxu0
        %v630 = vmul.f32 %v592, 0.5
        %v631 = vmul.f32 %v597, 0.5
        %v632 = vmul.f32 %v602, 0.5
        %v633 = vmul.f32 %v607, 0.5
        %v634 = vmul.f32 %v612, 0.5
        %v635 = vmul.f32 %v617, 0.5
        %v636 = vmul.f32 %v622, 0.5
        %v637 = vmul.f32 %v627, 0.5
        %v638 = vmul.f32 %v592, 0.70710677
        %v639 = vmul.f32 %v597, 0.70710677
        %v640 = vmul.f32 %v602, 0.70710677
        %v641 = vmul.f32 %v607, 0.70710677
        %v642 = vmul.f32 %v612, 0.70710677
        %v643 = vmul.f32 %v617, 0.70710677
        %v644 = vmul.f32 %v622, 0.70710677
        %v645 = vmul.f32 %v627, 0.70710677
        %vm646 = vcmp.ge.f32.partialorder %v638, 0.0
        %vm647 = vcmp.ge.f32.partialorder %v639, 0.0
        %vm648 = vcmp.ge.f32.partialorder %v640, 0.0
        %vm649 = vcmp.ge.f32.partialorder %v641, 0.0
        %vm650 = vcmp.ge.f32.partialorder %v642, 0.0
        %vm651 = vcmp.ge.f32.partialorder %v643, 0.0
        %vm652 = vcmp.ge.f32.partialorder %v644, 0.0
        %vm653 = vcmp.ge.f32.partialorder %v645, 0.0
        %v654 = vsel %vm646, 1.0, -1.0
        %v655 = vsel %vm647, 1.0, -1.0
        %v656 = vsel %vm648, 1.0, -1.0
        %v657 = vsel %vm649, 1.0, -1.0
        %v658 = vsel %vm650, 1.0, -1.0
        %v659 = vsel %vm651, 1.0, -1.0
        %v660 = vsel %vm652, 1.0, -1.0
        %v661 = vsel %vm653, 1.0, -1.0
        %v662 = vand.u32 2147483647, %v638
        %v663 = vand.u32 2147483647, %v639
        %v664 = vand.u32 2147483647, %v640
        %v665 = vand.u32 2147483647, %v641
        %v666 = vand.u32 2147483647, %v642
        %v667 = vand.u32 2147483647, %v643
        %v668 = vand.u32 2147483647, %v644
        %v669 = vand.u32 2147483647, %v645
        %v670 = vmul.f32 %v662, 0.3275911
        %v671 = vmul.f32 %v663, 0.3275911
        %v672 = vmul.f32 %v664, 0.3275911
        %v673 = vmul.f32 %v665, 0.3275911
        %v674 = vmul.f32 %v666, 0.3275911
        %v675 = vmul.f32 %v667, 0.3275911
        %v676 = vmul.f32 %v668, 0.3275911
        %v677 = vmul.f32 %v669, 0.3275911
        %v678 = vadd.f32 %v670, 1.0
        %v679 = vadd.f32 %v671, 1.0
        %v680 = vadd.f32 %v672, 1.0
        %v681 = vadd.f32 %v673, 1.0
        %v682 = vadd.f32 %v674, 1.0
        %v683 = vadd.f32 %v675, 1.0
        %v684 = vadd.f32 %v676, 1.0
        %v685 = vadd.f32 %v677, 1.0
        %v686 = vrcp.pop %v678
        %v687 = vmul.f32 1.0, %v686
        %v688 = vrcp.pop %v679
        %v689 = vmul.f32 1.0, %v688
        %v690 = vrcp.pop %v680
        %v691 = vmul.f32 1.0, %v690
        %v692 = vrcp.pop %v681
        %v693 = vmul.f32 1.0, %v692
        %v694 = vrcp.pop %v682
        %v695 = vmul.f32 1.0, %v694
        %v696 = vrcp.pop %v683
        %v697 = vmul.f32 1.0, %v696
        %v698 = vrcp.pop %v684
        %v699 = vmul.f32 1.0, %v698
        %v700 = vrcp.pop %v685
        %v701 = vmul.f32 1.0, %v700
        %v702 = vmul.f32 %v687, 1.0614054
        %v703 = vmul.f32 %v689, 1.0614054
        %v704 = vmul.f32 %v691, 1.0614054
        %v705 = vmul.f32 %v693, 1.0614054
        %v706 = vmul.f32 %v695, 1.0614054
        %v707 = vmul.f32 %v697, 1.0614054
        %v708 = vmul.f32 %v699, 1.0614054
        %v709 = vmul.f32 %v701, 1.0614054
        %v710 = vadd.f32 %v702, -1.4531521
        %v711 = vadd.f32 %v703, -1.4531521
        %v712 = vadd.f32 %v704, -1.4531521
        %v713 = vadd.f32 %v705, -1.4531521
        %v714 = vadd.f32 %v706, -1.4531521
        %v715 = vadd.f32 %v707, -1.4531521
        %v716 = vadd.f32 %v708, -1.4531521
        %v717 = vadd.f32 %v709, -1.4531521
        %v718 = vmul.f32 %v710, %v687
        %v719 = vmul.f32 %v711, %v689
        %v720 = vmul.f32 %v712, %v691
        %v721 = vmul.f32 %v713, %v693
        %v722 = vmul.f32 %v714, %v695
        %v723 = vmul.f32 %v715, %v697
        %v724 = vmul.f32 %v716, %v699
        %v725 = vmul.f32 %v717, %v701
        %v726 = vadd.f32 %v718, 1.4214138
        %v727 = vadd.f32 %v719, 1.4214138
        %v728 = vadd.f32 %v720, 1.4214138
        %v729 = vadd.f32 %v721, 1.4214138
        %v730 = vadd.f32 %v722, 1.4214138
        %v731 = vadd.f32 %v723, 1.4214138
        %v732 = vadd.f32 %v724, 1.4214138
        %v733 = vadd.f32 %v725, 1.4214138
        %v734 = vmul.f32 %v726, %v687
        %v735 = vmul.f32 %v727, %v689
        %v736 = vmul.f32 %v728, %v691
        %v737 = vmul.f32 %v729, %v693
        %v738 = vmul.f32 %v730, %v695
        %v739 = vmul.f32 %v731, %v697
        %v740 = vmul.f32 %v732, %v699
        %v741 = vmul.f32 %v733, %v701
        %v742 = vadd.f32 %v734, -0.28449672
        %v743 = vadd.f32 %v735, -0.28449672
        %v744 = vadd.f32 %v736, -0.28449672
        %v745 = vadd.f32 %v737, -0.28449672
        %v746 = vadd.f32 %v738, -0.28449672
        %v747 = vadd.f32 %v739, -0.28449672
        %v748 = vadd.f32 %v740, -0.28449672
        %v749 = vadd.f32 %v741, -0.28449672
        %v750 = vmul.f32 %v742, %v687
        %v751 = vmul.f32 %v743, %v689
        %v752 = vmul.f32 %v744, %v691
        %v753 = vmul.f32 %v745, %v693
        %v754 = vmul.f32 %v746, %v695
        %v755 = vmul.f32 %v747, %v697
        %v756 = vmul.f32 %v748, %v699
        %v757 = vmul.f32 %v749, %v701
        %v758 = vadd.f32 %v750, 0.2548296
        %v759 = vadd.f32 %v751, 0.2548296
        %v760 = vadd.f32 %v752, 0.2548296
        %v761 = vadd.f32 %v753, 0.2548296
        %v762 = vadd.f32 %v754, 0.2548296
        %v763 = vadd.f32 %v755, 0.2548296
        %v764 = vadd.f32 %v756, 0.2548296
        %v765 = vadd.f32 %v757, 0.2548296
        %v766 = vmul.f32 %v758, %v687
        %v767 = vmul.f32 %v759, %v689
        %v768 = vmul.f32 %v760, %v691
        %v769 = vmul.f32 %v761, %v693
        %v770 = vmul.f32 %v762, %v695
        %v771 = vmul.f32 %v763, %v697
        %v772 = vmul.f32 %v764, %v699
        %v773 = vmul.f32 %v765, %v701
        %v774 = vsub.f32 0.0, %v662
        %v775 = vsub.f32 0.0, %v663
        %v776 = vsub.f32 0.0, %v664
        %v777 = vsub.f32 0.0, %v665
        %v778 = vsub.f32 0.0, %v666
        %v779 = vsub.f32 0.0, %v667
        %v780 = vsub.f32 0.0, %v668
        %v781 = vsub.f32 0.0, %v669
        %v782 = vmul.f32 %v774, %v662
        %v783 = vmul.f32 %v775, %v663
        %v784 = vmul.f32 %v776, %v664
        %v785 = vmul.f32 %v777, %v665
        %v786 = vmul.f32 %v778, %v666
        %v787 = vmul.f32 %v779, %v667
        %v788 = vmul.f32 %v780, %v668
        %v789 = vmul.f32 %v781, %v669
        %v790 = vmul.f32 %v782, 1.442695
        %v791 = vpow.pop %v790
        %v792 = vmul.f32 %v783, 1.442695
        %v793 = vpow.pop %v792
        %v794 = vmul.f32 %v784, 1.442695
        %v795 = vpow.pop %v794
        %v796 = vmul.f32 %v785, 1.442695
        %v797 = vpow.pop %v796
        %v798 = vmul.f32 %v786, 1.442695
        %v799 = vpow.pop %v798
        %v800 = vmul.f32 %v787, 1.442695
        %v801 = vpow.pop %v800
        %v802 = vmul.f32 %v788, 1.442695
        %v803 = vpow.pop %v802
        %v804 = vmul.f32 %v789, 1.442695
        %v805 = vpow.pop %v804
        %v806 = vmul.f32 %v766, %v791
        %v807 = vmul.f32 %v767, %v793
        %v808 = vmul.f32 %v768, %v795
        %v809 = vmul.f32 %v769, %v797
        %v810 = vmul.f32 %v770, %v799
        %v811 = vmul.f32 %v771, %v801
        %v812 = vmul.f32 %v772, %v803
        %v813 = vmul.f32 %v773, %v805
        %v814 = vsub.f32 1.0, %v806
        %v815 = vsub.f32 1.0, %v807
        %v816 = vsub.f32 1.0, %v808
        %v817 = vsub.f32 1.0, %v809
        %v818 = vsub.f32 1.0, %v810
        %v819 = vsub.f32 1.0, %v811
        %v820 = vsub.f32 1.0, %v812
        %v821 = vsub.f32 1.0, %v813
        %v822 = vmul.f32 %v654, %v814
        %v823 = vmul.f32 %v655, %v815
        %v824 = vmul.f32 %v656, %v816
        %v825 = vmul.f32 %v657, %v817
        %v826 = vmul.f32 %v658, %v818
        %v827 = vmul.f32 %v659, %v819
        %v828 = vmul.f32 %v660, %v820
        %v829 = vmul.f32 %v661, %v821
        %v830 = vadd.f32 %v822, 1.0
        %v831 = vadd.f32 %v823, 1.0
        %v832 = vadd.f32 %v824, 1.0
        %v833 = vadd.f32 %v825, 1.0
        %v834 = vadd.f32 %v826, 1.0
        %v835 = vadd.f32 %v827, 1.0
        %v836 = vadd.f32 %v828, 1.0
        %v837 = vadd.f32 %v829, 1.0
        %v838 = vmul.f32 %v630, %v830
        %v839 = vmul.f32 %v631, %v831
        %v840 = vmul.f32 %v632, %v832
        %v841 = vmul.f32 %v633, %v833
        %v842 = vmul.f32 %v634, %v834
        %v843 = vmul.f32 %v635, %v835
        %v844 = vmul.f32 %v636, %v836
        %v845 = vmul.f32 %v637, %v837
        %v846 = vld [vmem:[%s7] sm:$0xff]
        %v847 = vld [vmem:[%s7 + $0x8] sm:$0xff]
        %v848 = vld [vmem:[%s7 + $0x10] sm:$0xff]
        %v849 = vld [vmem:[%s7 + $0x18] sm:$0xff]
        %v850 = vld [vmem:[%s7 + $0x20] sm:$0xff]
        %v851 = vld [vmem:[%s7 + $0x28] sm:$0xff]
        %v852 = vld [vmem:[%s7 + $0x30] sm:$0xff]
        %v853 = vld [vmem:[%s7 + $0x38] sm:$0xff]
        %v854 = vld [vmem:[%s8] sm:$0x1]
        %v856 = vlaneseq
        %v857 = vshrl.u32 %v856, 7
        %v858 = vsub.s32 0, %v857
        %v859 = vrot.slane %v854, %v858
        %vm861 = vcmask 523264
        %v863 = vsel %vm861, %v838, 0
        %v866 = vsel %vm861, %v839, 0
        %v869 = vsel %vm861, %v840, 0
        %v872 = vsel %vm861, %v841, 0
        %v875 = vsel %vm861, %v842, 0
        %v878 = vsel %vm861, %v843, 0
        %v881 = vsel %vm861, %v844, 0
        %v884 = vsel %vm861, %v845, 0
        %886 = vmatprep.subr.mxu0 0.0
        %887 = vmatpush1.msra.mxu0 0.0
        %888 = vmatprep.subr.mxu0 0.0
        %889 = vmatpush1.msra.mxu0 0.0
        %890 = vmatprep.subr.mxu0 0.0
        %891 = vmatpush1.msra.mxu0 0.0
        %892 = vmatprep.subr.mxu0 0.0
        %893 = vmatpush1.msra.mxu0 0.0
        %894 = vmatprep.subr.mxu0 0.0
        %895 = vmatpush1.msra.mxu0 0.0
        %896 = vmatprep.subr.mxu0 0.0
        %897 = vmatpush1.msra.mxu0 0.0
        %898 = vmatprep.subr.mxu0 0.0
        %899 = vmatpush1.msra.mxu0 0.0
        %900 = vmatprep.subr.mxu0 0.0
        %901 = vmatpush1.msra.mxu0 0.0
        %902 = vmatprep.subr.mxu0 0.0
        %903 = vmatpush1.msra.mxu0 %v853
        %904 = vmatprep.subr.mxu0 0.0
        %905 = vmatpush1.msra.mxu0 %v852
        %906 = vmatprep.subr.mxu0 0.0
        %907 = vmatpush1.msra.mxu0 %v851
        %908 = vmatprep.subr.mxu0 0.0
        %909 = vmatpush1.msra.mxu0 %v850
        %910 = vmatprep.subr.mxu0 0.0
        %911 = vmatpush1.msra.mxu0 %v849
        %912 = vmatprep.subr.mxu0 0.0
        %913 = vmatpush1.msra.mxu0 %v848
        %914 = vmatprep.subr.mxu0 0.0
        %915 = vmatpush1.msra.mxu0 %v847
        %916 = vmatprep.subr.mxu0 0.0
        %917 = vmatpush1.msra.mxu0 %v846
        %918 = vmatprep.subr.mxu0 0.0
        %919 = vmatpush2.msra.mxu0 0.0
        %920 = vmatprep.subr.mxu0 0.0
        %921 = vmatpush2.msra.mxu0 0.0
        %922 = vmatprep.subr.mxu0 0.0
        %923 = vmatpush2.msra.mxu0 0.0
        %924 = vmatprep.subr.mxu0 0.0
        %925 = vmatpush2.msra.mxu0 0.0
        %926 = vmatprep.subr.mxu0 0.0
        %927 = vmatpush2.msra.mxu0 0.0
        %928 = vmatprep.subr.mxu0 0.0
        %929 = vmatpush2.msra.mxu0 0.0
        %930 = vmatprep.subr.mxu0 0.0
        %931 = vmatpush2.msra.mxu0 0.0
        %932 = vmatprep.subr.mxu0 0.0
        %933 = vmatpush2.msra.mxu0 0.0
        %934 = vmatprep.subr.mxu0 0.0
        %935 = vmatpush2.msra.mxu0 0.0
        %936 = vmatprep.subr.mxu0 0.0
        %937 = vmatpush2.msra.mxu0 0.0
        %938 = vmatprep.subr.mxu0 0.0
        %939 = vmatpush2.msra.mxu0 0.0
        %940 = vmatprep.subr.mxu0 0.0
        %941 = vmatpush2.msra.mxu0 0.0
        %942 = vmatprep.subr.mxu0 0.0
        %943 = vmatpush2.msra.mxu0 0.0
        %944 = vmatprep.subr.mxu0 0.0
        %945 = vmatpush2.msra.mxu0 0.0
        %946 = vmatprep.subr.mxu0 0.0
        %947 = vmatpush2.msra.mxu0 0.0
        %948 = vmatprep.subr.mxu0 0.0
        %949 = vmatpush2.msra.mxu0 0.0
        %950 = vmatprep.mubr.f32.mxu0 0.0
        %951 = vmatmul.mubr.f32.gmra.mxu0 %v863
        %v952 = vpop.f32.mrf.mxu0
        %v953 = vadd.f32 %v859, %v952
        %v954 = vpop.f32.mrf.mxu0
        %955 = vmatprep.mubr.f32.mxu0 0.0
        %956 = vmatmul.mubr.f32.gmra.mxu0 %v866
        %v957 = vpop.f32.mrf.mxu0
        %v958 = vadd.f32 %v859, %v957
        %v959 = vpop.f32.mrf.mxu0
        %960 = vmatprep.mubr.f32.mxu0 0.0
        %961 = vmatmul.mubr.f32.gmra.mxu0 %v869
        %v962 = vpop.f32.mrf.mxu0
        %v963 = vadd.f32 %v859, %v962
        %v964 = vpop.f32.mrf.mxu0
        %965 = vmatprep.mubr.f32.mxu0 0.0
        %966 = vmatmul.mubr.f32.gmra.mxu0 %v872
        %v967 = vpop.f32.mrf.mxu0
        %v968 = vadd.f32 %v859, %v967
        %v969 = vpop.f32.mrf.mxu0
        %970 = vmatprep.mubr.f32.mxu0 0.0
        %971 = vmatmul.mubr.f32.gmra.mxu0 %v875
        %v972 = vpop.f32.mrf.mxu0
        %v973 = vadd.f32 %v859, %v972
        %v974 = vpop.f32.mrf.mxu0
        %975 = vmatprep.mubr.f32.mxu0 0.0
        %976 = vmatmul.mubr.f32.gmra.mxu0 %v878
        %v977 = vpop.f32.mrf.mxu0
        %v978 = vadd.f32 %v859, %v977
        %v979 = vpop.f32.mrf.mxu0
        %980 = vmatprep.mubr.f32.mxu0 0.0
        %981 = vmatmul.mubr.f32.gmra.mxu0 %v881
        %v982 = vpop.f32.mrf.mxu0
        %v983 = vadd.f32 %v859, %v982
        %v984 = vpop.f32.mrf.mxu0
        %985 = vmatprep.mubr.f32.mxu0 0.0
        %986 = vmatmul.mubr.f32.gmra.mxu0 %v884
        %v987 = vpop.f32.mrf.mxu0
        %v988 = vadd.f32 %v859, %v987
        %v989 = vpop.f32.mrf.mxu0
        %990 = vdwg.mxu0
        %v991 = vld [vmem:[%s9] sm:$0x1]
        %v993 = vlaneseq
        %v994 = vshrl.u32 %v993, 7
        %v995 = vsub.s32 0, %v994
        %v996 = vrot.slane %v991, %v995
        %v998 = vmul.f32 %v996, %v953
        %v999 = vmul.f32 %v996, %v958
        %v1000 = vmul.f32 %v996, %v963
        %v1001 = vmul.f32 %v996, %v968
        %v1002 = vmul.f32 %v996, %v973
        %v1003 = vmul.f32 %v996, %v978
        %v1004 = vmul.f32 %v996, %v983
        %v1005 = vmul.f32 %v996, %v988
        %v1006 = vadd.f32 %v417, %v998
        %v1007 = vadd.f32 %v418, %v999
        %v1008 = vadd.f32 %v419, %v1000
        %v1009 = vadd.f32 %v420, %v1001
        %v1010 = vadd.f32 %v421, %v1002
        %v1011 = vadd.f32 %v422, %v1003
        %v1012 = vadd.f32 %v423, %v1004
        %v1013 = vadd.f32 %v424, %v1005
        %1014 = vst.msk [vmem:[%s399] sm:$0xff] %vm500, %v1006
        %1015 = vst.msk [vmem:[%s399 + $0x8] sm:$0xff] %vm500, %v1007
        %1016 = vst.msk [vmem:[%s399 + $0x10] sm:$0xff] %vm500, %v1008
        %1017 = vst.msk [vmem:[%s399 + $0x18] sm:$0xff] %vm500, %v1009
        %1018 = vst.msk [vmem:[%s399 + $0x20] sm:$0xff] %vm500, %v1010
        %1019 = vst.msk [vmem:[%s399 + $0x28] sm:$0xff] %vm500, %v1011
        %1020 = vst.msk [vmem:[%s399 + $0x30] sm:$0xff] %vm500, %v1012
        %1021 = vst.msk [vmem:[%s399 + $0x38] sm:$0xff] %vm500, %v1013
        %s1022 = sand.u32 %s273, 1
        %s1023 = scalar_lea.sflag [#allocation3], %s1022
        %s1024 = sand.u32 %s273, 1
        %s1025 = smul.addr %s1024, 64
        %s1026 = scalar_lea.vmem [#allocation2], %s1025
        // Predicated region
        $region61: #{cluster_block_forward.5} parent=59 // pred_check
          %p1027 = pneg %p283
        $region62: #{cluster_block_forward.5} parent=59 // pred_check_branch
          %1029 = sbr.rel (%p1027) target = $region64
        $region63: #{cluster_block_forward.5} parent=59 // pred_region
          %s1030 = smul.u32 8, %s29
          %s1032 = ssub.s32 1024, 1024
          %1033 = vsyncadd %s1023, %s1032
          %s1034 = smul.addr %s28, 8
          %s1035 = sadd.s32 %s1030, %s1034
          %s1036 = smul.addr %s1035, 128
          %s1037 = scalar_lea.hbm %s10, %s1036
          %s1038 = sshll.u32 %s1026, 4
          %s1039 = int_to_ptr.vmem [resolvable:$true] %s1038
          %1044 = dma.vmem_to_hbm [thread:$0]  %s1039, 1024, %s1037, %s1023, 128, 128, 8
        $region64: #{cluster_block_forward.5} parent=59 // pred_fallthru
          _
      $region60: #{cluster_block_forward.5} parent=5 // pred_fallthru
        _
      %p1045 = scmp.le.s32.totalorder 2, %s19
      // Predicated region
      $region65: #{cluster_block_forward.5} parent=5 // pred_check
        %p1046 = pneg %p1045
      $region66: #{cluster_block_forward.5} parent=5 // pred_check_branch
        %1048 = sbr.rel (%p1046) target = $region68
      $region67: #{cluster_block_forward.5} parent=5 // pred_region
        %s1049 = ssub.s32 %s19, 2
        // Predicated region
        $region69: #{cluster_block_forward.5} parent=67 // pred_check
          %p1050 = pneg %p289
        $region70: #{cluster_block_forward.5} parent=67 // pred_check_branch
          %1052 = sbr.rel (%p1050) target = $region72
        $region71: #{cluster_block_forward.5} parent=67 // pred_region
          %s1053 = sand.u32 %s274, 1
          %s1054 = scalar_lea.sflag [#allocation3], %s1053
          %s1055 = sand.u32 %s274, 1
          %s1056 = smul.addr %s1055, 64
          %s1057 = scalar_lea.vmem [#allocation2], %s1056
          %1058 = dma.done %s1054, 1024
        $region72: #{cluster_block_forward.5} parent=67 // pred_fallthru
          _
      $region68: #{cluster_block_forward.5} parent=5 // pred_fallthru
        _
    $region6: #{cluster_block_forward.5} parent=1 // loop_footer
      %s23 = sadd.s32 1, %s19
    $region7: #{cluster_block_forward.5} parent=1 // loop_footer_branch
      %18 = sbr.rel target = $region3
    $region8: #{cluster_block_forward.5} parent=1 // loop_exit
      _
    %1059 = vsyncpa [#allocation3], 1
    %s1060 = scalar_lea.sflag [#allocation3], 1
    %1061 = vsyncpa %s1060, 1

// kernel: cluster_block_forward.3
$region0: #{cluster_block_forward.3}
  #allocation0 [shape = 'u32[]', space=smem, size = 0x4, offset = 0x4, fixed_abs, tag = 'smem constant byte address 0x4 - core index']
  #allocation1 [shape = 'u32[144,128]{1,0:T(1,128)}', space=vmem, size = 0x12000, scoped, tag = 'internal scratch']
  %s0 = inlined_call_operand.vmem [shape: f32[2,64,16], index: 0, kind: input, shape index: {}]
  %s1 = inlined_call_operand.vmem [shape: f32[8,64], index: 1, kind: input, shape index: {}]
  %s2 = inlined_call_operand.hbm [shape: f32[1,16], index: 2, kind: input, shape index: {}]
  %s3 = inlined_call_operand.hbm [shape: f32[1,16], index: 3, kind: input, shape index: {}]
  %s4 = inlined_call_operand.vmem [shape: f32[16,16], index: 4, kind: input, shape index: {}]
  %s5 = inlined_call_operand.hbm [shape: f32[1,16], index: 5, kind: input, shape index: {}]
  %s6 = inlined_call_operand.vmem [shape: f32[16,16], index: 6, kind: input, shape index: {}]
  %s7 = inlined_call_operand.vmem [shape: f32[1,16], index: 7, kind: input, shape index: {}]
  %s8 = inlined_call_operand.vmem [shape: f32[16,16], index: 8, kind: input, shape index: {}]
  %s9 = inlined_call_operand.hbm [shape: f32[1,16], index: 9, kind: input, shape index: {}]
  %s10 = inlined_call_operand.hbm [shape: f32[1,16], index: 10, kind: input, shape index: {}]
  %s11 = inlined_call_operand.vmem [shape: f32[2], index: 11, kind: input, shape index: {}]
  %s12 = inlined_call_operand.vmem [shape: f32[2,64,16], index: 12, kind: output, shape index: {}]
  %s13 = sld [smem:[#allocation0]]
  $region105: #{cluster_block_forward.3} parent=0
    _
  %s15 = ssub.s32 1, %s13
  %s16 = scalar_select 0, %s15, %s13
  $region1: #{cluster_block_forward.3} parent=0
    #allocation2 [shape = 'u8[512]{0}', space=vmem, size = 0x400, scoped, tag = 'input window, operand 2, single buffered']
    #allocation3 [shape = 's32[2]{0}', space=sflag, size = 0x8, scoped, tag = 'scoped memory for cluster_block_forward.3']
    #allocation4 [shape = 's32[2]{0}', space=sflag, size = 0x8, scoped, tag = 'scoped memory for cluster_block_forward.3']
    #allocation5 [shape = 'u8[512]{0}', space=vmem, size = 0x400, scoped, tag = 'input window, operand 3, single buffered']
    #allocation6 [shape = 's32[1]{0}', space=sflag, size = 0x4, scoped, tag = 'scoped memory for cluster_block_forward.3']
    #allocation7 [shape = 'u8[512]{0}', space=vmem, size = 0x400, scoped, tag = 'input window, operand 5, single buffered']
    #allocation8 [shape = 'u8[512]{0}', space=vmem, size = 0x400, scoped, tag = 'input window, operand 9, single buffered']
    #allocation9 [shape = 's32[1]{0}', space=sflag, size = 0x4, scoped, tag = 'scoped memory for cluster_block_forward.3']
    #allocation10 [shape = 'u8[512]{0}', space=vmem, size = 0x400, scoped, tag = 'input window, operand 10, single buffered']
    #allocation11 [shape = 'u8[512]{0}', space=smem, size = 0x200, scoped, tag = 'input window, operand 11, single buffered']
    %17 = vsyncpa [#allocation3], 0
    %18 = vsyncpa [#allocation6], 0
    %19 = vsyncpa [#allocation9], 0
    %20 = vsyncpa [#allocation4], 0
    loop: start=0, step=1, limit=4
    $region2: #{cluster_block_forward.3} parent=1 // loop_pre_header
      _
    $region3: #{cluster_block_forward.3} parent=1 // loop_header
      %s22 = sphi 0, %s26
      %p23 = scmp.ge.s32.totalorder %s22, 4
      %s32 = sphi 0, %s34
      %s35 = sphi 0, %s32
      %s36 = sphi 0, %s35
      %s52 = sphi 0, %s36
      %s56 = sphi 0, %s56
      %s58 = sphi 0, %s56
      %s59 = sphi 0, %s58
      %s73 = sphi 0, %s59
      %s77 = sphi 0, %s77
      %s79 = sphi 0, %s77
      %s80 = sphi 0, %s79
      %s94 = sphi 0, %s80
      %s98 = sphi 0, %s98
      %s100 = sphi 0, %s98
      %s101 = sphi 0, %s100
      %s115 = sphi 0, %s101
      %s119 = sphi 0, %s119
      %s121 = sphi 0, %s119
      %s122 = sphi 0, %s121
      %s136 = sphi 0, %s122
      %s140 = sphi 0, %s140
      %s142 = sphi 0, %s140
      %s143 = sphi 0, %s142
      %s157 = sphi 0, %s143
      %s161 = sphi 0, %s161
      %s163 = sphi 0, %s161
      %s164 = sphi 0, %s163
      %s178 = sphi 0, %s164
      %s182 = sphi 0, %s182
      %s184 = sphi 0, %s182
      %s185 = sphi 0, %s184
      %s199 = sphi 0, %s185
      %s203 = sphi 0, %s203
      %s205 = sphi 0, %s203
      %s206 = sphi 0, %s205
      %s220 = sphi 0, %s206
      %s224 = sphi 0, %s224
      %s226 = sphi 0, %s224
      %s227 = sphi 0, %s226
      %s241 = sphi 0, %s227
      %s245 = sphi 0, %s245
      %s247 = sphi 0, %s245
      %s248 = sphi 0, %s247
      %s262 = sphi 0, %s248
      %s266 = sphi 0, %s266
      %s268 = sphi 0, %s266
      %s269 = sphi 0, %s268
      %s283 = sphi 0, %s269
      %s289 = sphi 0, %s291
      %s292 = sphi 0, %s289
      %s293 = sphi 0, %s292
      %s309 = sphi 0, %s293
    $region4: #{cluster_block_forward.3} parent=1 // loop_header_branch
      %25 = sbr.rel (%p23) target = $region8
    $region5: #{cluster_block_forward.3} parent=1 // loop_body
      %s27 = ssub.s32 %s22, 1
      %s28 = ssub.s32 %s22, 2
      %s29 = sadd.s32 %s22, 1
      %s30 = ssub.s32 %s22, %s29
      %p31 = scmp.eq.s32.totalorder %s30, 0
      %s33 = sadd.s32 %s32, 1
      %s34 = scalar_select %p31, %s32, %s33
      %p37 = pneg %p31
      %p38 = scmp.eq.s32.totalorder %s22, 1
      %p39 = por %p37, %p38
      %p40 = scmp.ne.s32.totalorder %s32, %s35
      %p41 = scmp.eq.s32.totalorder %s22, 0
      %p42 = por %p40, %p41
      %p43 = scmp.ne.s32.totalorder %s32, %s35
      %p44 = scmp.eq.s32.totalorder %s27, 1
      %p45 = por %p43, %p44
      %p46 = scmp.ne.s32.totalorder %s35, %s36
      %p47 = scmp.eq.s32.totalorder %s27, 0
      %p48 = por %p46, %p47
      %p49 = scmp.ne.s32.totalorder %s35, %s36
      %p50 = scmp.eq.s32.totalorder %s28, 1
      %p51 = por %p49, %p50
      %p53 = scmp.ne.s32.totalorder %s36, %s52
      %p54 = scmp.eq.s32.totalorder %s28, 0
      %p55 = por %p53, %p54
      %s57 = sadd.s32 %s56, 1
      %p60 = scmp.eq.s32.totalorder %s22, 1
      %p61 = scmp.ne.s32.totalorder %s56, %s58
      %p62 = scmp.eq.s32.totalorder %s22, 0
      %p63 = por %p61, %p62
      %p64 = scmp.ne.s32.totalorder %s56, %s58
      %p65 = scmp.eq.s32.totalorder %s27, 1
      %p66 = por %p64, %p65
      %p67 = scmp.ne.s32.totalorder %s58, %s59
      %p68 = scmp.eq.s32.totalorder %s27, 0
      %p69 = por %p67, %p68
      %p70 = scmp.ne.s32.totalorder %s58, %s59
      %p71 = scmp.eq.s32.totalorder %s28, 1
      %p72 = por %p70, %p71
      %p74 = scmp.ne.s32.totalorder %s59, %s73
      %p75 = scmp.eq.s32.totalorder %s28, 0
      %p76 = por %p74, %p75
      %s78 = sadd.s32 %s77, 1
      %p81 = scmp.eq.s32.totalorder %s22, 1
      %p82 = scmp.ne.s32.totalorder %s77, %s79
      %p83 = scmp.eq.s32.totalorder %s22, 0
      %p84 = por %p82, %p83
      %p85 = scmp.ne.s32.totalorder %s77, %s79
      %p86 = scmp.eq.s32.totalorder %s27, 1
      %p87 = por %p85, %p86
      %p88 = scmp.ne.s32.totalorder %s79, %s80
      %p89 = scmp.eq.s32.totalorder %s27, 0
      %p90 = por %p88, %p89
      %p91 = scmp.ne.s32.totalorder %s79, %s80
      %p92 = scmp.eq.s32.totalorder %s28, 1
      %p93 = por %p91, %p92
      %p95 = scmp.ne.s32.totalorder %s80, %s94
      %p96 = scmp.eq.s32.totalorder %s28, 0
      %p97 = por %p95, %p96
      %s99 = sadd.s32 %s98, 1
      %p102 = scmp.eq.s32.totalorder %s22, 1
      %p103 = scmp.ne.s32.totalorder %s98, %s100
      %p104 = scmp.eq.s32.totalorder %s22, 0
      %p105 = por %p103, %p104
      %p106 = scmp.ne.s32.totalorder %s98, %s100
      %p107 = scmp.eq.s32.totalorder %s27, 1
      %p108 = por %p106, %p107
      %p109 = scmp.ne.s32.totalorder %s100, %s101
      %p110 = scmp.eq.s32.totalorder %s27, 0
      %p111 = por %p109, %p110
      %p112 = scmp.ne.s32.totalorder %s100, %s101
      %p113 = scmp.eq.s32.totalorder %s28, 1
      %p114 = por %p112, %p113
      %p116 = scmp.ne.s32.totalorder %s101, %s115
      %p117 = scmp.eq.s32.totalorder %s28, 0
      %p118 = por %p116, %p117
      %s120 = sadd.s32 %s119, 1
      %p123 = scmp.eq.s32.totalorder %s22, 1
      %p124 = scmp.ne.s32.totalorder %s119, %s121
      %p125 = scmp.eq.s32.totalorder %s22, 0
      %p126 = por %p124, %p125
      %p127 = scmp.ne.s32.totalorder %s119, %s121
      %p128 = scmp.eq.s32.totalorder %s27, 1
      %p129 = por %p127, %p128
      %p130 = scmp.ne.s32.totalorder %s121, %s122
      %p131 = scmp.eq.s32.totalorder %s27, 0
      %p132 = por %p130, %p131
      %p133 = scmp.ne.s32.totalorder %s121, %s122
      %p134 = scmp.eq.s32.totalorder %s28, 1
      %p135 = por %p133, %p134
      %p137 = scmp.ne.s32.totalorder %s122, %s136
      %p138 = scmp.eq.s32.totalorder %s28, 0
      %p139 = por %p137, %p138
      %s141 = sadd.s32 %s140, 1
      %p144 = scmp.eq.s32.totalorder %s22, 1
      %p145 = scmp.ne.s32.totalorder %s140, %s142
      %p146 = scmp.eq.s32.totalorder %s22, 0
      %p147 = por %p145, %p146
      %p148 = scmp.ne.s32.totalorder %s140, %s142
      %p149 = scmp.eq.s32.totalorder %s27, 1
      %p150 = por %p148, %p149
      %p151 = scmp.ne.s32.totalorder %s142, %s143
      %p152 = scmp.eq.s32.totalorder %s27, 0
      %p153 = por %p151, %p152
      %p154 = scmp.ne.s32.totalorder %s142, %s143
      %p155 = scmp.eq.s32.totalorder %s28, 1
      %p156 = por %p154, %p155
      %p158 = scmp.ne.s32.totalorder %s143, %s157
      %p159 = scmp.eq.s32.totalorder %s28, 0
      %p160 = por %p158, %p159
      %s162 = sadd.s32 %s161, 1
      %p165 = scmp.eq.s32.totalorder %s22, 1
      %p166 = scmp.ne.s32.totalorder %s161, %s163
      %p167 = scmp.eq.s32.totalorder %s22, 0
      %p168 = por %p166, %p167
      %p169 = scmp.ne.s32.totalorder %s161, %s163
      %p170 = scmp.eq.s32.totalorder %s27, 1
      %p171 = por %p169, %p170
      %p172 = scmp.ne.s32.totalorder %s163, %s164
      %p173 = scmp.eq.s32.totalorder %s27, 0
      %p174 = por %p172, %p173
      %p175 = scmp.ne.s32.totalorder %s163, %s164
      %p176 = scmp.eq.s32.totalorder %s28, 1
      %p177 = por %p175, %p176
      %p179 = scmp.ne.s32.totalorder %s164, %s178
      %p180 = scmp.eq.s32.totalorder %s28, 0
      %p181 = por %p179, %p180
      %s183 = sadd.s32 %s182, 1
      %p186 = scmp.eq.s32.totalorder %s22, 1
      %p187 = scmp.ne.s32.totalorder %s182, %s184
      %p188 = scmp.eq.s32.totalorder %s22, 0
      %p189 = por %p187, %p188
      %p190 = scmp.ne.s32.totalorder %s182, %s184
      %p191 = scmp.eq.s32.totalorder %s27, 1
      %p192 = por %p190, %p191
      %p193 = scmp.ne.s32.totalorder %s184, %s185
      %p194 = scmp.eq.s32.totalorder %s27, 0
      %p195 = por %p193, %p194
      %p196 = scmp.ne.s32.totalorder %s184, %s185
      %p197 = scmp.eq.s32.totalorder %s28, 1
      %p198 = por %p196, %p197
      %p200 = scmp.ne.s32.totalorder %s185, %s199
      %p201 = scmp.eq.s32.totalorder %s28, 0
      %p202 = por %p200, %p201
      %s204 = sadd.s32 %s203, 1
      %p207 = scmp.eq.s32.totalorder %s22, 1
      %p208 = scmp.ne.s32.totalorder %s203, %s205
      %p209 = scmp.eq.s32.totalorder %s22, 0
      %p210 = por %p208, %p209
      %p211 = scmp.ne.s32.totalorder %s203, %s205
      %p212 = scmp.eq.s32.totalorder %s27, 1
      %p213 = por %p211, %p212
      %p214 = scmp.ne.s32.totalorder %s205, %s206
      %p215 = scmp.eq.s32.totalorder %s27, 0
      %p216 = por %p214, %p215
      %p217 = scmp.ne.s32.totalorder %s205, %s206
      %p218 = scmp.eq.s32.totalorder %s28, 1
      %p219 = por %p217, %p218
      %p221 = scmp.ne.s32.totalorder %s206, %s220
      %p222 = scmp.eq.s32.totalorder %s28, 0
      %p223 = por %p221, %p222
      %s225 = sadd.s32 %s224, 1
      %p228 = scmp.eq.s32.totalorder %s22, 1
      %p229 = scmp.ne.s32.totalorder %s224, %s226
      %p230 = scmp.eq.s32.totalorder %s22, 0
      %p231 = por %p229, %p230
      %p232 = scmp.ne.s32.totalorder %s224, %s226
      %p233 = scmp.eq.s32.totalorder %s27, 1
      %p234 = por %p232, %p233
      %p235 = scmp.ne.s32.totalorder %s226, %s227
      %p236 = scmp.eq.s32.totalorder %s27, 0
      %p237 = por %p235, %p236
      %p238 = scmp.ne.s32.totalorder %s226, %s227
      %p239 = scmp.eq.s32.totalorder %s28, 1
      %p240 = por %p238, %p239
      %p242 = scmp.ne.s32.totalorder %s227, %s241
      %p243 = scmp.eq.s32.totalorder %s28, 0
      %p244 = por %p242, %p243
      %s246 = sadd.s32 %s245, 1
      %p249 = scmp.eq.s32.totalorder %s22, 1
      %p250 = scmp.ne.s32.totalorder %s245, %s247
      %p251 = scmp.eq.s32.totalorder %s22, 0
      %p252 = por %p250, %p251
      %p253 = scmp.ne.s32.totalorder %s245, %s247
      %p254 = scmp.eq.s32.totalorder %s27, 1
      %p255 = por %p253, %p254
      %p256 = scmp.ne.s32.totalorder %s247, %s248
      %p257 = scmp.eq.s32.totalorder %s27, 0
      %p258 = por %p256, %p257
      %p259 = scmp.ne.s32.totalorder %s247, %s248
      %p260 = scmp.eq.s32.totalorder %s28, 1
      %p261 = por %p259, %p260
      %p263 = scmp.ne.s32.totalorder %s248, %s262
      %p264 = scmp.eq.s32.totalorder %s28, 0
      %p265 = por %p263, %p264
      %s267 = sadd.s32 %s266, 1
      %p270 = scmp.eq.s32.totalorder %s22, 1
      %p271 = scmp.ne.s32.totalorder %s266, %s268
      %p272 = scmp.eq.s32.totalorder %s22, 0
      %p273 = por %p271, %p272
      %p274 = scmp.ne.s32.totalorder %s266, %s268
      %p275 = scmp.eq.s32.totalorder %s27, 1
      %p276 = por %p274, %p275
      %p277 = scmp.ne.s32.totalorder %s268, %s269
      %p278 = scmp.eq.s32.totalorder %s27, 0
      %p279 = por %p277, %p278
      %p280 = scmp.ne.s32.totalorder %s268, %s269
      %p281 = scmp.eq.s32.totalorder %s28, 1
      %p282 = por %p280, %p281
      %p284 = scmp.ne.s32.totalorder %s269, %s283
      %p285 = scmp.eq.s32.totalorder %s28, 0
      %p286 = por %p284, %p285
      %s287 = ssub.s32 %s22, %s29
      %p288 = scmp.eq.s32.totalorder %s287, 0
      %s290 = sadd.s32 %s289, 1
      %s291 = scalar_select %p288, %s289, %s290
      %p294 = pneg %p288
      %p295 = scmp.eq.s32.totalorder %s22, 1
      %p296 = por %p294, %p295
      %p297 = scmp.ne.s32.totalorder %s289, %s292
      %p298 = scmp.eq.s32.totalorder %s22, 0
      %p299 = por %p297, %p298
      %p300 = scmp.ne.s32.totalorder %s289, %s292
      %p301 = scmp.eq.s32.totalorder %s27, 1
      %p302 = por %p300, %p301
      %p303 = scmp.ne.s32.totalorder %s292, %s293
      %p304 = scmp.eq.s32.totalorder %s27, 0
      %p305 = por %p303, %p304
      %p306 = scmp.ne.s32.totalorder %s292, %s293
      %p307 = scmp.eq.s32.totalorder %s28, 1
      %p308 = por %p306, %p307
      %p310 = scmp.ne.s32.totalorder %s293, %s309
      %p311 = scmp.eq.s32.totalorder %s28, 0
      %p312 = por %p310, %p311
      %p313 = scmp.le.s32.totalorder 1, %s22
      %p314 = scmp.lt.s32.totalorder %s22, 3
      %p315 = pnand %p313, %p314
      %p316 = pneg %p315
      // Predicated region
      $region9: #{cluster_block_forward.3} parent=5 // pred_check
        _
      $region10: #{cluster_block_forward.3} parent=5 // pred_check_branch
        %318 = sbr.rel (%p315) target = $region12
      $region11: #{cluster_block_forward.3} parent=5 // pred_region
        %s319 = ssub.s32 %s22, 1
        // Predicated region
        $region13: #{cluster_block_forward.3} parent=11 // pred_check
          %p320 = pneg %p69
        $region14: #{cluster_block_forward.3} parent=11 // pred_check_branch
          %322 = sbr.rel (%p320) target = $region16
        $region15: #{cluster_block_forward.3} parent=11 // pred_region
          _
        $region16: #{cluster_block_forward.3} parent=11 // pred_fallthru
          _
        // Predicated region
        $region17: #{cluster_block_forward.3} parent=11 // pred_check
          %p323 = pneg %p90
        $region18: #{cluster_block_forward.3} parent=11 // pred_check_branch
          %325 = sbr.rel (%p323) target = $region20
        $region19: #{cluster_block_forward.3} parent=11 // pred_region
          %s327 = ssub.s32 16, 16
          %328 = vsyncadd [#allocation3], %s327
          %s330 = sshll.u32 [#allocation2], 4
          %s331 = int_to_ptr.vmem [resolvable:$true] %s330
          %333 = dma.hbm_to_vmem [thread:$0]  %s2, 16, %s331, [#allocation3]
        $region20: #{cluster_block_forward.3} parent=11 // pred_fallthru
          _
        // Predicated region
        $region21: #{cluster_block_forward.3} parent=11 // pred_check
          %p334 = pneg %p111
        $region22: #{cluster_block_forward.3} parent=11 // pred_check_branch
          %336 = sbr.rel (%p334) target = $region24
        $region23: #{cluster_block_forward.3} parent=11 // pred_region
          %s338 = ssub.s32 16, 16
          %339 = vsyncadd [#allocation6], %s338
          %s341 = sshll.u32 [#allocation5], 4
          %s342 = int_to_ptr.vmem [resolvable:$true] %s341
          %344 = dma.hbm_to_vmem [thread:$0]  %s3, 16, %s342, [#allocation6]
        $region24: #{cluster_block_forward.3} parent=11 // pred_fallthru
          _
        // Predicated region
        $region25: #{cluster_block_forward.3} parent=11 // pred_check
          %p345 = pneg %p132
        $region26: #{cluster_block_forward.3} parent=11 // pred_check_branch
          %347 = sbr.rel (%p345) target = $region28
        $region27: #{cluster_block_forward.3} parent=11 // pred_region
          _
        $region28: #{cluster_block_forward.3} parent=11 // pred_fallthru
          _
        // Predicated region
        $region29: #{cluster_block_forward.3} parent=11 // pred_check
          %p348 = pneg %p153
        $region30: #{cluster_block_forward.3} parent=11 // pred_check_branch
          %350 = sbr.rel (%p348) target = $region32
        $region31: #{cluster_block_forward.3} parent=11 // pred_region
          %s352 = ssub.s32 16, 16
          %353 = vsyncadd [#allocation6], %s352
          %s355 = sshll.u32 [#allocation7], 4
          %s356 = int_to_ptr.vmem [resolvable:$true] %s355
          %358 = dma.hbm_to_vmem [thread:$0]  %s5, 16, %s356, [#allocation6]
        $region32: #{cluster_block_forward.3} parent=11 // pred_fallthru
          _
        // Predicated region
        $region33: #{cluster_block_forward.3} parent=11 // pred_check
          %p359 = pneg %p174
        $region34: #{cluster_block_forward.3} parent=11 // pred_check_branch
          %361 = sbr.rel (%p359) target = $region36
        $region35: #{cluster_block_forward.3} parent=11 // pred_region
          _
        $region36: #{cluster_block_forward.3} parent=11 // pred_fallthru
          _
        // Predicated region
        $region37: #{cluster_block_forward.3} parent=11 // pred_check
          %p362 = pneg %p195
        $region38: #{cluster_block_forward.3} parent=11 // pred_check_branch
          %364 = sbr.rel (%p362) target = $region40
        $region39: #{cluster_block_forward.3} parent=11 // pred_region
          _
        $region40: #{cluster_block_forward.3} parent=11 // pred_fallthru
          _
        // Predicated region
        $region41: #{cluster_block_forward.3} parent=11 // pred_check
          %p365 = pneg %p216
        $region42: #{cluster_block_forward.3} parent=11 // pred_check_branch
          %367 = sbr.rel (%p365) target = $region44
        $region43: #{cluster_block_forward.3} parent=11 // pred_region
          _
        $region44: #{cluster_block_forward.3} parent=11 // pred_fallthru
          _
        // Predicated region
        $region45: #{cluster_block_forward.3} parent=11 // pred_check
          %p368 = pneg %p237
        $region46: #{cluster_block_forward.3} parent=11 // pred_check_branch
          %370 = sbr.rel (%p368) target = $region48
        $region47: #{cluster_block_forward.3} parent=11 // pred_region
          %s372 = ssub.s32 16, 16
          %373 = vsyncadd [#allocation9], %s372
          %s375 = sshll.u32 [#allocation8], 4
          %s376 = int_to_ptr.vmem [resolvable:$true] %s375
          %378 = dma.hbm_to_vmem [thread:$0]  %s9, 16, %s376, [#allocation9]
        $region48: #{cluster_block_forward.3} parent=11 // pred_fallthru
          _
        // Predicated region
        $region49: #{cluster_block_forward.3} parent=11 // pred_check
          %p379 = pneg %p258
        $region50: #{cluster_block_forward.3} parent=11 // pred_check_branch
          %381 = sbr.rel (%p379) target = $region52
        $region51: #{cluster_block_forward.3} parent=11 // pred_region
          %s383 = ssub.s32 16, 16
          %384 = vsyncadd [#allocation9], %s383
          %s386 = sshll.u32 [#allocation10], 4
          %s387 = int_to_ptr.vmem [resolvable:$true] %s386
          %389 = dma.hbm_to_vmem [thread:$0]  %s10, 16, %s387, [#allocation9]
        $region52: #{cluster_block_forward.3} parent=11 // pred_fallthru
          _
        // Predicated region
        $region53: #{cluster_block_forward.3} parent=11 // pred_check
          %p390 = pneg %p279
        $region54: #{cluster_block_forward.3} parent=11 // pred_check_branch
          %392 = sbr.rel (%p390) target = $region56
        $region55: #{cluster_block_forward.3} parent=11 // pred_region
          %s394 = ssub.s32 16, 16
          %395 = vsyncadd [#allocation4], %s394
          %s397 = sshll.u32 %s11, 4
          %s398 = int_to_ptr.vmem [resolvable:$true] %s397
          %400 = dma.vmem_to_smem %s398, 16, [#allocation11], [#allocation4]
        $region56: #{cluster_block_forward.3} parent=11 // pred_fallthru
          _
      $region12: #{cluster_block_forward.3} parent=5 // pred_fallthru
        _
      %p401 = scmp.lt.s32.totalorder %s22, 2
      // Predicated region
      $region57: #{cluster_block_forward.3} parent=5 // pred_check
        %p402 = pneg %p401
      $region58: #{cluster_block_forward.3} parent=5 // pred_check_branch
        %404 = sbr.rel (%p402) target = $region60
      $region59: #{cluster_block_forward.3} parent=5 // pred_region
        // Predicated region
        $region61: #{cluster_block_forward.3} parent=59 // pred_check
          %p405 = pneg %p42
        $region62: #{cluster_block_forward.3} parent=59 // pred_check_branch
          %407 = sbr.rel (%p405) target = $region64
        $region63: #{cluster_block_forward.3} parent=59 // pred_region
          %p408 = scmp.lt.s32.totalorder %s22, 1
          %s409 = scalar_select %p408, %s22, 1
          %s410 = smul.addr %s409, 8
          %s411 = smul.addr %s410, 8
          %s412 = scalar_lea.vmem %s0, %s411
        $region64: #{cluster_block_forward.3} parent=59 // pred_fallthru
          _
      $region60: #{cluster_block_forward.3} parent=5 // pred_fallthru
        _
      %p413 = scmp.le.s32.totalorder 1, %s22
      %p414 = scmp.lt.s32.totalorder %s22, 3
      %p415 = pnand %p413, %p414
      %p416 = pneg %p415
      // Predicated region
      $region65: #{cluster_block_forward.3} parent=5 // pred_check
        _
      $region66: #{cluster_block_forward.3} parent=5 // pred_check_branch
        %418 = sbr.rel (%p415) target = $region68
      $region67: #{cluster_block_forward.3} parent=5 // pred_region
        %s419 = ssub.s32 %s22, 1
        // Predicated region
        $region69: #{cluster_block_forward.3} parent=67 // pred_check
          %p420 = pneg %p90
        $region70: #{cluster_block_forward.3} parent=67 // pred_check_branch
          %422 = sbr.rel (%p420) target = $region72
        $region71: #{cluster_block_forward.3} parent=67 // pred_region
          %423 = dma.done [#allocation3], 16
        $region72: #{cluster_block_forward.3} parent=67 // pred_fallthru
          _
        // Predicated region
        $region73: #{cluster_block_forward.3} parent=67 // pred_check
          %p424 = pneg %p111
        $region74: #{cluster_block_forward.3} parent=67 // pred_check_branch
          %426 = sbr.rel (%p424) target = $region76
        $region75: #{cluster_block_forward.3} parent=67 // pred_region
          %427 = dma.done [#allocation6], 16
        $region76: #{cluster_block_forward.3} parent=67 // pred_fallthru
          _
        // Predicated region
        $region77: #{cluster_block_forward.3} parent=67 // pred_check
          %p428 = pneg %p153
        $region78: #{cluster_block_forward.3} parent=67 // pred_check_branch
          %430 = sbr.rel (%p428) target = $region80
        $region79: #{cluster_block_forward.3} parent=67 // pred_region
          %431 = dma.done [#allocation6], 16
        $region80: #{cluster_block_forward.3} parent=67 // pred_fallthru
          _
        // Predicated region
        $region81: #{cluster_block_forward.3} parent=67 // pred_check
          %p432 = pneg %p237
        $region82: #{cluster_block_forward.3} parent=67 // pred_check_branch
          %434 = sbr.rel (%p432) target = $region84
        $region83: #{cluster_block_forward.3} parent=67 // pred_region
          %435 = dma.done [#allocation9], 16
        $region84: #{cluster_block_forward.3} parent=67 // pred_fallthru
          _
        // Predicated region
        $region85: #{cluster_block_forward.3} parent=67 // pred_check
          %p436 = pneg %p258
        $region86: #{cluster_block_forward.3} parent=67 // pred_check_branch
          %438 = sbr.rel (%p436) target = $region88
        $region87: #{cluster_block_forward.3} parent=67 // pred_region
          %439 = dma.done [#allocation9], 16
        $region88: #{cluster_block_forward.3} parent=67 // pred_fallthru
          _
        // Predicated region
        $region89: #{cluster_block_forward.3} parent=67 // pred_check
          %p440 = pneg %p279
        $region90: #{cluster_block_forward.3} parent=67 // pred_check_branch
          %442 = sbr.rel (%p440) target = $region92
        $region91: #{cluster_block_forward.3} parent=67 // pred_region
          %443 = dma.done [#allocation4], 16
        $region92: #{cluster_block_forward.3} parent=67 // pred_fallthru
          _
        %444 = sfence
        %p445 = scmp.lt.s32.totalorder %s27, 1
        %s446 = scalar_select %p445, %s27, 1
        %s447 = smul.addr %s446, 8
        %s448 = smul.addr %s447, 8
        %s449 = scalar_lea.vmem %s0, %s448
        %p450 = pneg %p48
        %p451 = pneg %p45
        %p452 = pneg %p69
        %p453 = pneg %p66
        %p454 = pneg %p90
        %p455 = pneg %p87
        %p456 = pneg %p111
        %p457 = pneg %p108
        %p458 = pneg %p132
        %p459 = pneg %p129
        %p460 = pneg %p153
        %p461 = pneg %p150
        %p462 = pneg %p174
        %p463 = pneg %p171
        %p464 = pneg %p195
        %p465 = pneg %p192
        %p466 = pneg %p216
        %p467 = pneg %p213
        %p468 = pneg %p237
        %p469 = pneg %p234
        %p470 = pneg %p258
        %p471 = pneg %p255
        %p472 = pneg %p279
        %p473 = pneg %p276
        %p474 = pneg %p305
        %p475 = pneg %p302
        %p476 = scmp.lt.s32.totalorder %s27, 1
        %s477 = scalar_select %p476, %s27, 1
        %s478 = smul.addr %s477, 8
        %s479 = smul.addr %s478, 8
        %s480 = scalar_lea.vmem %s12, %s479
        %p481 = scmp.lt.s32.totalorder %s27, 1
        %s482 = scalar_select %p481, %s27, 1
        %s483 = smul.addr %s482, 8
        %s484 = smul.addr %s483, 8
        %s485 = scalar_lea.vmem %s0, %s484
        %p486 = scmp.lt.s32.totalorder %s27, 1
        %s487 = scalar_select %p486, %s27, 1
        %s488 = smul.addr %s487, 8
        %s489 = smul.addr %s488, 8
        %s490 = scalar_lea.vmem %s12, %s489
        %v491 = vld [vmem:[%s485] sm:$0xff]
        %v492 = vld [vmem:[%s485 + $0x8] sm:$0xff]
        %v493 = vld [vmem:[%s485 + $0x10] sm:$0xff]
        %v494 = vld [vmem:[%s485 + $0x18] sm:$0xff]
        %v495 = vld [vmem:[%s485 + $0x20] sm:$0xff]
        %v496 = vld [vmem:[%s485 + $0x28] sm:$0xff]
        %v497 = vld [vmem:[%s485 + $0x30] sm:$0xff]
        %v498 = vld [vmem:[%s485 + $0x38] sm:$0xff]
        %vm499 = vcmask 130048
        %v500 = vsel %vm499, %v491, 0.0
        %v501 = vsel %vm499, %v492, 0.0
        %v502 = vadd.f32 %v500, %v501
        %v503 = vsel %vm499, %v493, 0.0
        %v504 = vadd.f32 %v502, %v503
        %v505 = vsel %vm499, %v494, 0.0
        %v506 = vadd.f32 %v504, %v505
        %v507 = vsel %vm499, %v495, 0.0
        %v508 = vadd.f32 %v506, %v507
        %v509 = vsel %vm499, %v496, 0.0
        %v510 = vadd.f32 %v508, %v509
        %v511 = vsel %vm499, %v497, 0.0
        %v512 = vadd.f32 %v510, %v511
        %v513 = vsel %vm499, %v498, 0.0
        %v514 = vadd.f32 %v512, %v513
        %515 = vadd.xlane.f32.xlu0 %v514
        %v516 = vpop.xlane.xlu0 %515
        %v517 = vrot.slane %v516, 4
        %v518 = vadd.f32 %v516, %v517
        %v519 = vrot.slane %v518, 2
        %v520 = vadd.f32 %v518, %v519
        %v521 = vrot.slane %v520, 1
        %v522 = vadd.f32 %v520, %v521
        %s523 = vtos %v522
        %s524 = smul.f32 %s523, 0.0009765625
        %v525 = vmul.f32 %v491, %v491
        %v526 = vmul.f32 %v492, %v492
        %v527 = vmul.f32 %v493, %v493
        %v528 = vmul.f32 %v494, %v494
        %v529 = vmul.f32 %v495, %v495
        %v530 = vmul.f32 %v496, %v496
        %v531 = vmul.f32 %v497, %v497
        %v532 = vmul.f32 %v498, %v498
        %v533 = vsel %vm499, %v525, 0.0
        %v534 = vsel %vm499, %v526, 0.0
        %v535 = vadd.f32 %v533, %v534
        %v536 = vsel %vm499, %v527, 0.0
        %v537 = vadd.f32 %v535, %v536
        %v538 = vsel %vm499, %v528, 0.0
        %v539 = vadd.f32 %v537, %v538
        %v540 = vsel %vm499, %v529, 0.0
        %v541 = vadd.f32 %v539, %v540
        %v542 = vsel %vm499, %v530, 0.0
        %v543 = vadd.f32 %v541, %v542
        %v544 = vsel %vm499, %v531, 0.0
        %v545 = vadd.f32 %v543, %v544
        %v546 = vsel %vm499, %v532, 0.0
        %v547 = vadd.f32 %v545, %v546
        %548 = vadd.xlane.f32.xlu0 %v547
        %v549 = vpop.xlane.xlu0 %548
        %v550 = vrot.slane %v549, 4
        %v551 = vadd.f32 %v549, %v550
        %v552 = vrot.slane %v551, 2
        %v553 = vadd.f32 %v551, %v552
        %v554 = vrot.slane %v553, 1
        %v555 = vadd.f32 %v553, %v554
        %s556 = vtos %v555
        %s557 = smul.f32 %s556, 0.0009765625
        %s558 = smul.f32 %s524, %s524
        %s559 = ssub.f32 %s557, %s558
        %s560 = sadd.f32 %s559, 1e-05
        %v561 = vstv %s560
        %v562 = vrsqrt.pop %v561
        %s563 = vtos %v562
        %v564 = vstv %s524
        %v565 = vsub.f32 %v491, %v564
        %v566 = vsub.f32 %v492, %v564
        %v567 = vsub.f32 %v493, %v564
        %v568 = vsub.f32 %v494, %v564
        %v569 = vsub.f32 %v495, %v564
        %v570 = vsub.f32 %v496, %v564
        %v571 = vsub.f32 %v497, %v564
        %v572 = vsub.f32 %v498, %v564
        %v573 = vstv %s563
        %v574 = vmul.f32 %v565, %v573
        %v575 = vmul.f32 %v566, %v573
        %v576 = vmul.f32 %v567, %v573
        %v577 = vmul.f32 %v568, %v573
        %v578 = vmul.f32 %v569, %v573
        %v579 = vmul.f32 %v570, %v573
        %v580 = vmul.f32 %v571, %v573
        %v581 = vmul.f32 %v572, %v573
        %v582 = vld [vmem:[#allocation2] sm:$0x1]
        %v584 = vlaneseq
        %v585 = vshrl.u32 %v584, 7
        %v586 = vsub.s32 0, %v585
        %v587 = vrot.slane %v582, %v586
        %v589 = vmul.f32 %v574, %v587
        %v590 = vmul.f32 %v575, %v587
        %v591 = vmul.f32 %v576, %v587
        %v592 = vmul.f32 %v577, %v587
        %v593 = vmul.f32 %v578, %v587
        %v594 = vmul.f32 %v579, %v587
        %v595 = vmul.f32 %v580, %v587
        %v596 = vmul.f32 %v581, %v587
        %v597 = vld [vmem:[#allocation5] sm:$0x1]
        %v599 = vlaneseq
        %v600 = vshrl.u32 %v599, 7
        %v601 = vsub.s32 0, %v600
        %v602 = vrot.slane %v597, %v601
        %v604 = vadd.f32 %v589, %v602
        %v605 = vadd.f32 %v590, %v602
        %v606 = vadd.f32 %v591, %v602
        %v607 = vadd.f32 %v592, %v602
        %v608 = vadd.f32 %v593, %v602
        %v609 = vadd.f32 %v594, %v602
        %v610 = vadd.f32 %v595, %v602
        %v611 = vadd.f32 %v596, %v602
        %v612 = vld [vmem:[%s4] sm:$0xff]
        %v613 = vld [vmem:[%s4 + $0x8] sm:$0xff]
        %v614 = vld [vmem:[#allocation7] sm:$0x1]
        %v616 = vlaneseq
        %v617 = vshrl.u32 %v616, 7
        %v618 = vsub.s32 0, %v617
        %v619 = vrot.slane %v614, %v618
        %v622 = vsel %vm499, %v604, 0
        %v625 = vsel %vm499, %v605, 0
        %v628 = vsel %vm499, %v606, 0
        %v631 = vsel %vm499, %v607, 0
        %v634 = vsel %vm499, %v608, 0
        %v637 = vsel %vm499, %v609, 0
        %v640 = vsel %vm499, %v610, 0
        %v643 = vsel %vm499, %v611, 0
        %645 = vmatprep.subr.mxu0 0.0
        %646 = vmatpush1.msra.mxu0 0.0
        %647 = vmatprep.subr.mxu0 0.0
        %648 = vmatpush1.msra.mxu0 0.0
        %649 = vmatprep.subr.mxu0 0.0
        %650 = vmatpush1.msra.mxu0 0.0
        %651 = vmatprep.subr.mxu0 0.0
        %652 = vmatpush1.msra.mxu0 0.0
        %653 = vmatprep.subr.mxu0 0.0
        %654 = vmatpush1.msra.mxu0 0.0
        %655 = vmatprep.subr.mxu0 0.0
        %656 = vmatpush1.msra.mxu0 0.0
        %657 = vmatprep.subr.mxu0 0.0
        %658 = vmatpush1.msra.mxu0 0.0
        %659 = vmatprep.subr.mxu0 0.0
        %660 = vmatpush1.msra.mxu0 0.0
        %661 = vmatprep.subr.mxu0 0.0
        %662 = vmatpush1.msra.mxu0 0.0
        %663 = vmatprep.subr.mxu0 0.0
        %664 = vmatpush1.msra.mxu0 0.0
        %665 = vmatprep.subr.mxu0 0.0
        %666 = vmatpush1.msra.mxu0 0.0
        %667 = vmatprep.subr.mxu0 0.0
        %668 = vmatpush1.msra.mxu0 0.0
        %669 = vmatprep.subr.mxu0 0.0
        %670 = vmatpush1.msra.mxu0 0.0
        %671 = vmatprep.subr.mxu0 0.0
        %672 = vmatpush1.msra.mxu0 0.0
        %673 = vmatprep.subr.mxu0 0.0
        %674 = vmatpush1.msra.mxu0 %v613
        %675 = vmatprep.subr.mxu0 0.0
        %676 = vmatpush1.msra.mxu0 %v612
        %677 = vmatprep.subr.mxu0 0.0
        %678 = vmatpush2.msra.mxu0 0.0
        %679 = vmatprep.subr.mxu0 0.0
        %680 = vmatpush2.msra.mxu0 0.0
        %681 = vmatprep.subr.mxu0 0.0
        %682 = vmatpush2.msra.mxu0 0.0
        %683 = vmatprep.subr.mxu0 0.0
        %684 = vmatpush2.msra.mxu0 0.0
        %685 = vmatprep.subr.mxu0 0.0
        %686 = vmatpush2.msra.mxu0 0.0
        %687 = vmatprep.subr.mxu0 0.0
        %688 = vmatpush2.msra.mxu0 0.0
        %689 = vmatprep.subr.mxu0 0.0
        %690 = vmatpush2.msra.mxu0 0.0
        %691 = vmatprep.subr.mxu0 0.0
        %692 = vmatpush2.msra.mxu0 0.0
        %693 = vmatprep.subr.mxu0 0.0
        %694 = vmatpush2.msra.mxu0 0.0
        %695 = vmatprep.subr.mxu0 0.0
        %696 = vmatpush2.msra.mxu0 0.0
        %697 = vmatprep.subr.mxu0 0.0
        %698 = vmatpush2.msra.mxu0 0.0
        %699 = vmatprep.subr.mxu0 0.0
        %700 = vmatpush2.msra.mxu0 0.0
        %701 = vmatprep.subr.mxu0 0.0
        %702 = vmatpush2.msra.mxu0 0.0
        %703 = vmatprep.subr.mxu0 0.0
        %704 = vmatpush2.msra.mxu0 0.0
        %705 = vmatprep.subr.mxu0 0.0
        %706 = vmatpush2.msra.mxu0 0.0
        %707 = vmatprep.subr.mxu0 0.0
        %708 = vmatpush2.msra.mxu0 0.0
        %709 = vmatprep.mubr.f32.mxu0 0.0
        %710 = vmatmul.mubr.f32.gmra.mxu0 %v622
        %v711 = vpop.f32.mrf.mxu0
        %v712 = vadd.f32 %v619, %v711
        %v713 = vpop.f32.mrf.mxu0
        %714 = vmatprep.mubr.f32.mxu0 0.0
        %715 = vmatmul.mubr.f32.gmra.mxu0 %v625
        %v716 = vpop.f32.mrf.mxu0
        %v717 = vadd.f32 %v619, %v716
        %v718 = vpop.f32.mrf.mxu0
        %719 = vmatprep.mubr.f32.mxu0 0.0
        %720 = vmatmul.mubr.f32.gmra.mxu0 %v628
        %v721 = vpop.f32.mrf.mxu0
        %v722 = vadd.f32 %v619, %v721
        %v723 = vpop.f32.mrf.mxu0
        %724 = vmatprep.mubr.f32.mxu0 0.0
        %725 = vmatmul.mubr.f32.gmra.mxu0 %v631
        %v726 = vpop.f32.mrf.mxu0
        %v727 = vadd.f32 %v619, %v726
        %v728 = vpop.f32.mrf.mxu0
        %729 = vmatprep.mubr.f32.mxu0 0.0
        %730 = vmatmul.mubr.f32.gmra.mxu0 %v634
        %v731 = vpop.f32.mrf.mxu0
        %v732 = vadd.f32 %v619, %v731
        %v733 = vpop.f32.mrf.mxu0
        %734 = vmatprep.mubr.f32.mxu0 0.0
        %735 = vmatmul.mubr.f32.gmra.mxu0 %v637
        %v736 = vpop.f32.mrf.mxu0
        %v737 = vadd.f32 %v619, %v736
        %v738 = vpop.f32.mrf.mxu0
        %739 = vmatprep.mubr.f32.mxu0 0.0
        %740 = vmatmul.mubr.f32.gmra.mxu0 %v640
        %v741 = vpop.f32.mrf.mxu0
        %v742 = vadd.f32 %v619, %v741
        %v743 = vpop.f32.mrf.mxu0
        %744 = vmatprep.mubr.f32.mxu0 0.0
        %745 = vmatmul.mubr.f32.gmra.mxu0 %v643
        %v746 = vpop.f32.mrf.mxu0
        %v747 = vadd.f32 %v619, %v746
        %v748 = vpop.f32.mrf.mxu0
        %749 = vdwg.mxu0
        %v750 = vld [vmem:[%s6] sm:$0xff]
        %v751 = vld [vmem:[%s6 + $0x8] sm:$0xff]
        %v752 = vld [vmem:[%s7] sm:$0x1]
        %v754 = vlaneseq
        %v755 = vshrl.u32 %v754, 7
        %v756 = vsub.s32 0, %v755
        %v757 = vrot.slane %v752, %v756
        %759 = vmatprep.subr.mxu0 0.0
        %760 = vmatpush1.msra.mxu0 0.0
        %761 = vmatprep.subr.mxu0 0.0
        %762 = vmatpush1.msra.mxu0 0.0
        %763 = vmatprep.subr.mxu0 0.0
        %764 = vmatpush1.msra.mxu0 0.0
        %765 = vmatprep.subr.mxu0 0.0
        %766 = vmatpush1.msra.mxu0 0.0
        %767 = vmatprep.subr.mxu0 0.0
        %768 = vmatpush1.msra.mxu0 0.0
        %769 = vmatprep.subr.mxu0 0.0
        %770 = vmatpush1.msra.mxu0 0.0
        %771 = vmatprep.subr.mxu0 0.0
        %772 = vmatpush1.msra.mxu0 0.0
        %773 = vmatprep.subr.mxu0 0.0
        %774 = vmatpush1.msra.mxu0 0.0
        %775 = vmatprep.subr.mxu0 0.0
        %776 = vmatpush1.msra.mxu0 0.0
        %777 = vmatprep.subr.mxu0 0.0
        %778 = vmatpush1.msra.mxu0 0.0
        %779 = vmatprep.subr.mxu0 0.0
        %780 = vmatpush1.msra.mxu0 0.0
        %781 = vmatprep.subr.mxu0 0.0
        %782 = vmatpush1.msra.mxu0 0.0
        %783 = vmatprep.subr.mxu0 0.0
        %784 = vmatpush1.msra.mxu0 0.0
        %785 = vmatprep.subr.mxu0 0.0
        %786 = vmatpush1.msra.mxu0 0.0
        %787 = vmatprep.subr.mxu0 0.0
        %788 = vmatpush1.msra.mxu0 %v751
        %789 = vmatprep.subr.mxu0 0.0
        %790 = vmatpush1.msra.mxu0 %v750
        %791 = vmatprep.subr.mxu0 0.0
        %792 = vmatpush2.msra.mxu0 0.0
        %793 = vmatprep.subr.mxu0 0.0
        %794 = vmatpush2.msra.mxu0 0.0
        %795 = vmatprep.subr.mxu0 0.0
        %796 = vmatpush2.msra.mxu0 0.0
        %797 = vmatprep.subr.mxu0 0.0
        %798 = vmatpush2.msra.mxu0 0.0
        %799 = vmatprep.subr.mxu0 0.0
        %800 = vmatpush2.msra.mxu0 0.0
        %801 = vmatprep.subr.mxu0 0.0
        %802 = vmatpush2.msra.mxu0 0.0
        %803 = vmatprep.subr.mxu0 0.0
        %804 = vmatpush2.msra.mxu0 0.0
        %805 = vmatprep.subr.mxu0 0.0
        %806 = vmatpush2.msra.mxu0 0.0
        %807 = vmatprep.subr.mxu0 0.0
        %808 = vmatpush2.msra.mxu0 0.0
        %809 = vmatprep.subr.mxu0 0.0
        %810 = vmatpush2.msra.mxu0 0.0
        %811 = vmatprep.subr.mxu0 0.0
        %812 = vmatpush2.msra.mxu0 0.0
        %813 = vmatprep.subr.mxu0 0.0
        %814 = vmatpush2.msra.mxu0 0.0
        %815 = vmatprep.subr.mxu0 0.0
        %816 = vmatpush2.msra.mxu0 0.0
        %817 = vmatprep.subr.mxu0 0.0
        %818 = vmatpush2.msra.mxu0 0.0
        %819 = vmatprep.subr.mxu0 0.0
        %820 = vmatpush2.msra.mxu0 0.0
        %821 = vmatprep.subr.mxu0 0.0
        %822 = vmatpush2.msra.mxu0 0.0
        %823 = vmatprep.mubr.f32.mxu0 0.0
        %824 = vmatmul.mubr.f32.gmra.mxu0 %v622
        %v825 = vpop.f32.mrf.mxu0
        %v826 = vadd.f32 %v757, %v825
        %v827 = vpop.f32.mrf.mxu0
        %828 = vmatprep.mubr.f32.mxu0 0.0
        %829 = vmatmul.mubr.f32.gmra.mxu0 %v625
        %v830 = vpop.f32.mrf.mxu0
        %v831 = vadd.f32 %v757, %v830
        %v832 = vpop.f32.mrf.mxu0
        %833 = vmatprep.mubr.f32.mxu0 0.0
        %834 = vmatmul.mubr.f32.gmra.mxu0 %v628
        %v835 = vpop.f32.mrf.mxu0
        %v836 = vadd.f32 %v757, %v835
        %v837 = vpop.f32.mrf.mxu0
        %838 = vmatprep.mubr.f32.mxu0 0.0
        %839 = vmatmul.mubr.f32.gmra.mxu0 %v631
        %v840 = vpop.f32.mrf.mxu0
        %v841 = vadd.f32 %v757, %v840
        %v842 = vpop.f32.mrf.mxu0
        %843 = vmatprep.mubr.f32.mxu0 0.0
        %844 = vmatmul.mubr.f32.gmra.mxu0 %v634
        %v845 = vpop.f32.mrf.mxu0
        %v846 = vadd.f32 %v757, %v845
        %v847 = vpop.f32.mrf.mxu0
        %848 = vmatprep.mubr.f32.mxu0 0.0
        %849 = vmatmul.mubr.f32.gmra.mxu0 %v637
        %v850 = vpop.f32.mrf.mxu0
        %v851 = vadd.f32 %v757, %v850
        %v852 = vpop.f32.mrf.mxu0
        %853 = vmatprep.mubr.f32.mxu0 0.0
        %854 = vmatmul.mubr.f32.gmra.mxu0 %v640
        %v855 = vpop.f32.mrf.mxu0
        %v856 = vadd.f32 %v757, %v855
        %v857 = vpop.f32.mrf.mxu0
        %858 = vmatprep.mubr.f32.mxu0 0.0
        %859 = vmatmul.mubr.f32.gmra.mxu0 %v643
        %v860 = vpop.f32.mrf.mxu0
        %v861 = vadd.f32 %v757, %v860
        %v862 = vpop.f32.mrf.mxu0
        %863 = vdwg.mxu0
        %v864 = vld [vmem:[%s1] sm:$0xff]
        %vm865 = vcmask 523264
        %v867 = vsel %vm865, %v864, 0
        %869 = vmatprep.subr.mxu0 0.0
        %870 = vmatpush1.msra.mxu0 0.0
        %871 = vmatprep.subr.mxu0 0.0
        %872 = vmatpush1.msra.mxu0 0.0
        %873 = vmatprep.subr.mxu0 0.0
        %874 = vmatpush1.msra.mxu0 0.0
        %875 = vmatprep.subr.mxu0 0.0
        %876 = vmatpush1.msra.mxu0 0.0
        %877 = vmatprep.subr.mxu0 0.0
        %878 = vmatpush1.msra.mxu0 0.0
        %879 = vmatprep.subr.mxu0 0.0
        %880 = vmatpush1.msra.mxu0 0.0
        %881 = vmatprep.subr.mxu0 0.0
        %882 = vmatpush1.msra.mxu0 0.0
        %883 = vmatprep.subr.mxu0 0.0
        %884 = vmatpush1.msra.mxu0 0.0
        %885 = vmatprep.subr.mxu0 0.0
        %886 = vmatpush1.msra.mxu0 %v747
        %887 = vmatprep.subr.mxu0 0.0
        %888 = vmatpush1.msra.mxu0 %v742
        %889 = vmatprep.subr.mxu0 0.0
        %890 = vmatpush1.msra.mxu0 %v737
        %891 = vmatprep.subr.mxu0 0.0
        %892 = vmatpush1.msra.mxu0 %v732
        %893 = vmatprep.subr.mxu0 0.0
        %894 = vmatpush1.msra.mxu0 %v727
        %895 = vmatprep.subr.mxu0 0.0
        %896 = vmatpush1.msra.mxu0 %v722
        %897 = vmatprep.subr.mxu0 0.0
        %898 = vmatpush1.msra.mxu0 %v717
        %899 = vmatprep.subr.mxu0 0.0
        %900 = vmatpush1.msra.mxu0 %v712
        %901 = vmatprep.subr.mxu0 0.0
        %902 = vmatpush2.msra.mxu0 0.0
        %903 = vmatprep.subr.mxu0 0.0
        %904 = vmatpush2.msra.mxu0 0.0
        %905 = vmatprep.subr.mxu0 0.0
        %906 = vmatpush2.msra.mxu0 0.0
        %907 = vmatprep.subr.mxu0 0.0
        %908 = vmatpush2.msra.mxu0 0.0
        %909 = vmatprep.subr.mxu0 0.0
        %910 = vmatpush2.msra.mxu0 0.0
        %911 = vmatprep.subr.mxu0 0.0
        %912 = vmatpush2.msra.mxu0 0.0
        %913 = vmatprep.subr.mxu0 0.0
        %914 = vmatpush2.msra.mxu0 0.0
        %915 = vmatprep.subr.mxu0 0.0
        %916 = vmatpush2.msra.mxu0 0.0
        %917 = vmatprep.subr.mxu0 0.0
        %918 = vmatpush2.msra.mxu0 0.0
        %919 = vmatprep.subr.mxu0 0.0
        %920 = vmatpush2.msra.mxu0 0.0
        %921 = vmatprep.subr.mxu0 0.0
        %922 = vmatpush2.msra.mxu0 0.0
        %923 = vmatprep.subr.mxu0 0.0
        %924 = vmatpush2.msra.mxu0 0.0
        %925 = vmatprep.subr.mxu0 0.0
        %926 = vmatpush2.msra.mxu0 0.0
        %927 = vmatprep.subr.mxu0 0.0
        %928 = vmatpush2.msra.mxu0 0.0
        %929 = vmatprep.subr.mxu0 0.0
        %930 = vmatpush2.msra.mxu0 0.0
        %931 = vmatprep.subr.mxu0 0.0
        %932 = vmatpush2.msra.mxu0 0.0
        %933 = vmatprep.mubr.f32.mxu0 0.0
        %934 = vmatmul.mubr.f32.gmra.mxu0 %v867
        %v935 = vpop.f32.mrf.mxu0
        %v936 = vadd.f32 0.0, %v935
        %v937 = vpop.f32.mrf.mxu0
        %938 = vdwg.mxu0
        %939 = vmatprep.subr.mxu0 0.0
        %940 = vmatpush1.msra.mxu0 0.0
        %941 = vmatprep.subr.mxu0 0.0
        %942 = vmatpush1.msra.mxu0 0.0
        %943 = vmatprep.subr.mxu0 0.0
        %944 = vmatpush1.msra.mxu0 0.0
        %945 = vmatprep.subr.mxu0 0.0
        %946 = vmatpush1.msra.mxu0 0.0
        %947 = vmatprep.subr.mxu0 0.0
        %948 = vmatpush1.msra.mxu0 0.0
        %949 = vmatprep.subr.mxu0 0.0
        %950 = vmatpush1.msra.mxu0 0.0
        %951 = vmatprep.subr.mxu0 0.0
        %952 = vmatpush1.msra.mxu0 0.0
        %953 = vmatprep.subr.mxu0 0.0
        %954 = vmatpush1.msra.mxu0 0.0
        %955 = vmatprep.subr.mxu0 0.0
        %956 = vmatpush1.msra.mxu0 %v861
        %957 = vmatprep.subr.mxu0 0.0
        %958 = vmatpush1.msra.mxu0 %v856
        %959 = vmatprep.subr.mxu0 0.0
        %960 = vmatpush1.msra.mxu0 %v851
        %961 = vmatprep.subr.mxu0 0.0
        %962 = vmatpush1.msra.mxu0 %v846
        %963 = vmatprep.subr.mxu0 0.0
        %964 = vmatpush1.msra.mxu0 %v841
        %965 = vmatprep.subr.mxu0 0.0
        %966 = vmatpush1.msra.mxu0 %v836
        %967 = vmatprep.subr.mxu0 0.0
        %968 = vmatpush1.msra.mxu0 %v831
        %969 = vmatprep.subr.mxu0 0.0
        %970 = vmatpush1.msra.mxu0 %v826
        %971 = vmatprep.subr.mxu0 0.0
        %972 = vmatpush2.msra.mxu0 0.0
        %973 = vmatprep.subr.mxu0 0.0
        %974 = vmatpush2.msra.mxu0 0.0
        %975 = vmatprep.subr.mxu0 0.0
        %976 = vmatpush2.msra.mxu0 0.0
        %977 = vmatprep.subr.mxu0 0.0
        %978 = vmatpush2.msra.mxu0 0.0
        %979 = vmatprep.subr.mxu0 0.0
        %980 = vmatpush2.msra.mxu0 0.0
        %981 = vmatprep.subr.mxu0 0.0
        %982 = vmatpush2.msra.mxu0 0.0
        %983 = vmatprep.subr.mxu0 0.0
        %984 = vmatpush2.msra.mxu0 0.0
        %985 = vmatprep.subr.mxu0 0.0
        %986 = vmatpush2.msra.mxu0 0.0
        %987 = vmatprep.subr.mxu0 0.0
        %988 = vmatpush2.msra.mxu0 0.0
        %989 = vmatprep.subr.mxu0 0.0
        %990 = vmatpush2.msra.mxu0 0.0
        %991 = vmatprep.subr.mxu0 0.0
        %992 = vmatpush2.msra.mxu0 0.0
        %993 = vmatprep.subr.mxu0 0.0
        %994 = vmatpush2.msra.mxu0 0.0
        %995 = vmatprep.subr.mxu0 0.0
        %996 = vmatpush2.msra.mxu0 0.0
        %997 = vmatprep.subr.mxu0 0.0
        %998 = vmatpush2.msra.mxu0 0.0
        %999 = vmatprep.subr.mxu0 0.0
        %1000 = vmatpush2.msra.mxu0 0.0
        %1001 = vmatprep.subr.mxu0 0.0
        %1002 = vmatpush2.msra.mxu0 0.0
        %1003 = vmatprep.mubr.f32.mxu0 0.0
        %1004 = vmatmul.mubr.f32.gmra.mxu0 %v867
        %v1005 = vpop.f32.mrf.mxu0
        %v1006 = vadd.f32 0.0, %v1005
        %v1007 = vpop.f32.mrf.mxu0
        %1008 = vdwg.mxu0
        %s1009 = sld [smem:[#allocation11]]
        %s1010 = sld [smem:[#allocation11 + $0x1]]
        %v1011 = vlaneseq
        %v1012 = vand.u32 %v1011, 127
        %v1013 = vlaneseq
        %v1014 = vshrl.u32 %v1013, 7
        %vm1015 = vcmp.ge.s32.totalorder %v1012, 0
        %vm1016 = vcmp.lt.s32.totalorder %v1012, 8
        %vm1017 = vmand %vm1015, %vm1016
        %v1018 = vsel %vm1017, 1, 0
        %v1019 = vcvt.s32.f32 %v1018
        %v1020 = vmul.f32 %v712, %v1019
        %v1021 = vmul.f32 %v717, %v1019
        %v1022 = vmul.f32 %v722, %v1019
        %v1023 = vmul.f32 %v727, %v1019
        %v1024 = vmul.f32 %v732, %v1019
        %v1025 = vmul.f32 %v737, %v1019
        %v1026 = vmul.f32 %v742, %v1019
        %v1027 = vmul.f32 %v747, %v1019
        %v1028 = vmul.f32 %v826, %v1019
        %v1029 = vmul.f32 %v831, %v1019
        %v1030 = vmul.f32 %v836, %v1019
        %v1031 = vmul.f32 %v841, %v1019
        %v1032 = vmul.f32 %v846, %v1019
        %v1033 = vmul.f32 %v851, %v1019
        %v1034 = vmul.f32 %v856, %v1019
        %v1035 = vmul.f32 %v861, %v1019
        %v1036 = vmul.f32 %v936, %v1019
        %v1037 = vmul.f32 %v1006, %v1019
        %v1038 = vmul.f32 %v1036, %v1036
        %v1039 = vsel %vm499, %v1038, 0.0
        %1040 = vadd.xlane.f32.xlu0 %v1039
        %v1041 = vpop.xlane.xlu0 %1040
        %v1042 = vmax.f32 %v1041, 1e-24
        %v1043 = vrsqrt.pop %v1042
        %v1044 = vmul.f32 %v1036, %v1043
        %v1045 = vmul.f32 %v1020, %v1020
        %v1046 = vmul.f32 %v1021, %v1021
        %v1047 = vmul.f32 %v1022, %v1022
        %v1048 = vmul.f32 %v1023, %v1023
        %v1049 = vmul.f32 %v1024, %v1024
        %v1050 = vmul.f32 %v1025, %v1025
        %v1051 = vmul.f32 %v1026, %v1026
        %v1052 = vmul.f32 %v1027, %v1027
        %v1053 = vsel %vm499, %v1045, 0.0
        %1054 = vadd.xlane.f32.xlu0 %v1053
        %v1055 = vpop.xlane.xlu0 %1054
        %v1056 = vsel %vm499, %v1046, 0.0
        %1057 = vadd.xlane.f32.xlu0 %v1056
        %v1058 = vpop.xlane.xlu0 %1057
        %v1059 = vsel %vm499, %v1047, 0.0
        %1060 = vadd.xlane.f32.xlu0 %v1059
        %v1061 = vpop.xlane.xlu0 %1060
        %v1062 = vsel %vm499, %v1048, 0.0
        %1063 = vadd.xlane.f32.xlu0 %v1062
        %v1064 = vpop.xlane.xlu0 %1063
        %v1065 = vsel %vm499, %v1049, 0.0
        %1066 = vadd.xlane.f32.xlu0 %v1065
        %v1067 = vpop.xlane.xlu0 %1066
        %v1068 = vsel %vm499, %v1050, 0.0
        %1069 = vadd.xlane.f32.xlu0 %v1068
        %v1070 = vpop.xlane.xlu0 %1069
        %v1071 = vsel %vm499, %v1051, 0.0
        %1072 = vadd.xlane.f32.xlu0 %v1071
        %v1073 = vpop.xlane.xlu0 %1072
        %v1074 = vsel %vm499, %v1052, 0.0
        %1075 = vadd.xlane.f32.xlu0 %v1074
        %v1076 = vpop.xlane.xlu0 %1075
        %v1077 = vmax.f32 %v1055, 1e-24
        %v1078 = vmax.f32 %v1058, 1e-24
        %v1079 = vmax.f32 %v1061, 1e-24
        %v1080 = vmax.f32 %v1064, 1e-24
        %v1081 = vmax.f32 %v1067, 1e-24
        %v1082 = vmax.f32 %v1070, 1e-24
        %v1083 = vmax.f32 %v1073, 1e-24
        %v1084 = vmax.f32 %v1076, 1e-24
        %v1085 = vrsqrt.pop %v1077
        %v1086 = vrsqrt.pop %v1078
        %v1087 = vrsqrt.pop %v1079
        %v1088 = vrsqrt.pop %v1080
        %v1089 = vrsqrt.pop %v1081
        %v1090 = vrsqrt.pop %v1082
        %v1091 = vrsqrt.pop %v1083
        %v1092 = vrsqrt.pop %v1084
        %v1093 = vmul.f32 %v1020, %v1085
        %v1094 = vmul.f32 %v1021, %v1086
        %v1095 = vmul.f32 %v1022, %v1087
        %v1096 = vmul.f32 %v1023, %v1088
        %v1097 = vmul.f32 %v1024, %v1089
        %v1098 = vmul.f32 %v1025, %v1090
        %v1099 = vmul.f32 %v1026, %v1091
        %v1100 = vmul.f32 %v1027, %v1092
        %v1102 = vsel %vm499, %v1044, 0
        %v1105 = vsel %vm499, %v1093, 0
        %v1108 = vsel %vm499, %v1094, 0
        %v1111 = vsel %vm499, %v1095, 0
        %v1114 = vsel %vm499, %v1096, 0
        %v1117 = vsel %vm499, %v1097, 0
        %v1120 = vsel %vm499, %v1098, 0
        %v1123 = vsel %vm499, %v1099, 0
        %v1126 = vsel %vm499, %v1100, 0
        %1128 = vmatprep.subr.mxu0 0.0
        %1129 = vmatpush1.xpose.msra.mxu0 0.0
        %1130 = vmatprep.subr.mxu0 0.0
        %1131 = vmatpush1.xpose.msra.mxu0 0.0
        %1132 = vmatprep.subr.mxu0 0.0
        %1133 = vmatpush1.xpose.msra.mxu0 0.0
        %1134 = vmatprep.subr.mxu0 0.0
        %1135 = vmatpush1.xpose.msra.mxu0 0.0
        %1136 = vmatprep.subr.mxu0 0.0
        %1137 = vmatpush1.xpose.msra.mxu0 0.0
        %1138 = vmatprep.subr.mxu0 0.0
        %1139 = vmatpush1.xpose.msra.mxu0 0.0
        %1140 = vmatprep.subr.mxu0 0.0
        %1141 = vmatpush1.xpose.msra.mxu0 0.0
        %1142 = vmatprep.subr.mxu0 0.0
        %1143 = vmatpush1.xpose.msra.mxu0 0.0
        %1144 = vmatprep.subr.mxu0 0.0
        %1145 = vmatpush1.xpose.msra.mxu0 %v1126
        %1146 = vmatprep.subr.mxu0 0.0
        %1147 = vmatpush1.xpose.msra.mxu0 %v1123
        %1148 = vmatprep.subr.mxu0 0.0
        %1149 = vmatpush1.xpose.msra.mxu0 %v1120
        %1150 = vmatprep.subr.mxu0 0.0
        %1151 = vmatpush1.xpose.msra.mxu0 %v1117
        %1152 = vmatprep.subr.mxu0 0.0
        %1153 = vmatpush1.xpose.msra.mxu0 %v1114
        %1154 = vmatprep.subr.mxu0 0.0
        %1155 = vmatpush1.xpose.msra.mxu0 %v1111
        %1156 = vmatprep.subr.mxu0 0.0
        %1157 = vmatpush1.xpose.msra.mxu0 %v1108
        %1158 = vmatprep.subr.mxu0 0.0
        %1159 = vmatpush1.xpose.msra.mxu0 %v1105
        %1160 = vmatprep.subr.mxu0 0.0
        %1161 = vmatpush2.xpose.msra.mxu0 0.0
        %1162 = vmatprep.subr.mxu0 0.0
        %1163 = vmatpush2.xpose.msra.mxu0 0.0
        %1164 = vmatprep.subr.mxu0 0.0
        %1165 = vmatpush2.xpose.msra.mxu0 0.0
        %1166 = vmatprep.subr.mxu0 0.0
        %1167 = vmatpush2.xpose.msra.mxu0 0.0
        %1168 = vmatprep.subr.mxu0 0.0
        %1169 = vmatpush2.xpose.msra.mxu0 0.0
        %1170 = vmatprep.subr.mxu0 0.0
        %1171 = vmatpush2.xpose.msra.mxu0 0.0
        %1172 = vmatprep.subr.mxu0 0.0
        %1173 = vmatpush2.xpose.msra.mxu0 0.0
        %1174 = vmatprep.subr.mxu0 0.0
        %1175 = vmatpush2.xpose.msra.mxu0 0.0
        %1176 = vmatprep.subr.mxu0 0.0
        %1177 = vmatpush2.xpose.msra.mxu0 0.0
        %1178 = vmatprep.subr.mxu0 0.0
        %1179 = vmatpush2.xpose.msra.mxu0 0.0
        %1180 = vmatprep.subr.mxu0 0.0
        %1181 = vmatpush2.xpose.msra.mxu0 0.0
        %1182 = vmatprep.subr.mxu0 0.0
        %1183 = vmatpush2.xpose.msra.mxu0 0.0
        %1184 = vmatprep.subr.mxu0 0.0
        %1185 = vmatpush2.xpose.msra.mxu0 0.0
        %1186 = vmatprep.subr.mxu0 0.0
        %1187 = vmatpush2.xpose.msra.mxu0 0.0
        %1188 = vmatprep.subr.mxu0 0.0
        %1189 = vmatpush2.xpose.msra.mxu0 0.0
        %1190 = vmatprep.subr.mxu0 0.0
        %1191 = vmatpush2.xpose.msra.mxu0 0.0
        %1192 = vmatprep.mubr.f32.mxu0 0.0
        %1193 = vmatmul.mubr.f32.gmra.mxu0 %v1102
        %v1194 = vpop.f32.mrf.mxu0
        %v1195 = vadd.f32 0.0, %v1194
        %v1196 = vpop.f32.mrf.mxu0
        %1197 = vdwg.mxu0
        %v1198 = vstv %s1009
        %v1199 = vmul.f32 %v1198, %v1195
        %v1200 = vstv %s1010
        %v1201 = vadd.f32 %v1200, %v1199
        %v1202 = vxor.u32 %v1201, 2147483648
        %v1203 = vmul.f32 %v1202, 1.442695
        %v1204 = vpow.pop %v1203
        %v1205 = vadd.f32 %v1204, 1.0
        %v1206 = vrcp.pop %v1205
        %v1207 = vmul.f32 1.0, %v1206
        %v1208 = vsel %vm865, %v1207, -inf
        %v1209 = vrot.slane %v1208, 4
        %v1210 = vmax.f32 %v1208, %v1209
        %v1211 = vrot.slane %v1210, 2
        %v1212 = vmax.f32 %v1210, %v1211
        %v1213 = vrot.slane %v1212, 1
        %v1214 = vmax.f32 %v1212, %v1213
        %vm1215 = vcmp.ge.f32.partialorder %v1207, %v1214
        %v1216 = vsel %vm1215, %v1014, 8
        %v1217 = vsel %vm865, %v1216, 2147483647
        %v1218 = vrot.slane %v1217, 4
        %vm1219 = vcmp.lt.s32.totalorder %v1217, %v1218
        %v1220 = vsel %vm1219, %v1217, %v1218
        %v1221 = vrot.slane %v1220, 2
        %vm1222 = vcmp.lt.s32.totalorder %v1220, %v1221
        %v1223 = vsel %vm1222, %v1220, %v1221
        %v1224 = vrot.slane %v1223, 1
        %vm1225 = vcmp.lt.s32.totalorder %v1223, %v1224
        %v1226 = vsel %vm1225, %v1223, %v1224
        %vm1227 = vcmp.eq.s32.totalorder %v1014, %v1226
        %v1228 = vsel %vm1227, %v1207, 0.0
        %v1230 = vsel %vm865, %v1228, 0
        %1232 = vmatprep.subr.mxu0 0.0
        %1233 = vmatpush1.msra.mxu0 0.0
        %1234 = vmatprep.subr.mxu0 0.0
        %1235 = vmatpush1.msra.mxu0 0.0
        %1236 = vmatprep.subr.mxu0 0.0
        %1237 = vmatpush1.msra.mxu0 0.0
        %1238 = vmatprep.subr.mxu0 0.0
        %1239 = vmatpush1.msra.mxu0 0.0
        %1240 = vmatprep.subr.mxu0 0.0
        %1241 = vmatpush1.msra.mxu0 0.0
        %1242 = vmatprep.subr.mxu0 0.0
        %1243 = vmatpush1.msra.mxu0 0.0
        %1244 = vmatprep.subr.mxu0 0.0
        %1245 = vmatpush1.msra.mxu0 0.0
        %1246 = vmatprep.subr.mxu0 0.0
        %1247 = vmatpush1.msra.mxu0 0.0
        %1248 = vmatprep.subr.mxu0 0.0
        %1249 = vmatpush1.msra.mxu0 %v1035
        %1250 = vmatprep.subr.mxu0 0.0
        %1251 = vmatpush1.msra.mxu0 %v1034
        %1252 = vmatprep.subr.mxu0 0.0
        %1253 = vmatpush1.msra.mxu0 %v1033
        %1254 = vmatprep.subr.mxu0 0.0
        %1255 = vmatpush1.msra.mxu0 %v1032
        %1256 = vmatprep.subr.mxu0 0.0
        %1257 = vmatpush1.msra.mxu0 %v1031
        %1258 = vmatprep.subr.mxu0 0.0
        %1259 = vmatpush1.msra.mxu0 %v1030
        %1260 = vmatprep.subr.mxu0 0.0
        %1261 = vmatpush1.msra.mxu0 %v1029
        %1262 = vmatprep.subr.mxu0 0.0
        %1263 = vmatpush1.msra.mxu0 %v1028
        %1264 = vmatprep.subr.mxu0 0.0
        %1265 = vmatpush2.msra.mxu0 0.0
        %1266 = vmatprep.subr.mxu0 0.0
        %1267 = vmatpush2.msra.mxu0 0.0
        %1268 = vmatprep.subr.mxu0 0.0
        %1269 = vmatpush2.msra.mxu0 0.0
        %1270 = vmatprep.subr.mxu0 0.0
        %1271 = vmatpush2.msra.mxu0 0.0
        %1272 = vmatprep.subr.mxu0 0.0
        %1273 = vmatpush2.msra.mxu0 0.0
        %1274 = vmatprep.subr.mxu0 0.0
        %1275 = vmatpush2.msra.mxu0 0.0
        %1276 = vmatprep.subr.mxu0 0.0
        %1277 = vmatpush2.msra.mxu0 0.0
        %1278 = vmatprep.subr.mxu0 0.0
        %1279 = vmatpush2.msra.mxu0 0.0
        %1280 = vmatprep.subr.mxu0 0.0
        %1281 = vmatpush2.msra.mxu0 0.0
        %1282 = vmatprep.subr.mxu0 0.0
        %1283 = vmatpush2.msra.mxu0 0.0
        %1284 = vmatprep.subr.mxu0 0.0
        %1285 = vmatpush2.msra.mxu0 0.0
        %1286 = vmatprep.subr.mxu0 0.0
        %1287 = vmatpush2.msra.mxu0 0.0
        %1288 = vmatprep.subr.mxu0 0.0
        %1289 = vmatpush2.msra.mxu0 0.0
        %1290 = vmatprep.subr.mxu0 0.0
        %1291 = vmatpush2.msra.mxu0 0.0
        %1292 = vmatprep.subr.mxu0 0.0
        %1293 = vmatpush2.msra.mxu0 0.0
        %1294 = vmatprep.subr.mxu0 0.0
        %1295 = vmatpush2.msra.mxu0 0.0
        %1296 = vmatprep.mubr.f32.mxu0 0.0
        %1297 = vmatmul.mubr.f32.gmra.mxu0 %v1230
        %v1298 = vpop.f32.mrf.mxu0
        %v1299 = vadd.f32 %v1037, %v1298
        %v1300 = vpop.f32.mrf.mxu0
        %1301 = vdwg.mxu0
        %v1302 = vsel %vm865, %v1228, 0.0
        %1303 = vadd.xlane.f32.xlu0 %v1302
        %v1304 = vpop.xlane.xlu0 %1303
        %v1305 = vadd.f32 %v1304, 1.0
        %v1306 = vrcp.pop %v1305
        %v1307 = vmul.f32 %v1299, %v1306
        %vm1308 = vcmp.ge.s32.totalorder %v1012, 8
        %vm1309 = vcmp.lt.s32.totalorder %v1012, 16
        %vm1310 = vmand %vm1308, %vm1309
        %v1311 = vsel %vm1310, 1, 0
        %v1312 = vcvt.s32.f32 %v1311
        %v1313 = vmul.f32 %v712, %v1312
        %v1314 = vmul.f32 %v717, %v1312
        %v1315 = vmul.f32 %v722, %v1312
        %v1316 = vmul.f32 %v727, %v1312
        %v1317 = vmul.f32 %v732, %v1312
        %v1318 = vmul.f32 %v737, %v1312
        %v1319 = vmul.f32 %v742, %v1312
        %v1320 = vmul.f32 %v747, %v1312
        %v1321 = vmul.f32 %v826, %v1312
        %v1322 = vmul.f32 %v831, %v1312
        %v1323 = vmul.f32 %v836, %v1312
        %v1324 = vmul.f32 %v841, %v1312
        %v1325 = vmul.f32 %v846, %v1312
        %v1326 = vmul.f32 %v851, %v1312
        %v1327 = vmul.f32 %v856, %v1312
        %v1328 = vmul.f32 %v861, %v1312
        %v1329 = vmul.f32 %v936, %v1312
        %v1330 = vmul.f32 %v1006, %v1312
        %v1331 = vmul.f32 %v1329, %v1329
        %v1332 = vsel %vm499, %v1331, 0.0
        %1333 = vadd.xlane.f32.xlu0 %v1332
        %v1334 = vpop.xlane.xlu0 %1333
        %v1335 = vmax.f32 %v1334, 1e-24
        %v1336 = vrsqrt.pop %v1335
        %v1337 = vmul.f32 %v1329, %v1336
        %v1338 = vmul.f32 %v1313, %v1313
        %v1339 = vmul.f32 %v1314, %v1314
        %v1340 = vmul.f32 %v1315, %v1315
        %v1341 = vmul.f32 %v1316, %v1316
        %v1342 = vmul.f32 %v1317, %v1317
        %v1343 = vmul.f32 %v1318, %v1318
        %v1344 = vmul.f32 %v1319, %v1319
        %v1345 = vmul.f32 %v1320, %v1320
        %v1346 = vsel %vm499, %v1338, 0.0
        %1347 = vadd.xlane.f32.xlu0 %v1346
        %v1348 = vpop.xlane.xlu0 %1347
        %v1349 = vsel %vm499, %v1339, 0.0
        %1350 = vadd.xlane.f32.xlu0 %v1349
        %v1351 = vpop.xlane.xlu0 %1350
        %v1352 = vsel %vm499, %v1340, 0.0
        %1353 = vadd.xlane.f32.xlu0 %v1352
        %v1354 = vpop.xlane.xlu0 %1353
        %v1355 = vsel %vm499, %v1341, 0.0
        %1356 = vadd.xlane.f32.xlu0 %v1355
        %v1357 = vpop.xlane.xlu0 %1356
        %v1358 = vsel %vm499, %v1342, 0.0
        %1359 = vadd.xlane.f32.xlu0 %v1358
        %v1360 = vpop.xlane.xlu0 %1359
        %v1361 = vsel %vm499, %v1343, 0.0
        %1362 = vadd.xlane.f32.xlu0 %v1361
        %v1363 = vpop.xlane.xlu0 %1362
        %v1364 = vsel %vm499, %v1344, 0.0
        %1365 = vadd.xlane.f32.xlu0 %v1364
        %v1366 = vpop.xlane.xlu0 %1365
        %v1367 = vsel %vm499, %v1345, 0.0
        %1368 = vadd.xlane.f32.xlu0 %v1367
        %v1369 = vpop.xlane.xlu0 %1368
        %v1370 = vmax.f32 %v1348, 1e-24
        %v1371 = vmax.f32 %v1351, 1e-24
        %v1372 = vmax.f32 %v1354, 1e-24
        %v1373 = vmax.f32 %v1357, 1e-24
        %v1374 = vmax.f32 %v1360, 1e-24
        %v1375 = vmax.f32 %v1363, 1e-24
        %v1376 = vmax.f32 %v1366, 1e-24
        %v1377 = vmax.f32 %v1369, 1e-24
        %v1378 = vrsqrt.pop %v1370
        %v1379 = vrsqrt.pop %v1371
        %v1380 = vrsqrt.pop %v1372
        %v1381 = vrsqrt.pop %v1373
        %v1382 = vrsqrt.pop %v1374
        %v1383 = vrsqrt.pop %v1375
        %v1384 = vrsqrt.pop %v1376
        %v1385 = vrsqrt.pop %v1377
        %v1386 = vmul.f32 %v1313, %v1378
        %v1387 = vmul.f32 %v1314, %v1379
        %v1388 = vmul.f32 %v1315, %v1380
        %v1389 = vmul.f32 %v1316, %v1381
        %v1390 = vmul.f32 %v1317, %v1382
        %v1391 = vmul.f32 %v1318, %v1383
        %v1392 = vmul.f32 %v1319, %v1384
        %v1393 = vmul.f32 %v1320, %v1385
        %v1395 = vsel %vm499, %v1337, 0
        %v1398 = vsel %vm499, %v1386, 0
        %v1401 = vsel %vm499, %v1387, 0
        %v1404 = vsel %vm499, %v1388, 0
        %v1407 = vsel %vm499, %v1389, 0
        %v1410 = vsel %vm499, %v1390, 0
        %v1413 = vsel %vm499, %v1391, 0
        %v1416 = vsel %vm499, %v1392, 0
        %v1419 = vsel %vm499, %v1393, 0
        %1421 = vmatprep.subr.mxu0 0.0
        %1422 = vmatpush1.xpose.msra.mxu0 0.0
        %1423 = vmatprep.subr.mxu0 0.0
        %1424 = vmatpush1.xpose.msra.mxu0 0.0
        %1425 = vmatprep.subr.mxu0 0.0
        %1426 = vmatpush1.xpose.msra.mxu0 0.0
        %1427 = vmatprep.subr.mxu0 0.0
        %1428 = vmatpush1.xpose.msra.mxu0 0.0
        %1429 = vmatprep.subr.mxu0 0.0
        %1430 = vmatpush1.xpose.msra.mxu0 0.0
        %1431 = vmatprep.subr.mxu0 0.0
        %1432 = vmatpush1.xpose.msra.mxu0 0.0
        %1433 = vmatprep.subr.mxu0 0.0
        %1434 = vmatpush1.xpose.msra.mxu0 0.0
        %1435 = vmatprep.subr.mxu0 0.0
        %1436 = vmatpush1.xpose.msra.mxu0 0.0
        %1437 = vmatprep.subr.mxu0 0.0
        %1438 = vmatpush1.xpose.msra.mxu0 %v1419
        %1439 = vmatprep.subr.mxu0 0.0
        %1440 = vmatpush1.xpose.msra.mxu0 %v1416
        %1441 = vmatprep.subr.mxu0 0.0
        %1442 = vmatpush1.xpose.msra.mxu0 %v1413
        %1443 = vmatprep.subr.mxu0 0.0
        %1444 = vmatpush1.xpose.msra.mxu0 %v1410
        %1445 = vmatprep.subr.mxu0 0.0
        %1446 = vmatpush1.xpose.msra.mxu0 %v1407
        %1447 = vmatprep.subr.mxu0 0.0
        %1448 = vmatpush1.xpose.msra.mxu0 %v1404
        %1449 = vmatprep.subr.mxu0 0.0
        %1450 = vmatpush1.xpose.msra.mxu0 %v1401
        %1451 = vmatprep.subr.mxu0 0.0
        %1452 = vmatpush1.xpose.msra.mxu0 %v1398
        %1453 = vmatprep.subr.mxu0 0.0
        %1454 = vmatpush2.xpose.msra.mxu0 0.0
        %1455 = vmatprep.subr.mxu0 0.0
        %1456 = vmatpush2.xpose.msra.mxu0 0.0
        %1457 = vmatprep.subr.mxu0 0.0
        %1458 = vmatpush2.xpose.msra.mxu0 0.0
        %1459 = vmatprep.subr.mxu0 0.0
        %1460 = vmatpush2.xpose.msra.mxu0 0.0
        %1461 = vmatprep.subr.mxu0 0.0
        %1462 = vmatpush2.xpose.msra.mxu0 0.0
        %1463 = vmatprep.subr.mxu0 0.0
        %1464 = vmatpush2.xpose.msra.mxu0 0.0
        %1465 = vmatprep.subr.mxu0 0.0
        %1466 = vmatpush2.xpose.msra.mxu0 0.0
        %1467 = vmatprep.subr.mxu0 0.0
        %1468 = vmatpush2.xpose.msra.mxu0 0.0
        %1469 = vmatprep.subr.mxu0 0.0
        %1470 = vmatpush2.xpose.msra.mxu0 0.0
        %1471 = vmatprep.subr.mxu0 0.0
        %1472 = vmatpush2.xpose.msra.mxu0 0.0
        %1473 = vmatprep.subr.mxu0 0.0
        %1474 = vmatpush2.xpose.msra.mxu0 0.0
        %1475 = vmatprep.subr.mxu0 0.0
        %1476 = vmatpush2.xpose.msra.mxu0 0.0
        %1477 = vmatprep.subr.mxu0 0.0
        %1478 = vmatpush2.xpose.msra.mxu0 0.0
        %1479 = vmatprep.subr.mxu0 0.0
        %1480 = vmatpush2.xpose.msra.mxu0 0.0
        %1481 = vmatprep.subr.mxu0 0.0
        %1482 = vmatpush2.xpose.msra.mxu0 0.0
        %1483 = vmatprep.subr.mxu0 0.0
        %1484 = vmatpush2.xpose.msra.mxu0 0.0
        %1485 = vmatprep.mubr.f32.mxu0 0.0
        %1486 = vmatmul.mubr.f32.gmra.mxu0 %v1395
        %v1487 = vpop.f32.mrf.mxu0
        %v1488 = vadd.f32 0.0, %v1487
        %v1489 = vpop.f32.mrf.mxu0
        %1490 = vdwg.mxu0
        %v1491 = vmul.f32 %v1198, %v1488
        %v1492 = vadd.f32 %v1200, %v1491
        %v1493 = vxor.u32 %v1492, 2147483648
        %v1494 = vmul.f32 %v1493, 1.442695
        %v1495 = vpow.pop %v1494
        %v1496 = vadd.f32 %v1495, 1.0
        %v1497 = vrcp.pop %v1496
        %v1498 = vmul.f32 1.0, %v1497
        %v1499 = vsel %vm865, %v1498, -inf
        %v1500 = vrot.slane %v1499, 4
        %v1501 = vmax.f32 %v1499, %v1500
        %v1502 = vrot.slane %v1501, 2
        %v1503 = vmax.f32 %v1501, %v1502
        %v1504 = vrot.slane %v1503, 1
        %v1505 = vmax.f32 %v1503, %v1504
        %vm1506 = vcmp.ge.f32.partialorder %v1498, %v1505
        %v1507 = vsel %vm1506, %v1014, 8
        %v1508 = vsel %vm865, %v1507, 2147483647
        %v1509 = vrot.slane %v1508, 4
        %vm1510 = vcmp.lt.s32.totalorder %v1508, %v1509
        %v1511 = vsel %vm1510, %v1508, %v1509
        %v1512 = vrot.slane %v1511, 2
        %vm1513 = vcmp.lt.s32.totalorder %v1511, %v1512
        %v1514 = vsel %vm1513, %v1511, %v1512
        %v1515 = vrot.slane %v1514, 1
        %vm1516 = vcmp.lt.s32.totalorder %v1514, %v1515
        %v1517 = vsel %vm1516, %v1514, %v1515
        %vm1518 = vcmp.eq.s32.totalorder %v1014, %v1517
        %v1519 = vsel %vm1518, %v1498, 0.0
        %v1521 = vsel %vm865, %v1519, 0
        %1523 = vmatprep.subr.mxu0 0.0
        %1524 = vmatpush1.msra.mxu0 0.0
        %1525 = vmatprep.subr.mxu0 0.0
        %1526 = vmatpush1.msra.mxu0 0.0
        %1527 = vmatprep.subr.mxu0 0.0
        %1528 = vmatpush1.msra.mxu0 0.0
        %1529 = vmatprep.subr.mxu0 0.0
        %1530 = vmatpush1.msra.mxu0 0.0
        %1531 = vmatprep.subr.mxu0 0.0
        %1532 = vmatpush1.msra.mxu0 0.0
        %1533 = vmatprep.subr.mxu0 0.0
        %1534 = vmatpush1.msra.mxu0 0.0
        %1535 = vmatprep.subr.mxu0 0.0
        %1536 = vmatpush1.msra.mxu0 0.0
        %1537 = vmatprep.subr.mxu0 0.0
        %1538 = vmatpush1.msra.mxu0 0.0
        %1539 = vmatprep.subr.mxu0 0.0
        %1540 = vmatpush1.msra.mxu0 %v1328
        %1541 = vmatprep.subr.mxu0 0.0
        %1542 = vmatpush1.msra.mxu0 %v1327
        %1543 = vmatprep.subr.mxu0 0.0
        %1544 = vmatpush1.msra.mxu0 %v1326
        %1545 = vmatprep.subr.mxu0 0.0
        %1546 = vmatpush1.msra.mxu0 %v1325
        %1547 = vmatprep.subr.mxu0 0.0
        %1548 = vmatpush1.msra.mxu0 %v1324
        %1549 = vmatprep.subr.mxu0 0.0
        %1550 = vmatpush1.msra.mxu0 %v1323
        %1551 = vmatprep.subr.mxu0 0.0
        %1552 = vmatpush1.msra.mxu0 %v1322
        %1553 = vmatprep.subr.mxu0 0.0
        %1554 = vmatpush1.msra.mxu0 %v1321
        %1555 = vmatprep.subr.mxu0 0.0
        %1556 = vmatpush2.msra.mxu0 0.0
        %1557 = vmatprep.subr.mxu0 0.0
        %1558 = vmatpush2.msra.mxu0 0.0
        %1559 = vmatprep.subr.mxu0 0.0
        %1560 = vmatpush2.msra.mxu0 0.0
        %1561 = vmatprep.subr.mxu0 0.0
        %1562 = vmatpush2.msra.mxu0 0.0
        %1563 = vmatprep.subr.mxu0 0.0
        %1564 = vmatpush2.msra.mxu0 0.0
        %1565 = vmatprep.subr.mxu0 0.0
        %1566 = vmatpush2.msra.mxu0 0.0
        %1567 = vmatprep.subr.mxu0 0.0
        %1568 = vmatpush2.msra.mxu0 0.0
        %1569 = vmatprep.subr.mxu0 0.0
        %1570 = vmatpush2.msra.mxu0 0.0
        %1571 = vmatprep.subr.mxu0 0.0
        %1572 = vmatpush2.msra.mxu0 0.0
        %1573 = vmatprep.subr.mxu0 0.0
        %1574 = vmatpush2.msra.mxu0 0.0
        %1575 = vmatprep.subr.mxu0 0.0
        %1576 = vmatpush2.msra.mxu0 0.0
        %1577 = vmatprep.subr.mxu0 0.0
        %1578 = vmatpush2.msra.mxu0 0.0
        %1579 = vmatprep.subr.mxu0 0.0
        %1580 = vmatpush2.msra.mxu0 0.0
        %1581 = vmatprep.subr.mxu0 0.0
        %1582 = vmatpush2.msra.mxu0 0.0
        %1583 = vmatprep.subr.mxu0 0.0
        %1584 = vmatpush2.msra.mxu0 0.0
        %1585 = vmatprep.subr.mxu0 0.0
        %1586 = vmatpush2.msra.mxu0 0.0
        %1587 = vmatprep.mubr.f32.mxu0 0.0
        %1588 = vmatmul.mubr.f32.gmra.mxu0 %v1521
        %v1589 = vpop.f32.mrf.mxu0
        %v1590 = vadd.f32 %v1330, %v1589
        %v1591 = vpop.f32.mrf.mxu0
        %1592 = vdwg.mxu0
        %v1593 = vsel %vm865, %v1519, 0.0
        %1594 = vadd.xlane.f32.xlu0 %v1593
        %v1595 = vpop.xlane.xlu0 %1594
        %v1596 = vadd.f32 %v1595, 1.0
        %v1597 = vrcp.pop %v1596
        %v1598 = vmul.f32 %v1590, %v1597
        %1599 = vxpose.xlu0.b32.start [1/16] %v1519, 128
        %1600 = vxpose.xlu0.b32.cont [2/16] 0.0, 128
        %1601 = vxpose.xlu0.b32.cont [3/16] 0.0, 128
        %1602 = vxpose.xlu0.b32.cont [4/16] 0.0, 128
        %1603 = vxpose.xlu0.b32.cont [5/16] 0.0, 128
        %1604 = vxpose.xlu0.b32.cont [6/16] 0.0, 128
        %1605 = vxpose.xlu0.b32.cont [7/16] 0.0, 128
        %1606 = vxpose.xlu0.b32.cont [8/16] 0.0, 128
        %1607 = vxpose.xlu0.b32.cont [9/16] 0.0, 128
        %1608 = vxpose.xlu0.b32.cont [10/16] 0.0, 128
        %1609 = vxpose.xlu0.b32.cont [11/16] 0.0, 128
        %1610 = vxpose.xlu0.b32.cont [12/16] 0.0, 128
        %1611 = vxpose.xlu0.b32.cont [13/16] 0.0, 128
        %1612 = vxpose.xlu0.b32.cont [14/16] 0.0, 128
        %1613 = vxpose.xlu0.b32.cont [15/16] 0.0, 128
        %1614 = vxpose.xlu0.b32.end [16/16] 0.0, 128
        %v1615 = vpop.trf.xlu0
        %v1616 = vpop.trf.xlu0
        %v1617 = vpop.trf.xlu0
        %v1618 = vpop.trf.xlu0
        %v1619 = vpop.trf.xlu0
        %v1620 = vpop.trf.xlu0
        %v1621 = vpop.trf.xlu0
        %v1622 = vpop.trf.xlu0
        %v1623 = vpop.trf.xlu0
        %v1624 = vpop.trf.xlu0
        %v1625 = vpop.trf.xlu0
        %v1626 = vpop.trf.xlu0
        %v1627 = vpop.trf.xlu0
        %v1628 = vpop.trf.xlu0
        %v1629 = vpop.trf.xlu0
        %v1630 = vpop.trf.xlu0
        %vm1631 = vcmask 64512
        %v1633 = vsel %vm1631, %v1615, 0
        %v1636 = vsel %vm1631, %v1616, 0
        %v1639 = vsel %vm1631, %v1617, 0
        %v1642 = vsel %vm1631, %v1618, 0
        %v1645 = vsel %vm1631, %v1619, 0
        %v1648 = vsel %vm1631, %v1620, 0
        %v1651 = vsel %vm1631, %v1621, 0
        %v1654 = vsel %vm1631, %v1622, 0
        %1656 = vmatprep.subr.mxu0 0.0
        %1657 = vmatpush1.msra.mxu0 0.0
        %1658 = vmatprep.subr.mxu0 0.0
        %1659 = vmatpush1.msra.mxu0 0.0
        %1660 = vmatprep.subr.mxu0 0.0
        %1661 = vmatpush1.msra.mxu0 0.0
        %1662 = vmatprep.subr.mxu0 0.0
        %1663 = vmatpush1.msra.mxu0 0.0
        %1664 = vmatprep.subr.mxu0 0.0
        %1665 = vmatpush1.msra.mxu0 0.0
        %1666 = vmatprep.subr.mxu0 0.0
        %1667 = vmatpush1.msra.mxu0 0.0
        %1668 = vmatprep.subr.mxu0 0.0
        %1669 = vmatpush1.msra.mxu0 0.0
        %1670 = vmatprep.subr.mxu0 0.0
        %1671 = vmatpush1.msra.mxu0 0.0
        %1672 = vmatprep.subr.mxu0 0.0
        %1673 = vmatpush1.msra.mxu0 0.0
        %1674 = vmatprep.subr.mxu0 0.0
        %1675 = vmatpush1.msra.mxu0 0.0
        %1676 = vmatprep.subr.mxu0 0.0
        %1677 = vmatpush1.msra.mxu0 0.0
        %1678 = vmatprep.subr.mxu0 0.0
        %1679 = vmatpush1.msra.mxu0 0.0
        %1680 = vmatprep.subr.mxu0 0.0
        %1681 = vmatpush1.msra.mxu0 0.0
        %1682 = vmatprep.subr.mxu0 0.0
        %1683 = vmatpush1.msra.mxu0 0.0
        %1684 = vmatprep.subr.mxu0 0.0
        %1685 = vmatpush1.msra.mxu0 0.0
        %1686 = vmatprep.subr.mxu0 0.0
        %1687 = vmatpush1.msra.mxu0 %v1598
        %1688 = vmatprep.subr.mxu0 0.0
        %1689 = vmatpush2.msra.mxu0 0.0
        %1690 = vmatprep.subr.mxu0 0.0
        %1691 = vmatpush2.msra.mxu0 0.0
        %1692 = vmatprep.subr.mxu0 0.0
        %1693 = vmatpush2.msra.mxu0 0.0
        %1694 = vmatprep.subr.mxu0 0.0
        %1695 = vmatpush2.msra.mxu0 0.0
        %1696 = vmatprep.subr.mxu0 0.0
        %1697 = vmatpush2.msra.mxu0 0.0
        %1698 = vmatprep.subr.mxu0 0.0
        %1699 = vmatpush2.msra.mxu0 0.0
        %1700 = vmatprep.subr.mxu0 0.0
        %1701 = vmatpush2.msra.mxu0 0.0
        %1702 = vmatprep.subr.mxu0 0.0
        %1703 = vmatpush2.msra.mxu0 0.0
        %1704 = vmatprep.subr.mxu0 0.0
        %1705 = vmatpush2.msra.mxu0 0.0
        %1706 = vmatprep.subr.mxu0 0.0
        %1707 = vmatpush2.msra.mxu0 0.0
        %1708 = vmatprep.subr.mxu0 0.0
        %1709 = vmatpush2.msra.mxu0 0.0
        %1710 = vmatprep.subr.mxu0 0.0
        %1711 = vmatpush2.msra.mxu0 0.0
        %1712 = vmatprep.subr.mxu0 0.0
        %1713 = vmatpush2.msra.mxu0 0.0
        %1714 = vmatprep.subr.mxu0 0.0
        %1715 = vmatpush2.msra.mxu0 0.0
        %1716 = vmatprep.subr.mxu0 0.0
        %1717 = vmatpush2.msra.mxu0 0.0
        %1718 = vmatprep.subr.mxu0 0.0
        %1719 = vmatpush2.msra.mxu0 0.0
        %1720 = vmatprep.mubr.f32.mxu0 0.0
        %1721 = vmatmul.mubr.f32.gmra.mxu0 %v1633
        %v1722 = vpop.f32.mrf.mxu0
        %v1723 = vadd.f32 0.0, %v1722
        %v1724 = vpop.f32.mrf.mxu0
        %1725 = vmatprep.mubr.f32.mxu0 0.0
        %1726 = vmatmul.mubr.f32.gmra.mxu0 %v1636
        %v1727 = vpop.f32.mrf.mxu0
        %v1728 = vadd.f32 0.0, %v1727
        %v1729 = vpop.f32.mrf.mxu0
        %1730 = vmatprep.mubr.f32.mxu0 0.0
        %1731 = vmatmul.mubr.f32.gmra.mxu0 %v1639
        %v1732 = vpop.f32.mrf.mxu0
        %v1733 = vadd.f32 0.0, %v1732
        %v1734 = vpop.f32.mrf.mxu0
        %1735 = vmatprep.mubr.f32.mxu0 0.0
        %1736 = vmatmul.mubr.f32.gmra.mxu0 %v1642
        %v1737 = vpop.f32.mrf.mxu0
        %v1738 = vadd.f32 0.0, %v1737
        %v1739 = vpop.f32.mrf.mxu0
        %1740 = vmatprep.mubr.f32.mxu0 0.0
        %1741 = vmatmul.mubr.f32.gmra.mxu0 %v1645
        %v1742 = vpop.f32.mrf.mxu0
        %v1743 = vadd.f32 0.0, %v1742
        %v1744 = vpop.f32.mrf.mxu0
        %1745 = vmatprep.mubr.f32.mxu0 0.0
        %1746 = vmatmul.mubr.f32.gmra.mxu0 %v1648
        %v1747 = vpop.f32.mrf.mxu0
        %v1748 = vadd.f32 0.0, %v1747
        %v1749 = vpop.f32.mrf.mxu0
        %1750 = vmatprep.mubr.f32.mxu0 0.0
        %1751 = vmatmul.mubr.f32.gmra.mxu0 %v1651
        %v1752 = vpop.f32.mrf.mxu0
        %v1753 = vadd.f32 0.0, %v1752
        %v1754 = vpop.f32.mrf.mxu0
        %1755 = vmatprep.mubr.f32.mxu0 0.0
        %1756 = vmatmul.mubr.f32.gmra.mxu0 %v1654
        %v1757 = vpop.f32.mrf.mxu0
        %v1758 = vadd.f32 0.0, %v1757
        %v1759 = vpop.f32.mrf.mxu0
        %1760 = vdwg.mxu0
        %1761 = vxpose.xlu0.b32.start [1/16] %v1228, 128
        %1762 = vxpose.xlu0.b32.cont [2/16] 0.0, 128
        %1763 = vxpose.xlu0.b32.cont [3/16] 0.0, 128
        %1764 = vxpose.xlu0.b32.cont [4/16] 0.0, 128
        %1765 = vxpose.xlu0.b32.cont [5/16] 0.0, 128
        %1766 = vxpose.xlu0.b32.cont [6/16] 0.0, 128
        %1767 = vxpose.xlu0.b32.cont [7/16] 0.0, 128
        %1768 = vxpose.xlu0.b32.cont [8/16] 0.0, 128
        %1769 = vxpose.xlu0.b32.cont [9/16] 0.0, 128
        %1770 = vxpose.xlu0.b32.cont [10/16] 0.0, 128
        %1771 = vxpose.xlu0.b32.cont [11/16] 0.0, 128
        %1772 = vxpose.xlu0.b32.cont [12/16] 0.0, 128
        %1773 = vxpose.xlu0.b32.cont [13/16] 0.0, 128
        %1774 = vxpose.xlu0.b32.cont [14/16] 0.0, 128
        %1775 = vxpose.xlu0.b32.cont [15/16] 0.0, 128
        %1776 = vxpose.xlu0.b32.end [16/16] 0.0, 128
        %v1777 = vpop.trf.xlu0
        %v1778 = vpop.trf.xlu0
        %v1779 = vpop.trf.xlu0
        %v1780 = vpop.trf.xlu0
        %v1781 = vpop.trf.xlu0
        %v1782 = vpop.trf.xlu0
        %v1783 = vpop.trf.xlu0
        %v1784 = vpop.trf.xlu0
        %v1785 = vpop.trf.xlu0
        %v1786 = vpop.trf.xlu0
        %v1787 = vpop.trf.xlu0
        %v1788 = vpop.trf.xlu0
        %v1789 = vpop.trf.xlu0
        %v1790 = vpop.trf.xlu0
        %v1791 = vpop.trf.xlu0
        %v1792 = vpop.trf.xlu0
        %v1794 = vsel %vm1631, %v1777, 0
        %v1797 = vsel %vm1631, %v1778, 0
        %v1800 = vsel %vm1631, %v1779, 0
        %v1803 = vsel %vm1631, %v1780, 0
        %v1806 = vsel %vm1631, %v1781, 0
        %v1809 = vsel %vm1631, %v1782, 0
        %v1812 = vsel %vm1631, %v1783, 0
        %v1815 = vsel %vm1631, %v1784, 0
        %1817 = vmatprep.subr.mxu0 0.0
        %1818 = vmatpush1.msra.mxu0 0.0
        %1819 = vmatprep.subr.mxu0 0.0
        %1820 = vmatpush1.msra.mxu0 0.0
        %1821 = vmatprep.subr.mxu0 0.0
        %1822 = vmatpush1.msra.mxu0 0.0
        %1823 = vmatprep.subr.mxu0 0.0
        %1824 = vmatpush1.msra.mxu0 0.0
        %1825 = vmatprep.subr.mxu0 0.0
        %1826 = vmatpush1.msra.mxu0 0.0
        %1827 = vmatprep.subr.mxu0 0.0
        %1828 = vmatpush1.msra.mxu0 0.0
        %1829 = vmatprep.subr.mxu0 0.0
        %1830 = vmatpush1.msra.mxu0 0.0
        %1831 = vmatprep.subr.mxu0 0.0
        %1832 = vmatpush1.msra.mxu0 0.0
        %1833 = vmatprep.subr.mxu0 0.0
        %1834 = vmatpush1.msra.mxu0 0.0
        %1835 = vmatprep.subr.mxu0 0.0
        %1836 = vmatpush1.msra.mxu0 0.0
        %1837 = vmatprep.subr.mxu0 0.0
        %1838 = vmatpush1.msra.mxu0 0.0
        %1839 = vmatprep.subr.mxu0 0.0
        %1840 = vmatpush1.msra.mxu0 0.0
        %1841 = vmatprep.subr.mxu0 0.0
        %1842 = vmatpush1.msra.mxu0 0.0
        %1843 = vmatprep.subr.mxu0 0.0
        %1844 = vmatpush1.msra.mxu0 0.0
        %1845 = vmatprep.subr.mxu0 0.0
        %1846 = vmatpush1.msra.mxu0 0.0
        %1847 = vmatprep.subr.mxu0 0.0
        %1848 = vmatpush1.msra.mxu0 %v1307
        %1849 = vmatprep.subr.mxu0 0.0
        %1850 = vmatpush2.msra.mxu0 0.0
        %1851 = vmatprep.subr.mxu0 0.0
        %1852 = vmatpush2.msra.mxu0 0.0
        %1853 = vmatprep.subr.mxu0 0.0
        %1854 = vmatpush2.msra.mxu0 0.0
        %1855 = vmatprep.subr.mxu0 0.0
        %1856 = vmatpush2.msra.mxu0 0.0
        %1857 = vmatprep.subr.mxu0 0.0
        %1858 = vmatpush2.msra.mxu0 0.0
        %1859 = vmatprep.subr.mxu0 0.0
        %1860 = vmatpush2.msra.mxu0 0.0
        %1861 = vmatprep.subr.mxu0 0.0
        %1862 = vmatpush2.msra.mxu0 0.0
        %1863 = vmatprep.subr.mxu0 0.0
        %1864 = vmatpush2.msra.mxu0 0.0
        %1865 = vmatprep.subr.mxu0 0.0
        %1866 = vmatpush2.msra.mxu0 0.0
        %1867 = vmatprep.subr.mxu0 0.0
        %1868 = vmatpush2.msra.mxu0 0.0
        %1869 = vmatprep.subr.mxu0 0.0
        %1870 = vmatpush2.msra.mxu0 0.0
        %1871 = vmatprep.subr.mxu0 0.0
        %1872 = vmatpush2.msra.mxu0 0.0
        %1873 = vmatprep.subr.mxu0 0.0
        %1874 = vmatpush2.msra.mxu0 0.0
        %1875 = vmatprep.subr.mxu0 0.0
        %1876 = vmatpush2.msra.mxu0 0.0
        %1877 = vmatprep.subr.mxu0 0.0
        %1878 = vmatpush2.msra.mxu0 0.0
        %1879 = vmatprep.subr.mxu0 0.0
        %1880 = vmatpush2.msra.mxu0 0.0
        %1881 = vmatprep.mubr.f32.mxu0 0.0
        %1882 = vmatmul.mubr.f32.gmra.mxu0 %v1794
        %v1883 = vpop.f32.mrf.mxu0
        %v1884 = vadd.f32 %v1723, %v1883
        %v1885 = vpop.f32.mrf.mxu0
        %1886 = vmatprep.mubr.f32.mxu0 0.0
        %1887 = vmatmul.mubr.f32.gmra.mxu0 %v1797
        %v1888 = vpop.f32.mrf.mxu0
        %v1889 = vadd.f32 %v1728, %v1888
        %v1890 = vpop.f32.mrf.mxu0
        %1891 = vmatprep.mubr.f32.mxu0 0.0
        %1892 = vmatmul.mubr.f32.gmra.mxu0 %v1800
        %v1893 = vpop.f32.mrf.mxu0
        %v1894 = vadd.f32 %v1733, %v1893
        %v1895 = vpop.f32.mrf.mxu0
        %1896 = vmatprep.mubr.f32.mxu0 0.0
        %1897 = vmatmul.mubr.f32.gmra.mxu0 %v1803
        %v1898 = vpop.f32.mrf.mxu0
        %v1899 = vadd.f32 %v1738, %v1898
        %v1900 = vpop.f32.mrf.mxu0
        %1901 = vmatprep.mubr.f32.mxu0 0.0
        %1902 = vmatmul.mubr.f32.gmra.mxu0 %v1806
        %v1903 = vpop.f32.mrf.mxu0
        %v1904 = vadd.f32 %v1743, %v1903
        %v1905 = vpop.f32.mrf.mxu0
        %1906 = vmatprep.mubr.f32.mxu0 0.0
        %1907 = vmatmul.mubr.f32.gmra.mxu0 %v1809
        %v1908 = vpop.f32.mrf.mxu0
        %v1909 = vadd.f32 %v1748, %v1908
        %v1910 = vpop.f32.mrf.mxu0
        %1911 = vmatprep.mubr.f32.mxu0 0.0
        %1912 = vmatmul.mubr.f32.gmra.mxu0 %v1812
        %v1913 = vpop.f32.mrf.mxu0
        %v1914 = vadd.f32 %v1753, %v1913
        %v1915 = vpop.f32.mrf.mxu0
        %1916 = vmatprep.mubr.f32.mxu0 0.0
        %1917 = vmatmul.mubr.f32.gmra.mxu0 %v1815
        %v1918 = vpop.f32.mrf.mxu0
        %v1919 = vadd.f32 %v1758, %v1918
        %v1920 = vpop.f32.mrf.mxu0
        %1921 = vdwg.mxu0
        %v1922 = vld [vmem:[%s8] sm:$0xff]
        %v1923 = vld [vmem:[%s8 + $0x8] sm:$0xff]
        %v1924 = vld [vmem:[#allocation8] sm:$0x1]
        %v1926 = vlaneseq
        %v1927 = vshrl.u32 %v1926, 7
        %v1928 = vsub.s32 0, %v1927
        %v1929 = vrot.slane %v1924, %v1928
        %v1932 = vsel %vm499, %v1884, 0
        %v1935 = vsel %vm499, %v1889, 0
        %v1938 = vsel %vm499, %v1894, 0
        %v1941 = vsel %vm499, %v1899, 0
        %v1944 = vsel %vm499, %v1904, 0
        %v1947 = vsel %vm499, %v1909, 0
        %v1950 = vsel %vm499, %v1914, 0
        %v1953 = vsel %vm499, %v1919, 0
        %1955 = vmatprep.subr.mxu0 0.0
        %1956 = vmatpush1.msra.mxu0 0.0
        %1957 = vmatprep.subr.mxu0 0.0
        %1958 = vmatpush1.msra.mxu0 0.0
        %1959 = vmatprep.subr.mxu0 0.0
        %1960 = vmatpush1.msra.mxu0 0.0
        %1961 = vmatprep.subr.mxu0 0.0
        %1962 = vmatpush1.msra.mxu0 0.0
        %1963 = vmatprep.subr.mxu0 0.0
        %1964 = vmatpush1.msra.mxu0 0.0
        %1965 = vmatprep.subr.mxu0 0.0
        %1966 = vmatpush1.msra.mxu0 0.0
        %1967 = vmatprep.subr.mxu0 0.0
        %1968 = vmatpush1.msra.mxu0 0.0
        %1969 = vmatprep.subr.mxu0 0.0
        %1970 = vmatpush1.msra.mxu0 0.0
        %1971 = vmatprep.subr.mxu0 0.0
        %1972 = vmatpush1.msra.mxu0 0.0
        %1973 = vmatprep.subr.mxu0 0.0
        %1974 = vmatpush1.msra.mxu0 0.0
        %1975 = vmatprep.subr.mxu0 0.0
        %1976 = vmatpush1.msra.mxu0 0.0
        %1977 = vmatprep.subr.mxu0 0.0
        %1978 = vmatpush1.msra.mxu0 0.0
        %1979 = vmatprep.subr.mxu0 0.0
        %1980 = vmatpush1.msra.mxu0 0.0
        %1981 = vmatprep.subr.mxu0 0.0
        %1982 = vmatpush1.msra.mxu0 0.0
        %1983 = vmatprep.subr.mxu0 0.0
        %1984 = vmatpush1.msra.mxu0 %v1923
        %1985 = vmatprep.subr.mxu0 0.0
        %1986 = vmatpush1.msra.mxu0 %v1922
        %1987 = vmatprep.subr.mxu0 0.0
        %1988 = vmatpush2.msra.mxu0 0.0
        %1989 = vmatprep.subr.mxu0 0.0
        %1990 = vmatpush2.msra.mxu0 0.0
        %1991 = vmatprep.subr.mxu0 0.0
        %1992 = vmatpush2.msra.mxu0 0.0
        %1993 = vmatprep.subr.mxu0 0.0
        %1994 = vmatpush2.msra.mxu0 0.0
        %1995 = vmatprep.subr.mxu0 0.0
        %1996 = vmatpush2.msra.mxu0 0.0
        %1997 = vmatprep.subr.mxu0 0.0
        %1998 = vmatpush2.msra.mxu0 0.0
        %1999 = vmatprep.subr.mxu0 0.0
        %2000 = vmatpush2.msra.mxu0 0.0
        %2001 = vmatprep.subr.mxu0 0.0
        %2002 = vmatpush2.msra.mxu0 0.0
        %2003 = vmatprep.subr.mxu0 0.0
        %2004 = vmatpush2.msra.mxu0 0.0
        %2005 = vmatprep.subr.mxu0 0.0
        %2006 = vmatpush2.msra.mxu0 0.0
        %2007 = vmatprep.subr.mxu0 0.0
        %2008 = vmatpush2.msra.mxu0 0.0
        %2009 = vmatprep.subr.mxu0 0.0
        %2010 = vmatpush2.msra.mxu0 0.0
        %2011 = vmatprep.subr.mxu0 0.0
        %2012 = vmatpush2.msra.mxu0 0.0
        %2013 = vmatprep.subr.mxu0 0.0
        %2014 = vmatpush2.msra.mxu0 0.0
        %2015 = vmatprep.subr.mxu0 0.0
        %2016 = vmatpush2.msra.mxu0 0.0
        %2017 = vmatprep.subr.mxu0 0.0
        %2018 = vmatpush2.msra.mxu0 0.0
        %2019 = vmatprep.mubr.f32.mxu0 0.0
        %2020 = vmatmul.mubr.f32.gmra.mxu0 %v1932
        %v2021 = vpop.f32.mrf.mxu0
        %v2022 = vadd.f32 %v1929, %v2021
        %v2023 = vpop.f32.mrf.mxu0
        %2024 = vmatprep.mubr.f32.mxu0 0.0
        %2025 = vmatmul.mubr.f32.gmra.mxu0 %v1935
        %v2026 = vpop.f32.mrf.mxu0
        %v2027 = vadd.f32 %v1929, %v2026
        %v2028 = vpop.f32.mrf.mxu0
        %2029 = vmatprep.mubr.f32.mxu0 0.0
        %2030 = vmatmul.mubr.f32.gmra.mxu0 %v1938
        %v2031 = vpop.f32.mrf.mxu0
        %v2032 = vadd.f32 %v1929, %v2031
        %v2033 = vpop.f32.mrf.mxu0
        %2034 = vmatprep.mubr.f32.mxu0 0.0
        %2035 = vmatmul.mubr.f32.gmra.mxu0 %v1941
        %v2036 = vpop.f32.mrf.mxu0
        %v2037 = vadd.f32 %v1929, %v2036
        %v2038 = vpop.f32.mrf.mxu0
        %2039 = vmatprep.mubr.f32.mxu0 0.0
        %2040 = vmatmul.mubr.f32.gmra.mxu0 %v1944
        %v2041 = vpop.f32.mrf.mxu0
        %v2042 = vadd.f32 %v1929, %v2041
        %v2043 = vpop.f32.mrf.mxu0
        %2044 = vmatprep.mubr.f32.mxu0 0.0
        %2045 = vmatmul.mubr.f32.gmra.mxu0 %v1947
        %v2046 = vpop.f32.mrf.mxu0
        %v2047 = vadd.f32 %v1929, %v2046
        %v2048 = vpop.f32.mrf.mxu0
        %2049 = vmatprep.mubr.f32.mxu0 0.0
        %2050 = vmatmul.mubr.f32.gmra.mxu0 %v1950
        %v2051 = vpop.f32.mrf.mxu0
        %v2052 = vadd.f32 %v1929, %v2051
        %v2053 = vpop.f32.mrf.mxu0
        %2054 = vmatprep.mubr.f32.mxu0 0.0
        %2055 = vmatmul.mubr.f32.gmra.mxu0 %v1953
        %v2056 = vpop.f32.mrf.mxu0
        %v2057 = vadd.f32 %v1929, %v2056
        %v2058 = vpop.f32.mrf.mxu0
        %2059 = vdwg.mxu0
        %v2060 = vld [vmem:[#allocation10] sm:$0x1]
        %v2062 = vlaneseq
        %v2063 = vshrl.u32 %v2062, 7
        %v2064 = vsub.s32 0, %v2063
        %v2065 = vrot.slane %v2060, %v2064
        %v2067 = vmul.f32 %v2065, %v2022
        %v2068 = vmul.f32 %v2065, %v2027
        %v2069 = vmul.f32 %v2065, %v2032
        %v2070 = vmul.f32 %v2065, %v2037
        %v2071 = vmul.f32 %v2065, %v2042
        %v2072 = vmul.f32 %v2065, %v2047
        %v2073 = vmul.f32 %v2065, %v2052
        %v2074 = vmul.f32 %v2065, %v2057
        %v2075 = vadd.f32 %v491, %v2067
        %v2076 = vadd.f32 %v492, %v2068
        %v2077 = vadd.f32 %v493, %v2069
        %v2078 = vadd.f32 %v494, %v2070
        %v2079 = vadd.f32 %v495, %v2071
        %v2080 = vadd.f32 %v496, %v2072
        %v2081 = vadd.f32 %v497, %v2073
        %v2082 = vadd.f32 %v498, %v2074
        %2083 = vst.msk [vmem:[%s490] sm:$0xff] %vm499, %v2075
        %2084 = vst.msk [vmem:[%s490 + $0x8] sm:$0xff] %vm499, %v2076
        %2085 = vst.msk [vmem:[%s490 + $0x10] sm:$0xff] %vm499, %v2077
        %2086 = vst.msk [vmem:[%s490 + $0x18] sm:$0xff] %vm499, %v2078
        %2087 = vst.msk [vmem:[%s490 + $0x20] sm:$0xff] %vm499, %v2079
        %2088 = vst.msk [vmem:[%s490 + $0x28] sm:$0xff] %vm499, %v2080
        %2089 = vst.msk [vmem:[%s490 + $0x30] sm:$0xff] %vm499, %v2081
        %2090 = vst.msk [vmem:[%s490 + $0x38] sm:$0xff] %vm499, %v2082
        %p2091 = scmp.lt.s32.totalorder %s27, 1
        %s2092 = scalar_select %p2091, %s27, 1
        %s2093 = smul.addr %s2092, 8
        %s2094 = smul.addr %s2093, 8
        %s2095 = scalar_lea.vmem %s12, %s2094
        // Predicated region
        $region93: #{cluster_block_forward.3} parent=67 // pred_check
          %p2096 = pneg %p302
        $region94: #{cluster_block_forward.3} parent=67 // pred_check_branch
          %2098 = sbr.rel (%p2096) target = $region96
        $region95: #{cluster_block_forward.3} parent=67 // pred_region
          _
        $region96: #{cluster_block_forward.3} parent=67 // pred_fallthru
          _
      $region68: #{cluster_block_forward.3} parent=5 // pred_fallthru
        _
      %p2099 = scmp.le.s32.totalorder 2, %s22
      // Predicated region
      $region97: #{cluster_block_forward.3} parent=5 // pred_check
        %p2100 = pneg %p2099
      $region98: #{cluster_block_forward.3} parent=5 // pred_check_branch
        %2102 = sbr.rel (%p2100) target = $region100
      $region99: #{cluster_block_forward.3} parent=5 // pred_region
        %s2103 = ssub.s32 %s22, 2
        // Predicated region
        $region101: #{cluster_block_forward.3} parent=99 // pred_check
          %p2104 = pneg %p308
        $region102: #{cluster_block_forward.3} parent=99 // pred_check_branch
          %2106 = sbr.rel (%p2104) target = $region104
        $region103: #{cluster_block_forward.3} parent=99 // pred_region
          %p2107 = scmp.lt.s32.totalorder %s28, 1
          %s2108 = scalar_select %p2107, %s28, 1
          %s2109 = smul.addr %s2108, 8
          %s2110 = smul.addr %s2109, 8
          %s2111 = scalar_lea.vmem %s12, %s2110
        $region104: #{cluster_block_forward.3} parent=99 // pred_fallthru
          _
      $region100: #{cluster_block_forward.3} parent=5 // pred_fallthru
        _
    $region6: #{cluster_block_forward.3} parent=1 // loop_footer
      %s26 = sadd.s32 1, %s22
    $region7: #{cluster_block_forward.3} parent=1 // loop_footer_branch
      %21 = sbr.rel target = $region3
    $region8: #{cluster_block_forward.3} parent=1 // loop_exit
      _
    %2112 = vsyncpa [#allocation3], 1
    %s2113 = scalar_lea.sflag [#allocation3], 1
    %2114 = vsyncpa %s2113, 1
    %2115 = vsyncpa [#allocation6], 1
    %2116 = vsyncpa [#allocation9], 1
    %2117 = vsyncpa [#allocation4], 1
    %s2118 = scalar_lea.sflag [#allocation4], 1
    %2119 = vsyncpa %s2118, 1

</llo_original>
